<compile_context>
chip_gen: v7x
topology: tpu7x:2x2x1
jax: 0.10.0
libtpu: 0.0.40
codegen_flags: <defaults>
</compile_context>

<pallas_src>
import math

import jax
import jax.numpy as jnp
import numpy as np
from jax import lax
from jax.experimental import pallas as pl
from jax.experimental.pallas import tpu as pltpu


def _round_up(x, m):
    return (x + m - 1) // m * m


def _sigmoid_via_tanh(x):
    # sigmoid(x) == 0.5 * tanh(0.5 * x) + 0.5  : one EUP op instead of exp+add+div.
    return 0.5 * jnp.tanh(0.5 * x) + 0.5


# ----------------------------------------------------------------------------
# Fused kernel. grid = (batch_chunks ["parallel"], layers ["arbitrary"]).
# Per grid step:
#   layer == 0 : DMA x chunk + layer-0 W_ih into VMEM, one big x-projection GEMM
#   layer  > 0 : one big GEMM on the previous layer's activations
#   then       : serial recurrence, only h @ W_hh^T per timestep
# Inter-layer activations (bf16) and the hoisted gate pre-activation (f32)
# live in VMEM scratch; they never round-trip to HBM between layers.
# ----------------------------------------------------------------------------
def fused_lstm_kernel(x_hbm, wih0_hbm, h0_ref, c0_ref, wih_ref, whh_ref,
                      bias_ref, hT_ref, cT_ref,
                      x_vmem, wih0_vmem, act_ref, gx_ref, dma_sem):
    b = pl.program_id(0)            # batch chunk (parallel)
    layer = pl.program_id(1)        # layer (arbitrary; act carried in scratch)
    n_layers = pl.num_programs(1)
    T, Bc, Hp = act_ref.shape
    Kp = x_vmem.shape[-1]

    bias = bias_ref[0]              # (1, 4Hp) f32

    # ---- Phase 1: hoisted input projection for all timesteps ---------------
    @pl.when(layer == 0)
    def _():
        # x and W_ih0 are only needed here -> single-buffered manual DMA
        # (not part of the per-layer BlockSpec pipeline).
        cp_x = pltpu.make_async_copy(x_hbm.at[b], x_vmem, dma_sem.at[0])
        cp_w = pltpu.make_async_copy(wih0_hbm, wih0_vmem, dma_sem.at[1])
        cp_x.start()
        cp_w.start()
        cp_x.wait()
        cp_w.wait()
        x2d = x_vmem[...].reshape(T * Bc, Kp)                      # bf16
        gx = jnp.dot(x2d, wih0_vmem[...],
                     preferred_element_type=jnp.float32) + bias
        gx_ref[...] = gx.reshape(T, Bc, 4 * Hp)

    @pl.when(layer > 0)
    def _():
        a2d = act_ref[...].reshape(T * Bc, Hp)                     # bf16
        gx = jnp.dot(a2d, wih_ref[0],
                     preferred_element_type=jnp.float32) + bias
        gx_ref[...] = gx.reshape(T, Bc, 4 * Hp)

    # ---- Phase 2: serial recurrence ----------------------------------------
    not_last = layer < n_layers - 1

    def step(t, carry):
        h, c = carry                                   # f32 carries
        # Read W_hh through the VMEM ref *inside* the loop: at Hp>=128 the
        # hoisted (Hp,4Hp) value would be the whole register file and spill
        # every unrolled iteration.
        gates = gx_ref[t] + jnp.dot(h.astype(jnp.bfloat16), whh_ref[0],
                                    preferred_element_type=jnp.float32)
        i = _sigmoid_via_tanh(gates[:, 0:Hp])          # lane-aligned slices
        f = _sigmoid_via_tanh(gates[:, Hp:2 * Hp])
        g = jnp.tanh(gates[:, 2 * Hp:3 * Hp])
        o = _sigmoid_via_tanh(gates[:, 3 * Hp:4 * Hp])
        c_new = f * c + i * g
        h_new = o * jnp.tanh(c_new)

        @pl.when(not_last)       # last layer's per-step h is never read again
        def _():
            act_ref[t] = h_new.astype(jnp.bfloat16)
        return (h_new, c_new)

    unroll = True if T <= 16 else 8
    h_fin, c_fin = lax.fori_loop(0, T, step, (h0_ref[0], c0_ref[0]),
                                 unroll=unroll)
    hT_ref[0] = h_fin
    cT_ref[0] = c_fin


# ----------------------------------------------------------------------------
# One-time parameter preparation: per-gate pad H -> Hp (x128), transpose to
# (K, 4H) layout, cast weights to bf16, stack across layers.  Layer 0's W_ih
# keeps its (Kp, 4Hp) input width; layers > 0 are only (Hp, 4Hp).
# ----------------------------------------------------------------------------
def prepare_memory_layer_params(params):
    L = len(params)
    H = params[0][1].shape[1]
    D0 = params[0][0].shape[1]
    Hp = _round_up(H, 128)
    Kp = _round_up(D0, 128)

    # Layer-0 input projection weight: (4H, D0) -> (Kp, 4Hp) bf16.
    w_ih0 = params[0][0]
    wih0 = jnp.pad(w_ih0.reshape(4, H, D0), ((0, 0), (0, Hp - H), (0, Kp - D0)))
    wih0 = jnp.transpose(wih0.reshape(4 * Hp, Kp)).astype(jnp.bfloat16)

    wih_rest, whh_list, b_list = [], [], []
    for li, (w_ih, w_hh, b_ih, b_hh) in enumerate(params):
        if li == 0:
            # dummy slot so the (L, Hp, 4Hp) stack has a block for layer 0
            # (never read; keeps the index_map trivial).
            wih_rest.append(jnp.zeros((Hp, 4 * Hp), jnp.bfloat16))
        else:
            w4 = jnp.pad(w_ih.reshape(4, H, H), ((0, 0), (0, Hp - H), (0, Hp - H)))
            wih_rest.append(
                jnp.transpose(w4.reshape(4 * Hp, Hp)).astype(jnp.bfloat16))
        whh4 = jnp.pad(w_hh.reshape(4, H, H), ((0, 0), (0, Hp - H), (0, Hp - H)))
        whh_list.append(
            jnp.transpose(whh4.reshape(4 * Hp, Hp)).astype(jnp.bfloat16))
        b4 = jnp.pad((b_ih + b_hh).reshape(4, H), ((0, 0), (0, Hp - H)))
        b_list.append(b4.reshape(1, 4 * Hp).astype(jnp.float32))

    return dict(
        num_layers=L, hidden=H, hidden_pad=Hp, k_pad=Kp,
        wih0=wih0,                         # (Kp, 4Hp)   bf16, layer 0 only
        wih=jnp.stack(wih_rest),           # (L, Hp, 4Hp) bf16, layers > 0
        whh=jnp.stack(whh_list),           # (L, Hp, 4Hp) bf16
        bias=jnp.stack(b_list),            # (L, 1, 4Hp)  f32
    )


def _pick_vmem_limit(T, Bc, Hp, Kp):
    """Computed VMEM budget (scratch + double-buffered pipeline blocks),
    clamped to ~3/4 of physical VMEM (128 MiB v5e/v6e, 64 MiB/TC v7x)."""
    f32, bf16 = 4, 2
    scratch = (T * Bc * Kp * bf16          # x chunk
               + Kp * 4 * Hp * bf16        # layer-0 W_ih
               + T * Bc * Hp * bf16        # inter-layer activations
               + T * Bc * 4 * Hp * f32)    # hoisted gate pre-activation
    pipelined = 2 * (4 * Bc * Hp * f32     # h0, c0, hT, cT blocks
                     + 2 * Hp * 4 * Hp * bf16   # W_ih(l>0), W_hh blocks
                     + 4 * Hp * f32)            # bias block
    needed = scratch + pipelined
    try:
        cap = pltpu.get_tpu_info().vmem_capacity_bytes
    except Exception:
        cap = 128 << 20
    return int(min(cap * 3 // 4, max(32 << 20, 2 * needed + (8 << 20))))


# ----------------------------------------------------------------------------
# MemoryLayer forward: flat state -> fused LSTM kernel -> flat state.
# ----------------------------------------------------------------------------
def memory_layer_forward(packed, inputs, hidden_state, num_batch_chunks=None):
    """inputs: (B, T, input_size) batch_first. hidden_state: (B, 2*L*H)."""
    L, H = packed['num_layers'], packed['hidden']
    Hp, Kp = packed['hidden_pad'], packed['k_pad']
    B, T, D = inputs.shape

    # v7x has 2 TensorCores: split large batches into independent 'parallel'
    # chunks.  Below ~256 rows one recurrent matmul per step is better (MXU
    # rows are free throughput), so keep a single chunk (v5e/v6e: 1 TC anyway).
    if num_batch_chunks is None:
        num_batch_chunks = 2 if B > 256 else 1
    BC = num_batch_chunks
    Bc = _round_up(pl.cdiv(B, BC), 16)      # bf16 operands -> 16-sublane tiles
    Bp = Bc * BC

    # flat_to_lstm_input: interleaved [h_l, c_l] blocks of width H.
    hs = hidden_state.reshape(B, L, 2, H)
    h0 = jnp.transpose(hs[:, :, 0, :], (1, 0, 2))          # (L, B, H)
    c0 = jnp.transpose(hs[:, :, 1, :], (1, 0, 2))
    h0 = jnp.pad(h0, ((0, 0), (0, Bp - B), (0, Hp - H)))
    c0 = jnp.pad(c0, ((0, 0), (0, Bp - B), (0, Hp - H)))

    # Time-major, padded, bf16 input; chunked so batch chunk b is x_ch[b].
    x_tm = jnp.transpose(inputs, (1, 0, 2))                # (T, B, D)
    x_tm = jnp.pad(x_tm, ((0, 0), (0, Bp - B), (0, Kp - D)))
    x_ch = x_tm.astype(jnp.bfloat16).reshape(T, BC, Bc, Kp).transpose(1, 0, 2, 3)

    vmem_limit = _pick_vmem_limit(T, Bc, Hp, Kp)

    hT, cT = pl.pallas_call(
        fused_lstm_kernel,
        grid_spec=pltpu.PrefetchScalarGridSpec(
            num_scalar_prefetch=0,
            grid=(BC, L),
            in_specs=[
                pl.BlockSpec(memory_space=pl.ANY),                      # x (HBM)
                pl.BlockSpec(memory_space=pl.ANY),                      # W_ih0 (HBM)
                pl.BlockSpec((1, Bc, Hp), lambda b, l: (l, b, 0)),      # h0[l, chunk]
                pl.BlockSpec((1, Bc, Hp), lambda b, l: (l, b, 0)),      # c0[l, chunk]
                pl.BlockSpec((1, Hp, 4 * Hp), lambda b, l: (l, 0, 0)),  # W_ih^T (l>0)
                pl.BlockSpec((1, Hp, 4 * Hp), lambda b, l: (l, 0, 0)),  # W_hh^T
                pl.BlockSpec((1, 1, 4 * Hp), lambda b, l: (l, 0, 0)),   # bias
            ],
            out_specs=(
                pl.BlockSpec((1, Bc, Hp), lambda b, l: (l, b, 0)),      # h_T
                pl.BlockSpec((1, Bc, Hp), lambda b, l: (l, b, 0)),      # c_T
            ),
            scratch_shapes=[
                pltpu.VMEM((T, Bc, Kp), jnp.bfloat16),      # x chunk (layer 0 only)
                pltpu.VMEM((Kp, 4 * Hp), jnp.bfloat16),     # layer-0 W_ih^T
                pltpu.VMEM((T, Bc, Hp), jnp.bfloat16),      # inter-layer activations
                pltpu.VMEM((T, Bc, 4 * Hp), jnp.float32),   # hoisted x-projection
                pltpu.SemaphoreType.DMA((2,)),
            ],
        ),
        out_shape=(jax.ShapeDtypeStruct((L, Bp, Hp), jnp.float32),
                   jax.ShapeDtypeStruct((L, Bp, Hp), jnp.float32)),
        compiler_params=pltpu.CompilerParams(
            dimension_semantics=("parallel", "arbitrary"),
            vmem_limit_bytes=vmem_limit),
    )(x_ch, packed['wih0'], h0, c0, packed['wih'], packed['whh'], packed['bias'])

    hT = hT[:, :B, :H]                                     # (L, B, H)
    cT = cT[:, :B, :H]
    # rnn_to_flat: all h's first, then all c's (torch (h_n, c_n) order).
    return jnp.concatenate(
        [jnp.transpose(hT, (1, 0, 2)).reshape(B, L * H),
         jnp.transpose(cT, (1, 0, 2)).reshape(B, L * H)], axis=-1)


# ----------------------------------------------------------------------------
# Pure-JAX f32 reference (same math, unpadded) for a correctness check.
# ----------------------------------------------------------------------------
def memory_layer_ref(params, inputs, hidden_state):
    h_list, c_list = [], []
    cur = 0
    for (_, w_hh, _, _) in params:
        H = w_hh.shape[1]
        h_list.append(hidden_state[..., cur:cur + H])
        c_list.append(hidden_state[..., cur + H:cur + 2 * H])
        cur += 2 * H

    x = inputs  # (B, T, D)
    new_h, new_c = [], []
    for l, (w_ih, w_hh, b_ih, b_hh) in enumerate(params):
        H = w_hh.shape[1]
        h, c = h_list[l], c_list[l]
        outs = []
        for t in range(x.shape[1]):
            gates = x[:, t, :] @ w_ih.T + h @ w_hh.T + b_ih + b_hh
            i = jax.nn.sigmoid(gates[:, 0:H])
            f = jax.nn.sigmoid(gates[:, H:2 * H])
            g = jnp.tanh(gates[:, 2 * H:3 * H])
            o = jax.nn.sigmoid(gates[:, 3 * H:4 * H])
            c = f * c + i * g
            h = o * jnp.tanh(c)
            outs.append(h)
        x = jnp.stack(outs, axis=1)
        new_h.append(h)
        new_c.append(c)
    return jnp.concatenate(new_h + new_c, axis=-1)


# ----------------------------------------------------------------------------
# Deterministic parameter init (torch-style uniform(-1/sqrt(H), 1/sqrt(H))).
# ----------------------------------------------------------------------------
def init_lstm_params(key, input_size, hidden_size, num_layers):
    params = []
    stdv = 1.0 / math.sqrt(hidden_size)
    for l in range(num_layers):
        d_in = input_size if l == 0 else hidden_size
        key, k1, k2, k3, k4 = jax.random.split(key, 5)
        w_ih = jax.random.uniform(k1, (4 * hidden_size, d_in),
                                  minval=-stdv, maxval=stdv, dtype=jnp.float32)
        w_hh = jax.random.uniform(k2, (4 * hidden_size, hidden_size),
                                  minval=-stdv, maxval=stdv, dtype=jnp.float32)
        b_ih = jax.random.uniform(k3, (4 * hidden_size,),
                                  minval=-stdv, maxval=stdv, dtype=jnp.float32)
        b_hh = jax.random.uniform(k4, (4 * hidden_size,),
                                  minval=-stdv, maxval=stdv, dtype=jnp.float32)
        params.append((w_ih, w_hh, b_ih, b_hh))
    return params


if __name__ == "__main__":
    batch, seq, input_size, hidden_size, num_layers = 2, 8, 32, 32, 2

    key = jax.random.PRNGKey(0)
    kp, kx, kh = jax.random.split(key, 3)

    params = init_lstm_params(kp, input_size, hidden_size, num_layers)
    inputs = jax.random.normal(kx, (batch, seq, input_size), dtype=jnp.float32)
    # flat hidden state: [h_0, c_0, h_1, c_1] concatenated along last dim
    hidden_state = jax.random.normal(kh, (batch, 2 * num_layers * hidden_size),
                                     dtype=jnp.float32)

    packed = prepare_memory_layer_params(params)   # one-time weight packing
    fwd = jax.jit(lambda x, hs: memory_layer_forward(packed, x, hs))

    out = jax.block_until_ready(fwd(inputs, hidden_state))
    ref = jax.block_until_ready(memory_layer_ref(params, inputs, hidden_state))

    assert out.shape == (batch, 2 * num_layers * hidden_size), out.shape
    # bf16 MXU operands vs the pure-f32 reference -> loosened tolerance.
    np.testing.assert_allclose(np.asarray(out), np.asarray(ref),
                               rtol=5e-2, atol=5e-2)

    # Also exercise the batch-chunked 'parallel' path (v7x 2-TC layout) and
    # check it matches the single-chunk result on the real rows.
    fwd2 = jax.jit(lambda x, hs: memory_layer_forward(packed, x, hs,
                                                      num_batch_chunks=2))
    out2 = jax.block_until_ready(fwd2(inputs, hidden_state))
    np.testing.assert_allclose(np.asarray(out2), np.asarray(out),
                               rtol=1e-5, atol=1e-5)

    print("KERNEL_OK")
</pallas_src>

<mosaic_0001>
module attributes {stable_mosaic.version = 11 : i64} {
  func.func @fused_lstm_kernel(%arg0: i32, %arg1: i32, %arg2: memref<1x8x16x128xbf16, #tpu.memory_space<any>>, %arg3: memref<128x512xbf16, #tpu.memory_space<any>>, %arg4: memref<1x16x128xf32, #tpu.memory_space<vmem>>, %arg5: memref<1x16x128xf32, #tpu.memory_space<vmem>>, %arg6: memref<1x128x512xbf16, #tpu.memory_space<vmem>>, %arg7: memref<1x128x512xbf16, #tpu.memory_space<vmem>>, %arg8: memref<1x1x512xf32, #tpu.memory_space<vmem>>, %arg9: memref<1x16x128xf32, #tpu.memory_space<vmem>>, %arg10: memref<1x16x128xf32, #tpu.memory_space<vmem>>, %arg11: memref<8x16x128xbf16, #tpu.memory_space<vmem>>, %arg12: memref<128x512xbf16, #tpu.memory_space<vmem>>, %arg13: memref<8x16x128xbf16, #tpu.memory_space<vmem>>, %arg14: memref<8x16x512xf32, #tpu.memory_space<vmem>>, %arg15: memref<2x!tpu.dma_semaphore, #tpu.memory_space<semaphore_mem>>) attributes {dimension_semantics = [#tpu.dimension_semantics<parallel>, #tpu.dimension_semantics<arbitrary>], iteration_bounds = array<i64: 1, 2>, scalar_prefetch = 0 : i64, scratch_operands = 5 : i64, tpu.core_type = #tpu.core_type<tc>, window_params = [{}, {}, {transform_indices = @transform_2, window_bounds = array<i64: 1, 16, 128>}, {transform_indices = @transform_3, window_bounds = array<i64: 1, 16, 128>}, {transform_indices = @transform_4, window_bounds = array<i64: 1, 128, 512>}, {transform_indices = @transform_5, window_bounds = array<i64: 1, 128, 512>}, {transform_indices = @transform_6, window_bounds = array<i64: 1, 1, 512>}, {transform_indices = @transform_7, window_bounds = array<i64: 1, 16, 128>}, {transform_indices = @transform_8, window_bounds = array<i64: 1, 16, 128>}]} {
    %c0 = arith.constant 0 : index
    %c0_0 = arith.constant 0 : index
    %c0_1 = arith.constant 0 : index
    %0 = vector.load %arg8[%c0, %c0_0, %c0_1] : memref<1x1x512xf32, #tpu.memory_space<vmem>>, vector<1x1x512xf32>
    %1 = vector.shape_cast %0 : vector<1x1x512xf32> to vector<1x512xf32>
    %c0_i32 = arith.constant 0 : i32
    %2 = arith.cmpi eq, %arg1, %c0_i32 : i32
    %3 = arith.extui %2 : i1 to i32
    %c0_i32_2 = arith.constant 0 : i32
    %4 = arith.cmpi ne, %3, %c0_i32_2 : i32
    scf.if %4 {
      %c0_i32_146 = arith.constant 0 : i32
      %c0_i32_147 = arith.constant 0 : i32
      %c0_i32_148 = arith.constant 0 : i32
      %c0_i32_149 = arith.constant 0 : i32
      %347 = tpu.memref_slice %arg2[%arg0, %c0_i32_147, %c0_i32_148, %c0_i32_149] : memref<1x8x16x128xbf16, #tpu.memory_space<any>> -> memref<1x8x16x128xbf16, #tpu.memory_space<any>>
      %348 = tpu.memref_squeeze %347 : memref<1x8x16x128xbf16, #tpu.memory_space<any>> -> memref<8x16x128xbf16, #tpu.memory_space<any>>
      %349 = tpu.memref_slice %arg15[%c0_i32_146] : memref<2x!tpu.dma_semaphore, #tpu.memory_space<semaphore_mem>> -> memref<1x!tpu.dma_semaphore, #tpu.memory_space<semaphore_mem>>
      %350 = tpu.memref_squeeze %349 : memref<1x!tpu.dma_semaphore, #tpu.memory_space<semaphore_mem>> -> memref<!tpu.dma_semaphore, #tpu.memory_space<semaphore_mem>>
      tpu.enqueue_dma source(%348 : memref<8x16x128xbf16, #tpu.memory_space<any>>) target(%arg11 : memref<8x16x128xbf16, #tpu.memory_space<vmem>>) target_semaphore(%350 : memref<!tpu.dma_semaphore, #tpu.memory_space<semaphore_mem>>)
      %c1_i32_150 = arith.constant 1 : i32
      %351 = tpu.memref_slice %arg15[%c1_i32_150] : memref<2x!tpu.dma_semaphore, #tpu.memory_space<semaphore_mem>> -> memref<1x!tpu.dma_semaphore, #tpu.memory_space<semaphore_mem>>
      %352 = tpu.memref_squeeze %351 : memref<1x!tpu.dma_semaphore, #tpu.memory_space<semaphore_mem>> -> memref<!tpu.dma_semaphore, #tpu.memory_space<semaphore_mem>>
      tpu.enqueue_dma source(%arg3 : memref<128x512xbf16, #tpu.memory_space<any>>) target(%arg12 : memref<128x512xbf16, #tpu.memory_space<vmem>>) target_semaphore(%352 : memref<!tpu.dma_semaphore, #tpu.memory_space<semaphore_mem>>)
      %c0_i32_151 = arith.constant 0 : i32
      %c0_i32_152 = arith.constant 0 : i32
      %c0_i32_153 = arith.constant 0 : i32
      %c0_i32_154 = arith.constant 0 : i32
      %353 = tpu.memref_slice %arg2[%arg0, %c0_i32_152, %c0_i32_153, %c0_i32_154] : memref<1x8x16x128xbf16, #tpu.memory_space<any>> -> memref<1x8x16x128xbf16, #tpu.memory_space<any>>
      %354 = tpu.memref_squeeze %353 : memref<1x8x16x128xbf16, #tpu.memory_space<any>> -> memref<8x16x128xbf16, #tpu.memory_space<any>>
      %355 = tpu.memref_slice %arg15[%c0_i32_151] : memref<2x!tpu.dma_semaphore, #tpu.memory_space<semaphore_mem>> -> memref<1x!tpu.dma_semaphore, #tpu.memory_space<semaphore_mem>>
      %356 = tpu.memref_squeeze %355 : memref<1x!tpu.dma_semaphore, #tpu.memory_space<semaphore_mem>> -> memref<!tpu.dma_semaphore, #tpu.memory_space<semaphore_mem>>
      tpu.wait_dma2 semaphore(%356 : memref<!tpu.dma_semaphore, #tpu.memory_space<semaphore_mem>>) src(%354 : memref<8x16x128xbf16, #tpu.memory_space<any>>) dst(%arg11 : memref<8x16x128xbf16, #tpu.memory_space<vmem>>)
      %c1_i32_155 = arith.constant 1 : i32
      %357 = tpu.memref_slice %arg15[%c1_i32_155] : memref<2x!tpu.dma_semaphore, #tpu.memory_space<semaphore_mem>> -> memref<1x!tpu.dma_semaphore, #tpu.memory_space<semaphore_mem>>
      %358 = tpu.memref_squeeze %357 : memref<1x!tpu.dma_semaphore, #tpu.memory_space<semaphore_mem>> -> memref<!tpu.dma_semaphore, #tpu.memory_space<semaphore_mem>>
      tpu.wait_dma2 semaphore(%358 : memref<!tpu.dma_semaphore, #tpu.memory_space<semaphore_mem>>) src(%arg3 : memref<128x512xbf16, #tpu.memory_space<any>>) dst(%arg12 : memref<128x512xbf16, #tpu.memory_space<vmem>>)
      %c0_156 = arith.constant 0 : index
      %c0_157 = arith.constant 0 : index
      %c0_158 = arith.constant 0 : index
      %359 = vector.load %arg11[%c0_156, %c0_157, %c0_158] : memref<8x16x128xbf16, #tpu.memory_space<vmem>>, vector<8x16x128xbf16>
      %360 = vector.shape_cast %359 : vector<8x16x128xbf16> to vector<128x128xbf16>
      %c0_159 = arith.constant 0 : index
      %c0_160 = arith.constant 0 : index
      %361 = vector.load %arg12[%c0_159, %c0_160] : memref<128x512xbf16, #tpu.memory_space<vmem>>, vector<128x512xbf16>
      %cst_161 = arith.constant dense<0.000000e+00> : vector<128x512xf32>
      %362 = tpu.matmul %360, %361, %cst_161 {dimension_numbers = #tpu.dot_dimension_numbers<[1], [0], [0], [1], [0, 0, 1, 1], [], []>} : vector<128x128xbf16>, vector<128x512xbf16>, vector<128x512xf32> -> vector<128x512xf32>
      %363 = vector.broadcast %1 : vector<1x512xf32> to vector<128x512xf32>
      %364 = arith.addf %362, %363 : vector<128x512xf32>
      %365 = vector.shape_cast %364 : vector<128x512xf32> to vector<8x16x512xf32>
      %c0_162 = arith.constant 0 : index
      %c0_163 = arith.constant 0 : index
      %c0_164 = arith.constant 0 : index
      %366 = vector.load %arg14[%c0_162, %c0_163, %c0_164] : memref<8x16x512xf32, #tpu.memory_space<vmem>>, vector<8x16x512xf32>
      tpu.vector_store %arg14[%c0_162, %c0_163, %c0_164], %365 {strides = array<i32>} : memref<8x16x512xf32, #tpu.memory_space<vmem>>, vector<8x16x512xf32>,
    } else {
    }
    %c0_i32_3 = arith.constant 0 : i32
    %5 = arith.cmpi sgt, %arg1, %c0_i32_3 : i32
    %6 = arith.extui %5 : i1 to i32
    %c0_i32_4 = arith.constant 0 : i32
    %7 = arith.cmpi ne, %6, %c0_i32_4 : i32
    scf.if %7 {
      %c0_146 = arith.constant 0 : index
      %c0_147 = arith.constant 0 : index
      %c0_148 = arith.constant 0 : index
      %347 = vector.load %arg13[%c0_146, %c0_147, %c0_148] : memref<8x16x128xbf16, #tpu.memory_space<vmem>>, vector<8x16x128xbf16>
      %348 = vector.shape_cast %347 : vector<8x16x128xbf16> to vector<128x128xbf16>
      %c0_149 = arith.constant 0 : index
      %c0_150 = arith.constant 0 : index
      %c0_151 = arith.constant 0 : index
      %349 = vector.load %arg6[%c0_149, %c0_150, %c0_151] : memref<1x128x512xbf16, #tpu.memory_space<vmem>>, vector<1x128x512xbf16>
      %350 = vector.shape_cast %349 : vector<1x128x512xbf16> to vector<128x512xbf16>
      %cst_152 = arith.constant dense<0.000000e+00> : vector<128x512xf32>
      %351 = tpu.matmul %348, %350, %cst_152 {dimension_numbers = #tpu.dot_dimension_numbers<[1], [0], [0], [1], [0, 0, 1, 1], [], []>} : vector<128x128xbf16>, vector<128x512xbf16>, vector<128x512xf32> -> vector<128x512xf32>
      %352 = vector.broadcast %1 : vector<1x512xf32> to vector<128x512xf32>
      %353 = arith.addf %351, %352 : vector<128x512xf32>
      %354 = vector.shape_cast %353 : vector<128x512xf32> to vector<8x16x512xf32>
      %c0_153 = arith.constant 0 : index
      %c0_154 = arith.constant 0 : index
      %c0_155 = arith.constant 0 : index
      %355 = vector.load %arg14[%c0_153, %c0_154, %c0_155] : memref<8x16x512xf32, #tpu.memory_space<vmem>>, vector<8x16x512xf32>
      tpu.vector_store %arg14[%c0_153, %c0_154, %c0_155], %354 {strides = array<i32>} : memref<8x16x512xf32, #tpu.memory_space<vmem>>, vector<8x16x512xf32>,
    } else {
    }
    %c1_i32 = arith.constant 1 : i32
    %8 = arith.cmpi slt, %arg1, %c1_i32 : i32
    %c0_5 = arith.constant 0 : index
    %c0_6 = arith.constant 0 : index
    %c0_7 = arith.constant 0 : index
    %9 = vector.load %arg4[%c0_5, %c0_6, %c0_7] : memref<1x16x128xf32, #tpu.memory_space<vmem>>, vector<1x16x128xf32>
    %10 = vector.shape_cast %9 : vector<1x16x128xf32> to vector<16x128xf32>
    %c0_8 = arith.constant 0 : index
    %c0_9 = arith.constant 0 : index
    %c0_10 = arith.constant 0 : index
    %11 = vector.load %arg5[%c0_8, %c0_9, %c0_10] : memref<1x16x128xf32, #tpu.memory_space<vmem>>, vector<1x16x128xf32>
    %12 = vector.shape_cast %11 : vector<1x16x128xf32> to vector<16x128xf32>
    %c0_i32_11 = arith.constant 0 : i32
    %13 = arith.index_cast %c0_i32_11 : i32 to index
    %c0_12 = arith.constant 0 : index
    %c0_13 = arith.constant 0 : index
    %14 = vector.load %arg14[%13, %c0_12, %c0_13] : memref<8x16x512xf32, #tpu.memory_space<vmem>>, vector<1x16x512xf32>
    %15 = vector.shape_cast %14 : vector<1x16x512xf32> to vector<16x512xf32>
    %16 = arith.truncf %10 : vector<16x128xf32> to vector<16x128xbf16>
    %c0_14 = arith.constant 0 : index
    %c0_15 = arith.constant 0 : index
    %c0_16 = arith.constant 0 : index
    %17 = vector.load %arg7[%c0_14, %c0_15, %c0_16] : memref<1x128x512xbf16, #tpu.memory_space<vmem>>, vector<1x128x512xbf16>
    %18 = vector.shape_cast %17 : vector<1x128x512xbf16> to vector<128x512xbf16>
    %cst = arith.constant dense<0.000000e+00> : vector<16x512xf32>
    %19 = tpu.matmul %16, %18, %cst {dimension_numbers = #tpu.dot_dimension_numbers<[1], [0], [0], [1], [0, 0, 1, 1], [], []>} : vector<16x128xbf16>, vector<128x512xbf16>, vector<16x512xf32> -> vector<16x512xf32>
    %20 = arith.addf %15, %19 : vector<16x512xf32>
    %21 = vector.extract_strided_slice %20 {offsets = [0, 0], sizes = [16, 128], strides = [1, 1]} : vector<16x512xf32> to vector<16x128xf32>
    %cst_17 = arith.constant 5.000000e-01 : f32
    %22 = vector.broadcast %cst_17 : f32 to vector<16x128xf32>
    %23 = arith.mulf %22, %21 : vector<16x128xf32>
    %24 = math.tanh %23 : vector<16x128xf32>
    %cst_18 = arith.constant 5.000000e-01 : f32
    %25 = vector.broadcast %cst_18 : f32 to vector<16x128xf32>
    %26 = arith.mulf %25, %24 : vector<16x128xf32>
    %cst_19 = arith.constant 5.000000e-01 : f32
    %27 = vector.broadcast %cst_19 : f32 to vector<16x128xf32>
    %28 = arith.addf %26, %27 : vector<16x128xf32>
    %29 = vector.extract_strided_slice %20 {offsets = [0, 128], sizes = [16, 128], strides = [1, 1]} : vector<16x512xf32> to vector<16x128xf32>
    %cst_20 = arith.constant 5.000000e-01 : f32
    %30 = vector.broadcast %cst_20 : f32 to vector<16x128xf32>
    %31 = arith.mulf %30, %29 : vector<16x128xf32>
    %32 = math.tanh %31 : vector<16x128xf32>
    %cst_21 = arith.constant 5.000000e-01 : f32
    %33 = vector.broadcast %cst_21 : f32 to vector<16x128xf32>
    %34 = arith.mulf %33, %32 : vector<16x128xf32>
    %cst_22 = arith.constant 5.000000e-01 : f32
    %35 = vector.broadcast %cst_22 : f32 to vector<16x128xf32>
    %36 = arith.addf %34, %35 : vector<16x128xf32>
    %37 = vector.extract_strided_slice %20 {offsets = [0, 256], sizes = [16, 128], strides = [1, 1]} : vector<16x512xf32> to vector<16x128xf32>
    %38 = math.tanh %37 : vector<16x128xf32>
    %39 = vector.extract_strided_slice %20 {offsets = [0, 384], sizes = [16, 128], strides = [1, 1]} : vector<16x512xf32> to vector<16x128xf32>
    %cst_23 = arith.constant 5.000000e-01 : f32
    %40 = vector.broadcast %cst_23 : f32 to vector<16x128xf32>
    %41 = arith.mulf %40, %39 : vector<16x128xf32>
    %42 = math.tanh %41 : vector<16x128xf32>
    %cst_24 = arith.constant 5.000000e-01 : f32
    %43 = vector.broadcast %cst_24 : f32 to vector<16x128xf32>
    %44 = arith.mulf %43, %42 : vector<16x128xf32>
    %cst_25 = arith.constant 5.000000e-01 : f32
    %45 = vector.broadcast %cst_25 : f32 to vector<16x128xf32>
    %46 = arith.addf %44, %45 : vector<16x128xf32>
    %47 = arith.mulf %36, %12 : vector<16x128xf32>
    %48 = arith.mulf %28, %38 : vector<16x128xf32>
    %49 = arith.addf %47, %48 : vector<16x128xf32>
    %50 = math.tanh %49 : vector<16x128xf32>
    %51 = arith.mulf %46, %50 : vector<16x128xf32>
    %52 = arith.extui %8 : i1 to i32
    %c0_i32_26 = arith.constant 0 : i32
    %53 = arith.cmpi ne, %52, %c0_i32_26 : i32
    scf.if %53 {
      %347 = arith.truncf %51 : vector<16x128xf32> to vector<16x128xbf16>
      %348 = arith.index_cast %c0_i32_11 : i32 to index
      %c0_146 = arith.constant 0 : index
      %c0_147 = arith.constant 0 : index
      %349 = vector.load %arg13[%348, %c0_146, %c0_147] : memref<8x16x128xbf16, #tpu.memory_space<vmem>>, vector<1x16x128xbf16>
      %350 = vector.shape_cast %349 : vector<1x16x128xbf16> to vector<16x128xbf16>
      %351 = vector.shape_cast %347 : vector<16x128xbf16> to vector<1x16x128xbf16>
      tpu.vector_store %arg13[%348, %c0_146, %c0_147], %351 {strides = array<i32>} : memref<8x16x128xbf16, #tpu.memory_space<vmem>>, vector<1x16x128xbf16>,
    } else {
    }
    %c1_i32_27 = arith.constant 1 : i32
    %54 = arith.index_cast %c1_i32_27 : i32 to index
    %c0_28 = arith.constant 0 : index
    %c0_29 = arith.constant 0 : index
    %55 = vector.load %arg14[%54, %c0_28, %c0_29] : memref<8x16x512xf32, #tpu.memory_space<vmem>>, vector<1x16x512xf32>
    %56 = vector.shape_cast %55 : vector<1x16x512xf32> to vector<16x512xf32>
    %57 = arith.truncf %51 : vector<16x128xf32> to vector<16x128xbf16>
    %c0_30 = arith.constant 0 : index
    %c0_31 = arith.constant 0 : index
    %c0_32 = arith.constant 0 : index
    %58 = vector.load %arg7[%c0_30, %c0_31, %c0_32] : memref<1x128x512xbf16, #tpu.memory_space<vmem>>, vector<1x128x512xbf16>
    %59 = vector.shape_cast %58 : vector<1x128x512xbf16> to vector<128x512xbf16>
    %cst_33 = arith.constant dense<0.000000e+00> : vector<16x512xf32>
    %60 = tpu.matmul %57, %59, %cst_33 {dimension_numbers = #tpu.dot_dimension_numbers<[1], [0], [0], [1], [0, 0, 1, 1], [], []>} : vector<16x128xbf16>, vector<128x512xbf16>, vector<16x512xf32> -> vector<16x512xf32>
    %61 = arith.addf %56, %60 : vector<16x512xf32>
    %62 = vector.extract_strided_slice %61 {offsets = [0, 0], sizes = [16, 128], strides = [1, 1]} : vector<16x512xf32> to vector<16x128xf32>
    %cst_34 = arith.constant 5.000000e-01 : f32
    %63 = vector.broadcast %cst_34 : f32 to vector<16x128xf32>
    %64 = arith.mulf %63, %62 : vector<16x128xf32>
    %65 = math.tanh %64 : vector<16x128xf32>
    %cst_35 = arith.constant 5.000000e-01 : f32
    %66 = vector.broadcast %cst_35 : f32 to vector<16x128xf32>
    %67 = arith.mulf %66, %65 : vector<16x128xf32>
    %cst_36 = arith.constant 5.000000e-01 : f32
    %68 = vector.broadcast %cst_36 : f32 to vector<16x128xf32>
    %69 = arith.addf %67, %68 : vector<16x128xf32>
    %70 = vector.extract_strided_slice %61 {offsets = [0, 128], sizes = [16, 128], strides = [1, 1]} : vector<16x512xf32> to vector<16x128xf32>
    %cst_37 = arith.constant 5.000000e-01 : f32
    %71 = vector.broadcast %cst_37 : f32 to vector<16x128xf32>
    %72 = arith.mulf %71, %70 : vector<16x128xf32>
    %73 = math.tanh %72 : vector<16x128xf32>
    %cst_38 = arith.constant 5.000000e-01 : f32
    %74 = vector.broadcast %cst_38 : f32 to vector<16x128xf32>
    %75 = arith.mulf %74, %73 : vector<16x128xf32>
    %cst_39 = arith.constant 5.000000e-01 : f32
    %76 = vector.broadcast %cst_39 : f32 to vector<16x128xf32>
    %77 = arith.addf %75, %76 : vector<16x128xf32>
    %78 = vector.extract_strided_slice %61 {offsets = [0, 256], sizes = [16, 128], strides = [1, 1]} : vector<16x512xf32> to vector<16x128xf32>
    %79 = math.tanh %78 : vector<16x128xf32>
    %80 = vector.extract_strided_slice %61 {offsets = [0, 384], sizes = [16, 128], strides = [1, 1]} : vector<16x512xf32> to vector<16x128xf32>
    %cst_40 = arith.constant 5.000000e-01 : f32
    %81 = vector.broadcast %cst_40 : f32 to vector<16x128xf32>
    %82 = arith.mulf %81, %80 : vector<16x128xf32>
    %83 = math.tanh %82 : vector<16x128xf32>
    %cst_41 = arith.constant 5.000000e-01 : f32
    %84 = vector.broadcast %cst_41 : f32 to vector<16x128xf32>
    %85 = arith.mulf %84, %83 : vector<16x128xf32>
    %cst_42 = arith.constant 5.000000e-01 : f32
    %86 = vector.broadcast %cst_42 : f32 to vector<16x128xf32>
    %87 = arith.addf %85, %86 : vector<16x128xf32>
    %88 = arith.mulf %77, %49 : vector<16x128xf32>
    %89 = arith.mulf %69, %79 : vector<16x128xf32>
    %90 = arith.addf %88, %89 : vector<16x128xf32>
    %91 = math.tanh %90 : vector<16x128xf32>
    %92 = arith.mulf %87, %91 : vector<16x128xf32>
    %93 = arith.extui %8 : i1 to i32
    %c0_i32_43 = arith.constant 0 : i32
    %94 = arith.cmpi ne, %93, %c0_i32_43 : i32
    scf.if %94 {
      %347 = arith.truncf %92 : vector<16x128xf32> to vector<16x128xbf16>
      %348 = arith.index_cast %c1_i32_27 : i32 to index
      %c0_146 = arith.constant 0 : index
      %c0_147 = arith.constant 0 : index
      %349 = vector.load %arg13[%348, %c0_146, %c0_147] : memref<8x16x128xbf16, #tpu.memory_space<vmem>>, vector<1x16x128xbf16>
      %350 = vector.shape_cast %349 : vector<1x16x128xbf16> to vector<16x128xbf16>
      %351 = vector.shape_cast %347 : vector<16x128xbf16> to vector<1x16x128xbf16>
      tpu.vector_store %arg13[%348, %c0_146, %c0_147], %351 {strides = array<i32>} : memref<8x16x128xbf16, #tpu.memory_space<vmem>>, vector<1x16x128xbf16>,
    } else {
    }
    %c2_i32 = arith.constant 2 : i32
    %95 = arith.index_cast %c2_i32 : i32 to index
    %c0_44 = arith.constant 0 : index
    %c0_45 = arith.constant 0 : index
    %96 = vector.load %arg14[%95, %c0_44, %c0_45] : memref<8x16x512xf32, #tpu.memory_space<vmem>>, vector<1x16x512xf32>
    %97 = vector.shape_cast %96 : vector<1x16x512xf32> to vector<16x512xf32>
    %98 = arith.truncf %92 : vector<16x128xf32> to vector<16x128xbf16>
    %c0_46 = arith.constant 0 : index
    %c0_47 = arith.constant 0 : index
    %c0_48 = arith.constant 0 : index
    %99 = vector.load %arg7[%c0_46, %c0_47, %c0_48] : memref<1x128x512xbf16, #tpu.memory_space<vmem>>, vector<1x128x512xbf16>
    %100 = vector.shape_cast %99 : vector<1x128x512xbf16> to vector<128x512xbf16>
    %cst_49 = arith.constant dense<0.000000e+00> : vector<16x512xf32>
    %101 = tpu.matmul %98, %100, %cst_49 {dimension_numbers = #tpu.dot_dimension_numbers<[1], [0], [0], [1], [0, 0, 1, 1], [], []>} : vector<16x128xbf16>, vector<128x512xbf16>, vector<16x512xf32> -> vector<16x512xf32>
    %102 = arith.addf %97, %101 : vector<16x512xf32>
    %103 = vector.extract_strided_slice %102 {offsets = [0, 0], sizes = [16, 128], strides = [1, 1]} : vector<16x512xf32> to vector<16x128xf32>
    %cst_50 = arith.constant 5.000000e-01 : f32
    %104 = vector.broadcast %cst_50 : f32 to vector<16x128xf32>
    %105 = arith.mulf %104, %103 : vector<16x128xf32>
    %106 = math.tanh %105 : vector<16x128xf32>
    %cst_51 = arith.constant 5.000000e-01 : f32
    %107 = vector.broadcast %cst_51 : f32 to vector<16x128xf32>
    %108 = arith.mulf %107, %106 : vector<16x128xf32>
    %cst_52 = arith.constant 5.000000e-01 : f32
    %109 = vector.broadcast %cst_52 : f32 to vector<16x128xf32>
    %110 = arith.addf %108, %109 : vector<16x128xf32>
    %111 = vector.extract_strided_slice %102 {offsets = [0, 128], sizes = [16, 128], strides = [1, 1]} : vector<16x512xf32> to vector<16x128xf32>
    %cst_53 = arith.constant 5.000000e-01 : f32
    %112 = vector.broadcast %cst_53 : f32 to vector<16x128xf32>
    %113 = arith.mulf %112, %111 : vector<16x128xf32>
    %114 = math.tanh %113 : vector<16x128xf32>
    %cst_54 = arith.constant 5.000000e-01 : f32
    %115 = vector.broadcast %cst_54 : f32 to vector<16x128xf32>
    %116 = arith.mulf %115, %114 : vector<16x128xf32>
    %cst_55 = arith.constant 5.000000e-01 : f32
    %117 = vector.broadcast %cst_55 : f32 to vector<16x128xf32>
    %118 = arith.addf %116, %117 : vector<16x128xf32>
    %119 = vector.extract_strided_slice %102 {offsets = [0, 256], sizes = [16, 128], strides = [1, 1]} : vector<16x512xf32> to vector<16x128xf32>
    %120 = math.tanh %119 : vector<16x128xf32>
    %121 = vector.extract_strided_slice %102 {offsets = [0, 384], sizes = [16, 128], strides = [1, 1]} : vector<16x512xf32> to vector<16x128xf32>
    %cst_56 = arith.constant 5.000000e-01 : f32
    %122 = vector.broadcast %cst_56 : f32 to vector<16x128xf32>
    %123 = arith.mulf %122, %121 : vector<16x128xf32>
    %124 = math.tanh %123 : vector<16x128xf32>
    %cst_57 = arith.constant 5.000000e-01 : f32
    %125 = vector.broadcast %cst_57 : f32 to vector<16x128xf32>
    %126 = arith.mulf %125, %124 : vector<16x128xf32>
    %cst_58 = arith.constant 5.000000e-01 : f32
    %127 = vector.broadcast %cst_58 : f32 to vector<16x128xf32>
    %128 = arith.addf %126, %127 : vector<16x128xf32>
    %129 = arith.mulf %118, %90 : vector<16x128xf32>
    %130 = arith.mulf %110, %120 : vector<16x128xf32>
    %131 = arith.addf %129, %130 : vector<16x128xf32>
    %132 = math.tanh %131 : vector<16x128xf32>
    %133 = arith.mulf %128, %132 : vector<16x128xf32>
    %134 = arith.extui %8 : i1 to i32
    %c0_i32_59 = arith.constant 0 : i32
    %135 = arith.cmpi ne, %134, %c0_i32_59 : i32
    scf.if %135 {
      %347 = arith.truncf %133 : vector<16x128xf32> to vector<16x128xbf16>
      %348 = arith.index_cast %c2_i32 : i32 to index
      %c0_146 = arith.constant 0 : index
      %c0_147 = arith.constant 0 : index
      %349 = vector.load %arg13[%348, %c0_146, %c0_147] : memref<8x16x128xbf16, #tpu.memory_space<vmem>>, vector<1x16x128xbf16>
      %350 = vector.shape_cast %349 : vector<1x16x128xbf16> to vector<16x128xbf16>
      %351 = vector.shape_cast %347 : vector<16x128xbf16> to vector<1x16x128xbf16>
      tpu.vector_store %arg13[%348, %c0_146, %c0_147], %351 {strides = array<i32>} : memref<8x16x128xbf16, #tpu.memory_space<vmem>>, vector<1x16x128xbf16>,
    } else {
    }
    %c3_i32 = arith.constant 3 : i32
    %136 = arith.index_cast %c3_i32 : i32 to index
    %c0_60 = arith.constant 0 : index
    %c0_61 = arith.constant 0 : index
    %137 = vector.load %arg14[%136, %c0_60, %c0_61] : memref<8x16x512xf32, #tpu.memory_space<vmem>>, vector<1x16x512xf32>
    %138 = vector.shape_cast %137 : vector<1x16x512xf32> to vector<16x512xf32>
    %139 = arith.truncf %133 : vector<16x128xf32> to vector<16x128xbf16>
    %c0_62 = arith.constant 0 : index
    %c0_63 = arith.constant 0 : index
    %c0_64 = arith.constant 0 : index
    %140 = vector.load %arg7[%c0_62, %c0_63, %c0_64] : memref<1x128x512xbf16, #tpu.memory_space<vmem>>, vector<1x128x512xbf16>
    %141 = vector.shape_cast %140 : vector<1x128x512xbf16> to vector<128x512xbf16>
    %cst_65 = arith.constant dense<0.000000e+00> : vector<16x512xf32>
    %142 = tpu.matmul %139, %141, %cst_65 {dimension_numbers = #tpu.dot_dimension_numbers<[1], [0], [0], [1], [0, 0, 1, 1], [], []>} : vector<16x128xbf16>, vector<128x512xbf16>, vector<16x512xf32> -> vector<16x512xf32>
    %143 = arith.addf %138, %142 : vector<16x512xf32>
    %144 = vector.extract_strided_slice %143 {offsets = [0, 0], sizes = [16, 128], strides = [1, 1]} : vector<16x512xf32> to vector<16x128xf32>
    %cst_66 = arith.constant 5.000000e-01 : f32
    %145 = vector.broadcast %cst_66 : f32 to vector<16x128xf32>
    %146 = arith.mulf %145, %144 : vector<16x128xf32>
    %147 = math.tanh %146 : vector<16x128xf32>
    %cst_67 = arith.constant 5.000000e-01 : f32
    %148 = vector.broadcast %cst_67 : f32 to vector<16x128xf32>
    %149 = arith.mulf %148, %147 : vector<16x128xf32>
    %cst_68 = arith.constant 5.000000e-01 : f32
    %150 = vector.broadcast %cst_68 : f32 to vector<16x128xf32>
    %151 = arith.addf %149, %150 : vector<16x128xf32>
    %152 = vector.extract_strided_slice %143 {offsets = [0, 128], sizes = [16, 128], strides = [1, 1]} : vector<16x512xf32> to vector<16x128xf32>
    %cst_69 = arith.constant 5.000000e-01 : f32
    %153 = vector.broadcast %cst_69 : f32 to vector<16x128xf32>
    %154 = arith.mulf %153, %152 : vector<16x128xf32>
    %155 = math.tanh %154 : vector<16x128xf32>
    %cst_70 = arith.constant 5.000000e-01 : f32
    %156 = vector.broadcast %cst_70 : f32 to vector<16x128xf32>
    %157 = arith.mulf %156, %155 : vector<16x128xf32>
    %cst_71 = arith.constant 5.000000e-01 : f32
    %158 = vector.broadcast %cst_71 : f32 to vector<16x128xf32>
    %159 = arith.addf %157, %158 : vector<16x128xf32>
    %160 = vector.extract_strided_slice %143 {offsets = [0, 256], sizes = [16, 128], strides = [1, 1]} : vector<16x512xf32> to vector<16x128xf32>
    %161 = math.tanh %160 : vector<16x128xf32>
    %162 = vector.extract_strided_slice %143 {offsets = [0, 384], sizes = [16, 128], strides = [1, 1]} : vector<16x512xf32> to vector<16x128xf32>
    %cst_72 = arith.constant 5.000000e-01 : f32
    %163 = vector.broadcast %cst_72 : f32 to vector<16x128xf32>
    %164 = arith.mulf %163, %162 : vector<16x128xf32>
    %165 = math.tanh %164 : vector<16x128xf32>
    %cst_73 = arith.constant 5.000000e-01 : f32
    %166 = vector.broadcast %cst_73 : f32 to vector<16x128xf32>
    %167 = arith.mulf %166, %165 : vector<16x128xf32>
    %cst_74 = arith.constant 5.000000e-01 : f32
    %168 = vector.broadcast %cst_74 : f32 to vector<16x128xf32>
    %169 = arith.addf %167, %168 : vector<16x128xf32>
    %170 = arith.mulf %159, %131 : vector<16x128xf32>
    %171 = arith.mulf %151, %161 : vector<16x128xf32>
    %172 = arith.addf %170, %171 : vector<16x128xf32>
    %173 = math.tanh %172 : vector<16x128xf32>
    %174 = arith.mulf %169, %173 : vector<16x128xf32>
    %175 = arith.extui %8 : i1 to i32
    %c0_i32_75 = arith.constant 0 : i32
    %176 = arith.cmpi ne, %175, %c0_i32_75 : i32
    scf.if %176 {
      %347 = arith.truncf %174 : vector<16x128xf32> to vector<16x128xbf16>
      %348 = arith.index_cast %c3_i32 : i32 to index
      %c0_146 = arith.constant 0 : index
      %c0_147 = arith.constant 0 : index
      %349 = vector.load %arg13[%348, %c0_146, %c0_147] : memref<8x16x128xbf16, #tpu.memory_space<vmem>>, vector<1x16x128xbf16>
      %350 = vector.shape_cast %349 : vector<1x16x128xbf16> to vector<16x128xbf16>
      %351 = vector.shape_cast %347 : vector<16x128xbf16> to vector<1x16x128xbf16>
      tpu.vector_store %arg13[%348, %c0_146, %c0_147], %351 {strides = array<i32>} : memref<8x16x128xbf16, #tpu.memory_space<vmem>>, vector<1x16x128xbf16>,
    } else {
    }
    %c4_i32 = arith.constant 4 : i32
    %177 = arith.index_cast %c4_i32 : i32 to index
    %c0_76 = arith.constant 0 : index
    %c0_77 = arith.constant 0 : index
    %178 = vector.load %arg14[%177, %c0_76, %c0_77] : memref<8x16x512xf32, #tpu.memory_space<vmem>>, vector<1x16x512xf32>
    %179 = vector.shape_cast %178 : vector<1x16x512xf32> to vector<16x512xf32>
    %180 = arith.truncf %174 : vector<16x128xf32> to vector<16x128xbf16>
    %c0_78 = arith.constant 0 : index
    %c0_79 = arith.constant 0 : index
    %c0_80 = arith.constant 0 : index
    %181 = vector.load %arg7[%c0_78, %c0_79, %c0_80] : memref<1x128x512xbf16, #tpu.memory_space<vmem>>, vector<1x128x512xbf16>
    %182 = vector.shape_cast %181 : vector<1x128x512xbf16> to vector<128x512xbf16>
    %cst_81 = arith.constant dense<0.000000e+00> : vector<16x512xf32>
    %183 = tpu.matmul %180, %182, %cst_81 {dimension_numbers = #tpu.dot_dimension_numbers<[1], [0], [0], [1], [0, 0, 1, 1], [], []>} : vector<16x128xbf16>, vector<128x512xbf16>, vector<16x512xf32> -> vector<16x512xf32>
    %184 = arith.addf %179, %183 : vector<16x512xf32>
    %185 = vector.extract_strided_slice %184 {offsets = [0, 0], sizes = [16, 128], strides = [1, 1]} : vector<16x512xf32> to vector<16x128xf32>
    %cst_82 = arith.constant 5.000000e-01 : f32
    %186 = vector.broadcast %cst_82 : f32 to vector<16x128xf32>
    %187 = arith.mulf %186, %185 : vector<16x128xf32>
    %188 = math.tanh %187 : vector<16x128xf32>
    %cst_83 = arith.constant 5.000000e-01 : f32
    %189 = vector.broadcast %cst_83 : f32 to vector<16x128xf32>
    %190 = arith.mulf %189, %188 : vector<16x128xf32>
    %cst_84 = arith.constant 5.000000e-01 : f32
    %191 = vector.broadcast %cst_84 : f32 to vector<16x128xf32>
    %192 = arith.addf %190, %191 : vector<16x128xf32>
    %193 = vector.extract_strided_slice %184 {offsets = [0, 128], sizes = [16, 128], strides = [1, 1]} : vector<16x512xf32> to vector<16x128xf32>
    %cst_85 = arith.constant 5.000000e-01 : f32
    %194 = vector.broadcast %cst_85 : f32 to vector<16x128xf32>
    %195 = arith.mulf %194, %193 : vector<16x128xf32>
    %196 = math.tanh %195 : vector<16x128xf32>
    %cst_86 = arith.constant 5.000000e-01 : f32
    %197 = vector.broadcast %cst_86 : f32 to vector<16x128xf32>
    %198 = arith.mulf %197, %196 : vector<16x128xf32>
    %cst_87 = arith.constant 5.000000e-01 : f32
    %199 = vector.broadcast %cst_87 : f32 to vector<16x128xf32>
    %200 = arith.addf %198, %199 : vector<16x128xf32>
    %201 = vector.extract_strided_slice %184 {offsets = [0, 256], sizes = [16, 128], strides = [1, 1]} : vector<16x512xf32> to vector<16x128xf32>
    %202 = math.tanh %201 : vector<16x128xf32>
    %203 = vector.extract_strided_slice %184 {offsets = [0, 384], sizes = [16, 128], strides = [1, 1]} : vector<16x512xf32> to vector<16x128xf32>
    %cst_88 = arith.constant 5.000000e-01 : f32
    %204 = vector.broadcast %cst_88 : f32 to vector<16x128xf32>
    %205 = arith.mulf %204, %203 : vector<16x128xf32>
    %206 = math.tanh %205 : vector<16x128xf32>
    %cst_89 = arith.constant 5.000000e-01 : f32
    %207 = vector.broadcast %cst_89 : f32 to vector<16x128xf32>
    %208 = arith.mulf %207, %206 : vector<16x128xf32>
    %cst_90 = arith.constant 5.000000e-01 : f32
    %209 = vector.broadcast %cst_90 : f32 to vector<16x128xf32>
    %210 = arith.addf %208, %209 : vector<16x128xf32>
    %211 = arith.mulf %200, %172 : vector<16x128xf32>
    %212 = arith.mulf %192, %202 : vector<16x128xf32>
    %213 = arith.addf %211, %212 : vector<16x128xf32>
    %214 = math.tanh %213 : vector<16x128xf32>
    %215 = arith.mulf %210, %214 : vector<16x128xf32>
    %216 = arith.extui %8 : i1 to i32
    %c0_i32_91 = arith.constant 0 : i32
    %217 = arith.cmpi ne, %216, %c0_i32_91 : i32
    scf.if %217 {
      %347 = arith.truncf %215 : vector<16x128xf32> to vector<16x128xbf16>
      %348 = arith.index_cast %c4_i32 : i32 to index
      %c0_146 = arith.constant 0 : index
      %c0_147 = arith.constant 0 : index
      %349 = vector.load %arg13[%348, %c0_146, %c0_147] : memref<8x16x128xbf16, #tpu.memory_space<vmem>>, vector<1x16x128xbf16>
      %350 = vector.shape_cast %349 : vector<1x16x128xbf16> to vector<16x128xbf16>
      %351 = vector.shape_cast %347 : vector<16x128xbf16> to vector<1x16x128xbf16>
      tpu.vector_store %arg13[%348, %c0_146, %c0_147], %351 {strides = array<i32>} : memref<8x16x128xbf16, #tpu.memory_space<vmem>>, vector<1x16x128xbf16>,
    } else {
    }
    %c5_i32 = arith.constant 5 : i32
    %218 = arith.index_cast %c5_i32 : i32 to index
    %c0_92 = arith.constant 0 : index
    %c0_93 = arith.constant 0 : index
    %219 = vector.load %arg14[%218, %c0_92, %c0_93] : memref<8x16x512xf32, #tpu.memory_space<vmem>>, vector<1x16x512xf32>
    %220 = vector.shape_cast %219 : vector<1x16x512xf32> to vector<16x512xf32>
    %221 = arith.truncf %215 : vector<16x128xf32> to vector<16x128xbf16>
    %c0_94 = arith.constant 0 : index
    %c0_95 = arith.constant 0 : index
    %c0_96 = arith.constant 0 : index
    %222 = vector.load %arg7[%c0_94, %c0_95, %c0_96] : memref<1x128x512xbf16, #tpu.memory_space<vmem>>, vector<1x128x512xbf16>
    %223 = vector.shape_cast %222 : vector<1x128x512xbf16> to vector<128x512xbf16>
    %cst_97 = arith.constant dense<0.000000e+00> : vector<16x512xf32>
    %224 = tpu.matmul %221, %223, %cst_97 {dimension_numbers = #tpu.dot_dimension_numbers<[1], [0], [0], [1], [0, 0, 1, 1], [], []>} : vector<16x128xbf16>, vector<128x512xbf16>, vector<16x512xf32> -> vector<16x512xf32>
    %225 = arith.addf %220, %224 : vector<16x512xf32>
    %226 = vector.extract_strided_slice %225 {offsets = [0, 0], sizes = [16, 128], strides = [1, 1]} : vector<16x512xf32> to vector<16x128xf32>
    %cst_98 = arith.constant 5.000000e-01 : f32
    %227 = vector.broadcast %cst_98 : f32 to vector<16x128xf32>
    %228 = arith.mulf %227, %226 : vector<16x128xf32>
    %229 = math.tanh %228 : vector<16x128xf32>
    %cst_99 = arith.constant 5.000000e-01 : f32
    %230 = vector.broadcast %cst_99 : f32 to vector<16x128xf32>
    %231 = arith.mulf %230, %229 : vector<16x128xf32>
    %cst_100 = arith.constant 5.000000e-01 : f32
    %232 = vector.broadcast %cst_100 : f32 to vector<16x128xf32>
    %233 = arith.addf %231, %232 : vector<16x128xf32>
    %234 = vector.extract_strided_slice %225 {offsets = [0, 128], sizes = [16, 128], strides = [1, 1]} : vector<16x512xf32> to vector<16x128xf32>
    %cst_101 = arith.constant 5.000000e-01 : f32
    %235 = vector.broadcast %cst_101 : f32 to vector<16x128xf32>
    %236 = arith.mulf %235, %234 : vector<16x128xf32>
    %237 = math.tanh %236 : vector<16x128xf32>
    %cst_102 = arith.constant 5.000000e-01 : f32
    %238 = vector.broadcast %cst_102 : f32 to vector<16x128xf32>
    %239 = arith.mulf %238, %237 : vector<16x128xf32>
    %cst_103 = arith.constant 5.000000e-01 : f32
    %240 = vector.broadcast %cst_103 : f32 to vector<16x128xf32>
    %241 = arith.addf %239, %240 : vector<16x128xf32>
    %242 = vector.extract_strided_slice %225 {offsets = [0, 256], sizes = [16, 128], strides = [1, 1]} : vector<16x512xf32> to vector<16x128xf32>
    %243 = math.tanh %242 : vector<16x128xf32>
    %244 = vector.extract_strided_slice %225 {offsets = [0, 384], sizes = [16, 128], strides = [1, 1]} : vector<16x512xf32> to vector<16x128xf32>
    %cst_104 = arith.constant 5.000000e-01 : f32
    %245 = vector.broadcast %cst_104 : f32 to vector<16x128xf32>
    %246 = arith.mulf %245, %244 : vector<16x128xf32>
    %247 = math.tanh %246 : vector<16x128xf32>
    %cst_105 = arith.constant 5.000000e-01 : f32
    %248 = vector.broadcast %cst_105 : f32 to vector<16x128xf32>
    %249 = arith.mulf %248, %247 : vector<16x128xf32>
    %cst_106 = arith.constant 5.000000e-01 : f32
    %250 = vector.broadcast %cst_106 : f32 to vector<16x128xf32>
    %251 = arith.addf %249, %250 : vector<16x128xf32>
    %252 = arith.mulf %241, %213 : vector<16x128xf32>
    %253 = arith.mulf %233, %243 : vector<16x128xf32>
    %254 = arith.addf %252, %253 : vector<16x128xf32>
    %255 = math.tanh %254 : vector<16x128xf32>
    %256 = arith.mulf %251, %255 : vector<16x128xf32>
    %257 = arith.extui %8 : i1 to i32
    %c0_i32_107 = arith.constant 0 : i32
    %258 = arith.cmpi ne, %257, %c0_i32_107 : i32
    scf.if %258 {
      %347 = arith.truncf %256 : vector<16x128xf32> to vector<16x128xbf16>
      %348 = arith.index_cast %c5_i32 : i32 to index
      %c0_146 = arith.constant 0 : index
      %c0_147 = arith.constant 0 : index
      %349 = vector.load %arg13[%348, %c0_146, %c0_147] : memref<8x16x128xbf16, #tpu.memory_space<vmem>>, vector<1x16x128xbf16>
      %350 = vector.shape_cast %349 : vector<1x16x128xbf16> to vector<16x128xbf16>
      %351 = vector.shape_cast %347 : vector<16x128xbf16> to vector<1x16x128xbf16>
      tpu.vector_store %arg13[%348, %c0_146, %c0_147], %351 {strides = array<i32>} : memref<8x16x128xbf16, #tpu.memory_space<vmem>>, vector<1x16x128xbf16>,
    } else {
    }
    %c6_i32 = arith.constant 6 : i32
    %259 = arith.index_cast %c6_i32 : i32 to index
    %c0_108 = arith.constant 0 : index
    %c0_109 = arith.constant 0 : index
    %260 = vector.load %arg14[%259, %c0_108, %c0_109] : memref<8x16x512xf32, #tpu.memory_space<vmem>>, vector<1x16x512xf32>
    %261 = vector.shape_cast %260 : vector<1x16x512xf32> to vector<16x512xf32>
    %262 = arith.truncf %256 : vector<16x128xf32> to vector<16x128xbf16>
    %c0_110 = arith.constant 0 : index
    %c0_111 = arith.constant 0 : index
    %c0_112 = arith.constant 0 : index
    %263 = vector.load %arg7[%c0_110, %c0_111, %c0_112] : memref<1x128x512xbf16, #tpu.memory_space<vmem>>, vector<1x128x512xbf16>
    %264 = vector.shape_cast %263 : vector<1x128x512xbf16> to vector<128x512xbf16>
    %cst_113 = arith.constant dense<0.000000e+00> : vector<16x512xf32>
    %265 = tpu.matmul %262, %264, %cst_113 {dimension_numbers = #tpu.dot_dimension_numbers<[1], [0], [0], [1], [0, 0, 1, 1], [], []>} : vector<16x128xbf16>, vector<128x512xbf16>, vector<16x512xf32> -> vector<16x512xf32>
    %266 = arith.addf %261, %265 : vector<16x512xf32>
    %267 = vector.extract_strided_slice %266 {offsets = [0, 0], sizes = [16, 128], strides = [1, 1]} : vector<16x512xf32> to vector<16x128xf32>
    %cst_114 = arith.constant 5.000000e-01 : f32
    %268 = vector.broadcast %cst_114 : f32 to vector<16x128xf32>
    %269 = arith.mulf %268, %267 : vector<16x128xf32>
    %270 = math.tanh %269 : vector<16x128xf32>
    %cst_115 = arith.constant 5.000000e-01 : f32
    %271 = vector.broadcast %cst_115 : f32 to vector<16x128xf32>
    %272 = arith.mulf %271, %270 : vector<16x128xf32>
    %cst_116 = arith.constant 5.000000e-01 : f32
    %273 = vector.broadcast %cst_116 : f32 to vector<16x128xf32>
    %274 = arith.addf %272, %273 : vector<16x128xf32>
    %275 = vector.extract_strided_slice %266 {offsets = [0, 128], sizes = [16, 128], strides = [1, 1]} : vector<16x512xf32> to vector<16x128xf32>
    %cst_117 = arith.constant 5.000000e-01 : f32
    %276 = vector.broadcast %cst_117 : f32 to vector<16x128xf32>
    %277 = arith.mulf %276, %275 : vector<16x128xf32>
    %278 = math.tanh %277 : vector<16x128xf32>
    %cst_118 = arith.constant 5.000000e-01 : f32
    %279 = vector.broadcast %cst_118 : f32 to vector<16x128xf32>
    %280 = arith.mulf %279, %278 : vector<16x128xf32>
    %cst_119 = arith.constant 5.000000e-01 : f32
    %281 = vector.broadcast %cst_119 : f32 to vector<16x128xf32>
    %282 = arith.addf %280, %281 : vector<16x128xf32>
    %283 = vector.extract_strided_slice %266 {offsets = [0, 256], sizes = [16, 128], strides = [1, 1]} : vector<16x512xf32> to vector<16x128xf32>
    %284 = math.tanh %283 : vector<16x128xf32>
    %285 = vector.extract_strided_slice %266 {offsets = [0, 384], sizes = [16, 128], strides = [1, 1]} : vector<16x512xf32> to vector<16x128xf32>
    %cst_120 = arith.constant 5.000000e-01 : f32
    %286 = vector.broadcast %cst_120 : f32 to vector<16x128xf32>
    %287 = arith.mulf %286, %285 : vector<16x128xf32>
    %288 = math.tanh %287 : vector<16x128xf32>
    %cst_121 = arith.constant 5.000000e-01 : f32
    %289 = vector.broadcast %cst_121 : f32 to vector<16x128xf32>
    %290 = arith.mulf %289, %288 : vector<16x128xf32>
    %cst_122 = arith.constant 5.000000e-01 : f32
    %291 = vector.broadcast %cst_122 : f32 to vector<16x128xf32>
    %292 = arith.addf %290, %291 : vector<16x128xf32>
    %293 = arith.mulf %282, %254 : vector<16x128xf32>
    %294 = arith.mulf %274, %284 : vector<16x128xf32>
    %295 = arith.addf %293, %294 : vector<16x128xf32>
    %296 = math.tanh %295 : vector<16x128xf32>
    %297 = arith.mulf %292, %296 : vector<16x128xf32>
    %298 = arith.extui %8 : i1 to i32
    %c0_i32_123 = arith.constant 0 : i32
    %299 = arith.cmpi ne, %298, %c0_i32_123 : i32
    scf.if %299 {
      %347 = arith.truncf %297 : vector<16x128xf32> to vector<16x128xbf16>
      %348 = arith.index_cast %c6_i32 : i32 to index
      %c0_146 = arith.constant 0 : index
      %c0_147 = arith.constant 0 : index
      %349 = vector.load %arg13[%348, %c0_146, %c0_147] : memref<8x16x128xbf16, #tpu.memory_space<vmem>>, vector<1x16x128xbf16>
      %350 = vector.shape_cast %349 : vector<1x16x128xbf16> to vector<16x128xbf16>
      %351 = vector.shape_cast %347 : vector<16x128xbf16> to vector<1x16x128xbf16>
      tpu.vector_store %arg13[%348, %c0_146, %c0_147], %351 {strides = array<i32>} : memref<8x16x128xbf16, #tpu.memory_space<vmem>>, vector<1x16x128xbf16>,
    } else {
    }
    %c7_i32 = arith.constant 7 : i32
    %300 = arith.index_cast %c7_i32 : i32 to index
    %c0_124 = arith.constant 0 : index
    %c0_125 = arith.constant 0 : index
    %301 = vector.load %arg14[%300, %c0_124, %c0_125] : memref<8x16x512xf32, #tpu.memory_space<vmem>>, vector<1x16x512xf32>
    %302 = vector.shape_cast %301 : vector<1x16x512xf32> to vector<16x512xf32>
    %303 = arith.truncf %297 : vector<16x128xf32> to vector<16x128xbf16>
    %c0_126 = arith.constant 0 : index
    %c0_127 = arith.constant 0 : index
    %c0_128 = arith.constant 0 : index
    %304 = vector.load %arg7[%c0_126, %c0_127, %c0_128] : memref<1x128x512xbf16, #tpu.memory_space<vmem>>, vector<1x128x512xbf16>
    %305 = vector.shape_cast %304 : vector<1x128x512xbf16> to vector<128x512xbf16>
    %cst_129 = arith.constant dense<0.000000e+00> : vector<16x512xf32>
    %306 = tpu.matmul %303, %305, %cst_129 {dimension_numbers = #tpu.dot_dimension_numbers<[1], [0], [0], [1], [0, 0, 1, 1], [], []>} : vector<16x128xbf16>, vector<128x512xbf16>, vector<16x512xf32> -> vector<16x512xf32>
    %307 = arith.addf %302, %306 : vector<16x512xf32>
    %308 = vector.extract_strided_slice %307 {offsets = [0, 0], sizes = [16, 128], strides = [1, 1]} : vector<16x512xf32> to vector<16x128xf32>
    %cst_130 = arith.constant 5.000000e-01 : f32
    %309 = vector.broadcast %cst_130 : f32 to vector<16x128xf32>
    %310 = arith.mulf %309, %308 : vector<16x128xf32>
    %311 = math.tanh %310 : vector<16x128xf32>
    %cst_131 = arith.constant 5.000000e-01 : f32
    %312 = vector.broadcast %cst_131 : f32 to vector<16x128xf32>
    %313 = arith.mulf %312, %311 : vector<16x128xf32>
    %cst_132 = arith.constant 5.000000e-01 : f32
    %314 = vector.broadcast %cst_132 : f32 to vector<16x128xf32>
    %315 = arith.addf %313, %314 : vector<16x128xf32>
    %316 = vector.extract_strided_slice %307 {offsets = [0, 128], sizes = [16, 128], strides = [1, 1]} : vector<16x512xf32> to vector<16x128xf32>
    %cst_133 = arith.constant 5.000000e-01 : f32
    %317 = vector.broadcast %cst_133 : f32 to vector<16x128xf32>
    %318 = arith.mulf %317, %316 : vector<16x128xf32>
    %319 = math.tanh %318 : vector<16x128xf32>
    %cst_134 = arith.constant 5.000000e-01 : f32
    %320 = vector.broadcast %cst_134 : f32 to vector<16x128xf32>
    %321 = arith.mulf %320, %319 : vector<16x128xf32>
    %cst_135 = arith.constant 5.000000e-01 : f32
    %322 = vector.broadcast %cst_135 : f32 to vector<16x128xf32>
    %323 = arith.addf %321, %322 : vector<16x128xf32>
    %324 = vector.extract_strided_slice %307 {offsets = [0, 256], sizes = [16, 128], strides = [1, 1]} : vector<16x512xf32> to vector<16x128xf32>
    %325 = math.tanh %324 : vector<16x128xf32>
    %326 = vector.extract_strided_slice %307 {offsets = [0, 384], sizes = [16, 128], strides = [1, 1]} : vector<16x512xf32> to vector<16x128xf32>
    %cst_136 = arith.constant 5.000000e-01 : f32
    %327 = vector.broadcast %cst_136 : f32 to vector<16x128xf32>
    %328 = arith.mulf %327, %326 : vector<16x128xf32>
    %329 = math.tanh %328 : vector<16x128xf32>
    %cst_137 = arith.constant 5.000000e-01 : f32
    %330 = vector.broadcast %cst_137 : f32 to vector<16x128xf32>
    %331 = arith.mulf %330, %329 : vector<16x128xf32>
    %cst_138 = arith.constant 5.000000e-01 : f32
    %332 = vector.broadcast %cst_138 : f32 to vector<16x128xf32>
    %333 = arith.addf %331, %332 : vector<16x128xf32>
    %334 = arith.mulf %323, %295 : vector<16x128xf32>
    %335 = arith.mulf %315, %325 : vector<16x128xf32>
    %336 = arith.addf %334, %335 : vector<16x128xf32>
    %337 = math.tanh %336 : vector<16x128xf32>
    %338 = arith.mulf %333, %337 : vector<16x128xf32>
    %339 = arith.extui %8 : i1 to i32
    %c0_i32_139 = arith.constant 0 : i32
    %340 = arith.cmpi ne, %339, %c0_i32_139 : i32
    scf.if %340 {
      %347 = arith.truncf %338 : vector<16x128xf32> to vector<16x128xbf16>
      %348 = arith.index_cast %c7_i32 : i32 to index
      %c0_146 = arith.constant 0 : index
      %c0_147 = arith.constant 0 : index
      %349 = vector.load %arg13[%348, %c0_146, %c0_147] : memref<8x16x128xbf16, #tpu.memory_space<vmem>>, vector<1x16x128xbf16>
      %350 = vector.shape_cast %349 : vector<1x16x128xbf16> to vector<16x128xbf16>
      %351 = vector.shape_cast %347 : vector<16x128xbf16> to vector<1x16x128xbf16>
      tpu.vector_store %arg13[%348, %c0_146, %c0_147], %351 {strides = array<i32>} : memref<8x16x128xbf16, #tpu.memory_space<vmem>>, vector<1x16x128xbf16>,
    } else {
    }
    %c8_i32 = arith.constant 8 : i32
    %c0_140 = arith.constant 0 : index
    %c0_141 = arith.constant 0 : index
    %c0_142 = arith.constant 0 : index
    %341 = vector.load %arg9[%c0_140, %c0_141, %c0_142] : memref<1x16x128xf32, #tpu.memory_space<vmem>>, vector<1x16x128xf32>
    %342 = vector.shape_cast %341 : vector<1x16x128xf32> to vector<16x128xf32>
    %343 = vector.shape_cast %338 : vector<16x128xf32> to vector<1x16x128xf32>
    tpu.vector_store %arg9[%c0_140, %c0_141, %c0_142], %343 {strides = array<i32>} : memref<1x16x128xf32, #tpu.memory_space<vmem>>, vector<1x16x128xf32>,
    %c0_143 = arith.constant 0 : index
    %c0_144 = arith.constant 0 : index
    %c0_145 = arith.constant 0 : index
    %344 = vector.load %arg10[%c0_143, %c0_144, %c0_145] : memref<1x16x128xf32, #tpu.memory_space<vmem>>, vector<1x16x128xf32>
    %345 = vector.shape_cast %344 : vector<1x16x128xf32> to vector<16x128xf32>
    %346 = vector.shape_cast %336 : vector<16x128xf32> to vector<1x16x128xf32>
    tpu.vector_store %arg10[%c0_143, %c0_144, %c0_145], %346 {strides = array<i32>} : memref<1x16x128xf32, #tpu.memory_space<vmem>>, vector<1x16x128xf32>,
    return
  }
  func.func @transform_2(%arg0: i32, %arg1: i32) -> (i32, i32, i32) {
    %c0_i32 = arith.constant 0 : i32
    %c0_i32_0 = arith.constant 0 : i32
    return %arg1, %arg0, %c0_i32 : i32, i32, i32
  }
  func.func @transform_3(%arg0: i32, %arg1: i32) -> (i32, i32, i32) {
    %c0_i32 = arith.constant 0 : i32
    %c0_i32_0 = arith.constant 0 : i32
    return %arg1, %arg0, %c0_i32 : i32, i32, i32
  }
  func.func @transform_4(%arg0: i32, %arg1: i32) -> (i32, i32, i32) {
    %c0_i32 = arith.constant 0 : i32
    %c0_i32_0 = arith.constant 0 : i32
    %c0_i32_1 = arith.constant 0 : i32
    return %arg1, %c0_i32, %c0_i32_0 : i32, i32, i32
  }
  func.func @transform_5(%arg0: i32, %arg1: i32) -> (i32, i32, i32) {
    %c0_i32 = arith.constant 0 : i32
    %c0_i32_0 = arith.constant 0 : i32
    %c0_i32_1 = arith.constant 0 : i32
    return %arg1, %c0_i32, %c0_i32_0 : i32, i32, i32
  }
  func.func @transform_6(%arg0: i32, %arg1: i32) -> (i32, i32, i32) {
    %c0_i32 = arith.constant 0 : i32
    %c0_i32_0 = arith.constant 0 : i32
    %c0_i32_1 = arith.constant 0 : i32
    return %arg1, %c0_i32, %c0_i32_0 : i32, i32, i32
  }
  func.func @transform_7(%arg0: i32, %arg1: i32) -> (i32, i32, i32) {
    %c0_i32 = arith.constant 0 : i32
    %c0_i32_0 = arith.constant 0 : i32
    return %arg1, %arg0, %c0_i32 : i32, i32, i32
  }
  func.func @transform_8(%arg0: i32, %arg1: i32) -> (i32, i32, i32) {
    %c0_i32 = arith.constant 0 : i32
    %c0_i32_0 = arith.constant 0 : i32
    return %arg1, %arg0, %c0_i32 : i32, i32, i32
  }
}

</mosaic_0001>

<llo_original>
// kernel: _lambda_.1
$region0: #{_lambda_.1}
  #allocation0 [shape = 'u32[]', space=smem, size = 0x4, offset = 0x4, fixed_abs, tag = 'smem constant byte address 0x4 - core index']
  #allocation1 [shape = 'u32[144,128]{1,0:T(1,128)}', space=vmem, size = 0x12000, scoped, tag = 'internal scratch']
  #allocation2 [shape = 'bf16[8,16,128]{2,1,0:T(16,128)(2,1)}', space=vmem, size = 0x8000, scoped, tag = 'scratch operand']
  #allocation3 [shape = 'bf16[128,512]{1,0:T(16,128)(2,1)}', space=vmem, size = 0x20000, scoped, tag = 'scratch operand']
  #allocation4 [shape = 'bf16[8,16,128]{2,1,0:T(16,128)(2,1)}', space=vmem, size = 0x8000, scoped, tag = 'scratch operand']
  #allocation5 [shape = 'f32[8,16,512]{2,1,0:T(8,128)}', space=vmem, size = 0x40000, scoped, tag = 'scratch operand']
  #allocation6 [shape = 's32[2]{0}', space=sflag, size = 0x8, scoped, tag = 'scratch operand']
  #allocation7 [shape = 's32[]', space=sflag, size = 0x4, offset = 0, fixed_abs, tag = 'sflag constant byte address 0x0 - dummy sync flag']
  #allocation8 [shape = 's32[]', space=sflag, size = 0x4, offset = 0, fixed_abs, tag = 'sflag constant byte address 0x0 - dummy sync flag']
  %s0 = inlined_call_operand.vmem [shape: bf16[1,8,16,128], index: 0, kind: input, shape index: {}]
  %s1 = inlined_call_operand.vmem [shape: bf16[128,512], index: 1, kind: input, shape index: {}]
  %s2 = inlined_call_operand.vmem [shape: f32[2,16,128], index: 2, kind: input, shape index: {}]
  %s3 = inlined_call_operand.vmem [shape: f32[2,16,128], index: 3, kind: input, shape index: {}]
  %s4 = inlined_call_operand.vmem [shape: bf16[2,128,512], index: 4, kind: input, shape index: {}]
  %s5 = inlined_call_operand.vmem [shape: bf16[2,128,512], index: 5, kind: input, shape index: {}]
  %s6 = inlined_call_operand.vmem [shape: f32[2,1,512], index: 6, kind: input, shape index: {}]
  %s7 = inlined_call_operand.vmem [shape: f32[2,16,128], index: 7, kind: output, shape index: {0}]
  %s8 = inlined_call_operand.vmem [shape: f32[2,16,128], index: 8, kind: output, shape index: {1}]
  %9 = xla_tuple %s7, %s8
  %s10 = sld [smem:[#allocation0]]
  $region172: #{_lambda_.1} parent=0
    _
  %s12 = ssub.s32 1, %s10
  %s13 = scalar_select 0, %s12, %s10
  loop: start=0, step=1, limit=4
  $region2: #{_lambda_.1} parent=0 // loop_pre_header
    _
  $region3: #{_lambda_.1} parent=0 // loop_header
    %s15 = sphi 0, %s19
    %p16 = scmp.ge.s32.totalorder %s15, 4
    %s22 = sphi 0, %s34
    %s23 = sphi 0, %s30
    %s24 = sphi 0, %s22
    %s25 = sphi 0, %s23
    %s26 = sphi 0, %s24
    %s27 = sphi 0, %s25
    %s39 = sphi 0, %s41
    %s42 = sphi 0, %s39
    %s43 = sphi 0, %s42
    %s59 = sphi 0, %s43
    %s67 = sphi 0, %s69
    %s70 = sphi 0, %s67
    %s71 = sphi 0, %s70
    %s87 = sphi 0, %s71
    %s93 = sphi 0, %s95
    %s96 = sphi 0, %s93
    %s97 = sphi 0, %s96
    %s113 = sphi 0, %s97
    %s119 = sphi 0, %s121
    %s122 = sphi 0, %s119
    %s123 = sphi 0, %s122
    %s139 = sphi 0, %s123
    %s145 = sphi 0, %s147
    %s148 = sphi 0, %s145
    %s149 = sphi 0, %s148
    %s165 = sphi 0, %s149
    %s173 = sphi 0, %s175
    %s176 = sphi 0, %s173
    %s177 = sphi 0, %s176
    %s193 = sphi 0, %s177
    %s201 = sphi 0, %s203
    %s204 = sphi 0, %s201
    %s205 = sphi 0, %s204
    %s221 = sphi 0, %s205
  $region4: #{_lambda_.1} parent=0 // loop_header_branch
    %18 = sbr.rel (%p16) target = $region8
  $region5: #{_lambda_.1} parent=0 // loop_body
    %s20 = ssub.s32 %s15, 1
    %s21 = ssub.s32 %s15, 2
    %s28 = sadd.s32 1, %s23
    %p29 = scmp.ge.s32.totalorder %s28, 2
    %s30 = scalar_select %p29, 0, %s28
    %s31 = sadd.s32 1, %s22
    %s32 = scalar_select %p29, %s31, %s22
    %p33 = scmp.ge.s32.totalorder %s32, 1
    %s34 = scalar_select %p33, 0, %s32
    %s35 = ssub.s32 %s23, %s30
    %s36 = ssub.s32 %s22, %s34
    %s37 = sor.u32 %s35, %s36
    %p38 = scmp.eq.s32.totalorder %s37, 0
    %s40 = sadd.s32 %s39, 1
    %s41 = scalar_select %p38, %s39, %s40
    %p44 = pneg %p38
    %p45 = scmp.eq.s32.totalorder %s15, 1
    %p46 = por %p44, %p45
    %p47 = scmp.ne.s32.totalorder %s39, %s42
    %p48 = scmp.eq.s32.totalorder %s15, 0
    %p49 = por %p47, %p48
    %p50 = scmp.ne.s32.totalorder %s39, %s42
    %p51 = scmp.eq.s32.totalorder %s20, 1
    %p52 = por %p50, %p51
    %p53 = scmp.ne.s32.totalorder %s42, %s43
    %p54 = scmp.eq.s32.totalorder %s20, 0
    %p55 = por %p53, %p54
    %p56 = scmp.ne.s32.totalorder %s42, %s43
    %p57 = scmp.eq.s32.totalorder %s21, 1
    %p58 = por %p56, %p57
    %p60 = scmp.ne.s32.totalorder %s43, %s59
    %p61 = scmp.eq.s32.totalorder %s21, 0
    %p62 = por %p60, %p61
    %s63 = ssub.s32 %s23, %s30
    %s64 = ssub.s32 %s22, %s34
    %s65 = sor.u32 %s63, %s64
    %p66 = scmp.eq.s32.totalorder %s65, 0
    %s68 = sadd.s32 %s67, 1
    %s69 = scalar_select %p66, %s67, %s68
    %p72 = pneg %p66
    %p73 = scmp.eq.s32.totalorder %s15, 1
    %p74 = por %p72, %p73
    %p75 = scmp.ne.s32.totalorder %s67, %s70
    %p76 = scmp.eq.s32.totalorder %s15, 0
    %p77 = por %p75, %p76
    %p78 = scmp.ne.s32.totalorder %s67, %s70
    %p79 = scmp.eq.s32.totalorder %s20, 1
    %p80 = por %p78, %p79
    %p81 = scmp.ne.s32.totalorder %s70, %s71
    %p82 = scmp.eq.s32.totalorder %s20, 0
    %p83 = por %p81, %p82
    %p84 = scmp.ne.s32.totalorder %s70, %s71
    %p85 = scmp.eq.s32.totalorder %s21, 1
    %p86 = por %p84, %p85
    %p88 = scmp.ne.s32.totalorder %s71, %s87
    %p89 = scmp.eq.s32.totalorder %s21, 0
    %p90 = por %p88, %p89
    %s91 = ssub.s32 %s23, %s30
    %p92 = scmp.eq.s32.totalorder %s91, 0
    %s94 = sadd.s32 %s93, 1
    %s95 = scalar_select %p92, %s93, %s94
    %p98 = pneg %p92
    %p99 = scmp.eq.s32.totalorder %s15, 1
    %p100 = por %p98, %p99
    %p101 = scmp.ne.s32.totalorder %s93, %s96
    %p102 = scmp.eq.s32.totalorder %s15, 0
    %p103 = por %p101, %p102
    %p104 = scmp.ne.s32.totalorder %s93, %s96
    %p105 = scmp.eq.s32.totalorder %s20, 1
    %p106 = por %p104, %p105
    %p107 = scmp.ne.s32.totalorder %s96, %s97
    %p108 = scmp.eq.s32.totalorder %s20, 0
    %p109 = por %p107, %p108
    %p110 = scmp.ne.s32.totalorder %s96, %s97
    %p111 = scmp.eq.s32.totalorder %s21, 1
    %p112 = por %p110, %p111
    %p114 = scmp.ne.s32.totalorder %s97, %s113
    %p115 = scmp.eq.s32.totalorder %s21, 0
    %p116 = por %p114, %p115
    %s117 = ssub.s32 %s23, %s30
    %p118 = scmp.eq.s32.totalorder %s117, 0
    %s120 = sadd.s32 %s119, 1
    %s121 = scalar_select %p118, %s119, %s120
    %p124 = pneg %p118
    %p125 = scmp.eq.s32.totalorder %s15, 1
    %p126 = por %p124, %p125
    %p127 = scmp.ne.s32.totalorder %s119, %s122
    %p128 = scmp.eq.s32.totalorder %s15, 0
    %p129 = por %p127, %p128
    %p130 = scmp.ne.s32.totalorder %s119, %s122
    %p131 = scmp.eq.s32.totalorder %s20, 1
    %p132 = por %p130, %p131
    %p133 = scmp.ne.s32.totalorder %s122, %s123
    %p134 = scmp.eq.s32.totalorder %s20, 0
    %p135 = por %p133, %p134
    %p136 = scmp.ne.s32.totalorder %s122, %s123
    %p137 = scmp.eq.s32.totalorder %s21, 1
    %p138 = por %p136, %p137
    %p140 = scmp.ne.s32.totalorder %s123, %s139
    %p141 = scmp.eq.s32.totalorder %s21, 0
    %p142 = por %p140, %p141
    %s143 = ssub.s32 %s23, %s30
    %p144 = scmp.eq.s32.totalorder %s143, 0
    %s146 = sadd.s32 %s145, 1
    %s147 = scalar_select %p144, %s145, %s146
    %p150 = pneg %p144
    %p151 = scmp.eq.s32.totalorder %s15, 1
    %p152 = por %p150, %p151
    %p153 = scmp.ne.s32.totalorder %s145, %s148
    %p154 = scmp.eq.s32.totalorder %s15, 0
    %p155 = por %p153, %p154
    %p156 = scmp.ne.s32.totalorder %s145, %s148
    %p157 = scmp.eq.s32.totalorder %s20, 1
    %p158 = por %p156, %p157
    %p159 = scmp.ne.s32.totalorder %s148, %s149
    %p160 = scmp.eq.s32.totalorder %s20, 0
    %p161 = por %p159, %p160
    %p162 = scmp.ne.s32.totalorder %s148, %s149
    %p163 = scmp.eq.s32.totalorder %s21, 1
    %p164 = por %p162, %p163
    %p166 = scmp.ne.s32.totalorder %s149, %s165
    %p167 = scmp.eq.s32.totalorder %s21, 0
    %p168 = por %p166, %p167
    %s169 = ssub.s32 %s23, %s30
    %s170 = ssub.s32 %s22, %s34
    %s171 = sor.u32 %s169, %s170
    %p172 = scmp.eq.s32.totalorder %s171, 0
    %s174 = sadd.s32 %s173, 1
    %s175 = scalar_select %p172, %s173, %s174
    %p178 = pneg %p172
    %p179 = scmp.eq.s32.totalorder %s15, 1
    %p180 = por %p178, %p179
    %p181 = scmp.ne.s32.totalorder %s173, %s176
    %p182 = scmp.eq.s32.totalorder %s15, 0
    %p183 = por %p181, %p182
    %p184 = scmp.ne.s32.totalorder %s173, %s176
    %p185 = scmp.eq.s32.totalorder %s20, 1
    %p186 = por %p184, %p185
    %p187 = scmp.ne.s32.totalorder %s176, %s177
    %p188 = scmp.eq.s32.totalorder %s20, 0
    %p189 = por %p187, %p188
    %p190 = scmp.ne.s32.totalorder %s176, %s177
    %p191 = scmp.eq.s32.totalorder %s21, 1
    %p192 = por %p190, %p191
    %p194 = scmp.ne.s32.totalorder %s177, %s193
    %p195 = scmp.eq.s32.totalorder %s21, 0
    %p196 = por %p194, %p195
    %s197 = ssub.s32 %s23, %s30
    %s198 = ssub.s32 %s22, %s34
    %s199 = sor.u32 %s197, %s198
    %p200 = scmp.eq.s32.totalorder %s199, 0
    %s202 = sadd.s32 %s201, 1
    %s203 = scalar_select %p200, %s201, %s202
    %p206 = pneg %p200
    %p207 = scmp.eq.s32.totalorder %s15, 1
    %p208 = por %p206, %p207
    %p209 = scmp.ne.s32.totalorder %s201, %s204
    %p210 = scmp.eq.s32.totalorder %s15, 0
    %p211 = por %p209, %p210
    %p212 = scmp.ne.s32.totalorder %s201, %s204
    %p213 = scmp.eq.s32.totalorder %s20, 1
    %p214 = por %p212, %p213
    %p215 = scmp.ne.s32.totalorder %s204, %s205
    %p216 = scmp.eq.s32.totalorder %s20, 0
    %p217 = por %p215, %p216
    %p218 = scmp.ne.s32.totalorder %s204, %s205
    %p219 = scmp.eq.s32.totalorder %s21, 1
    %p220 = por %p218, %p219
    %p222 = scmp.ne.s32.totalorder %s205, %s221
    %p223 = scmp.eq.s32.totalorder %s21, 0
    %p224 = por %p222, %p223
    %p225 = scmp.le.s32.totalorder 1, %s15
    %p226 = scmp.lt.s32.totalorder %s15, 3
    %p227 = pnand %p225, %p226
    %p228 = pneg %p227
    // Predicated region
    $region9: #{_lambda_.1} parent=5 // pred_check
      _
    $region10: #{_lambda_.1} parent=5 // pred_check_branch
      %230 = sbr.rel (%p227) target = $region12
    $region11: #{_lambda_.1} parent=5 // pred_region
      %s231 = ssub.s32 %s15, 1
    $region12: #{_lambda_.1} parent=5 // pred_fallthru
      _
    %p232 = scmp.lt.s32.totalorder %s15, 2
    // Predicated region
    $region13: #{_lambda_.1} parent=5 // pred_check
      %p233 = pneg %p232
    $region14: #{_lambda_.1} parent=5 // pred_check_branch
      %235 = sbr.rel (%p233) target = $region16
    $region15: #{_lambda_.1} parent=5 // pred_region
      // Predicated region
      $region17: #{_lambda_.1} parent=15 // pred_check
        %p236 = pneg %p49
      $region18: #{_lambda_.1} parent=15 // pred_check_branch
        %238 = sbr.rel (%p236) target = $region20
      $region19: #{_lambda_.1} parent=15 // pred_region
        %s239 = smul.u32 2, %s22
        %p240 = scmp.lt.s32.totalorder %s23, 1
        %s241 = scalar_select %p240, %s23, 1
        %p242 = scmp.lt.s32.totalorder %s239, 1
        %s243 = scalar_select %p242, %s239, 1
        %s244 = smul.addr %s241, 2
        %s245 = sadd.s32 %s243, %s244
        %s246 = smul.addr %s245, 8
        %s247 = scalar_lea.vmem %s2, %s246
        %s248 = smul.u32 2, %s22
      $region20: #{_lambda_.1} parent=15 // pred_fallthru
        _
      // Predicated region
      $region21: #{_lambda_.1} parent=15 // pred_check
        %p249 = pneg %p77
      $region22: #{_lambda_.1} parent=15 // pred_check_branch
        %251 = sbr.rel (%p249) target = $region24
      $region23: #{_lambda_.1} parent=15 // pred_region
        %s252 = smul.u32 2, %s22
        %p253 = scmp.lt.s32.totalorder %s23, 1
        %s254 = scalar_select %p253, %s23, 1
        %p255 = scmp.lt.s32.totalorder %s252, 1
        %s256 = scalar_select %p255, %s252, 1
        %s257 = smul.addr %s254, 2
        %s258 = sadd.s32 %s256, %s257
        %s259 = smul.addr %s258, 8
        %s260 = scalar_lea.vmem %s3, %s259
        %s261 = smul.u32 2, %s22
      $region24: #{_lambda_.1} parent=15 // pred_fallthru
        _
      // Predicated region
      $region25: #{_lambda_.1} parent=15 // pred_check
        %p262 = pneg %p103
      $region26: #{_lambda_.1} parent=15 // pred_check_branch
        %264 = sbr.rel (%p262) target = $region28
      $region27: #{_lambda_.1} parent=15 // pred_region
        %p265 = scmp.lt.s32.totalorder %s23, 1
        %s266 = scalar_select %p265, %s23, 1
        %s267 = smul.addr %s266, 64
        %s268 = smul.addr %s267, 4
        %s269 = scalar_lea.vmem %s4, %s268
      $region28: #{_lambda_.1} parent=15 // pred_fallthru
        _
      // Predicated region
      $region29: #{_lambda_.1} parent=15 // pred_check
        %p270 = pneg %p129
      $region30: #{_lambda_.1} parent=15 // pred_check_branch
        %272 = sbr.rel (%p270) target = $region32
      $region31: #{_lambda_.1} parent=15 // pred_region
        %p273 = scmp.lt.s32.totalorder %s23, 1
        %s274 = scalar_select %p273, %s23, 1
        %s275 = smul.addr %s274, 64
        %s276 = smul.addr %s275, 4
        %s277 = scalar_lea.vmem %s5, %s276
      $region32: #{_lambda_.1} parent=15 // pred_fallthru
        _
      // Predicated region
      $region33: #{_lambda_.1} parent=15 // pred_check
        %p278 = pneg %p155
      $region34: #{_lambda_.1} parent=15 // pred_check_branch
        %280 = sbr.rel (%p278) target = $region36
      $region35: #{_lambda_.1} parent=15 // pred_region
        %p281 = scmp.lt.s32.totalorder %s23, 1
        %s282 = scalar_select %p281, %s23, 1
        %s283 = smul.addr %s282, 4
        %s284 = scalar_lea.vmem %s6, %s283
      $region36: #{_lambda_.1} parent=15 // pred_fallthru
        _
    $region16: #{_lambda_.1} parent=5 // pred_fallthru
      _
    %p285 = scmp.le.s32.totalorder 1, %s15
    %p286 = scmp.lt.s32.totalorder %s15, 3
    %p287 = pnand %p285, %p286
    %p288 = pneg %p287
    // Predicated region
    $region37: #{_lambda_.1} parent=5 // pred_check
      _
    $region38: #{_lambda_.1} parent=5 // pred_check_branch
      %290 = sbr.rel (%p287) target = $region40
    $region39: #{_lambda_.1} parent=5 // pred_region
      %s291 = ssub.s32 %s15, 1
      %s292 = smul.u32 2, %s24
      %p293 = scmp.lt.s32.totalorder %s25, 1
      %s294 = scalar_select %p293, %s25, 1
      %p295 = scmp.lt.s32.totalorder %s292, 1
      %s296 = scalar_select %p295, %s292, 1
      %s297 = smul.addr %s294, 2
      %s298 = sadd.s32 %s296, %s297
      %s299 = smul.addr %s298, 8
      %s300 = scalar_lea.vmem %s2, %s299
      %p301 = pneg %p55
      %p302 = pneg %p52
      %s303 = smul.u32 2, %s24
      %p304 = scmp.lt.s32.totalorder %s25, 1
      %s305 = scalar_select %p304, %s25, 1
      %p306 = scmp.lt.s32.totalorder %s303, 1
      %s307 = scalar_select %p306, %s303, 1
      %s308 = smul.addr %s305, 2
      %s309 = sadd.s32 %s307, %s308
      %s310 = smul.addr %s309, 8
      %s311 = scalar_lea.vmem %s3, %s310
      %p312 = pneg %p83
      %p313 = pneg %p80
      %p314 = scmp.lt.s32.totalorder %s25, 1
      %s315 = scalar_select %p314, %s25, 1
      %s316 = smul.addr %s315, 64
      %s317 = smul.addr %s316, 4
      %s318 = scalar_lea.vmem %s4, %s317
      %p319 = pneg %p109
      %p320 = pneg %p106
      %p321 = scmp.lt.s32.totalorder %s25, 1
      %s322 = scalar_select %p321, %s25, 1
      %s323 = smul.addr %s322, 64
      %s324 = smul.addr %s323, 4
      %s325 = scalar_lea.vmem %s5, %s324
      %p326 = pneg %p135
      %p327 = pneg %p132
      %p328 = scmp.lt.s32.totalorder %s25, 1
      %s329 = scalar_select %p328, %s25, 1
      %s330 = smul.addr %s329, 4
      %s331 = scalar_lea.vmem %s6, %s330
      %p332 = pneg %p161
      %p333 = pneg %p158
      %p334 = pneg %p189
      %p335 = pneg %p186
      %s336 = smul.u32 2, %s24
      %p337 = scmp.lt.s32.totalorder %s25, 1
      %s338 = scalar_select %p337, %s25, 1
      %p339 = scmp.lt.s32.totalorder %s336, 1
      %s340 = scalar_select %p339, %s336, 1
      %s341 = smul.addr %s338, 2
      %s342 = sadd.s32 %s340, %s341
      %s343 = smul.addr %s342, 8
      %s344 = scalar_lea.vmem %s7, %s343
      %p345 = pneg %p217
      %p346 = pneg %p214
      %s347 = smul.u32 2, %s24
      %p348 = scmp.lt.s32.totalorder %s25, 1
      %s349 = scalar_select %p348, %s25, 1
      %p350 = scmp.lt.s32.totalorder %s347, 1
      %s351 = scalar_select %p350, %s347, 1
      %s352 = smul.addr %s349, 2
      %s353 = sadd.s32 %s351, %s352
      %s354 = smul.addr %s353, 8
      %s355 = scalar_lea.vmem %s8, %s354
      %s356 = smul.u32 2, %s24
      %p357 = scmp.lt.s32.totalorder %s25, 1
      %s358 = scalar_select %p357, %s25, 1
      %p359 = scmp.lt.s32.totalorder %s356, 1
      %s360 = scalar_select %p359, %s356, 1
      %s361 = smul.addr %s358, 2
      %s362 = sadd.s32 %s360, %s361
      %s363 = smul.addr %s362, 8
      %s364 = scalar_lea.vmem %s2, %s363
      %s365 = smul.u32 2, %s24
      %s366 = smul.u32 2, %s24
      %p367 = scmp.lt.s32.totalorder %s25, 1
      %s368 = scalar_select %p367, %s25, 1
      %p369 = scmp.lt.s32.totalorder %s366, 1
      %s370 = scalar_select %p369, %s366, 1
      %s371 = smul.addr %s368, 2
      %s372 = sadd.s32 %s370, %s371
      %s373 = smul.addr %s372, 8
      %s374 = scalar_lea.vmem %s3, %s373
      %s375 = smul.u32 2, %s24
      %p376 = scmp.lt.s32.totalorder %s25, 1
      %s377 = scalar_select %p376, %s25, 1
      %s378 = smul.addr %s377, 64
      %s379 = smul.addr %s378, 4
      %s380 = scalar_lea.vmem %s4, %s379
      %p381 = scmp.lt.s32.totalorder %s25, 1
      %s382 = scalar_select %p381, %s25, 1
      %s383 = smul.addr %s382, 64
      %s384 = smul.addr %s383, 4
      %s385 = scalar_lea.vmem %s5, %s384
      %p386 = scmp.lt.s32.totalorder %s25, 1
      %s387 = scalar_select %p386, %s25, 1
      %s388 = smul.addr %s387, 4
      %s389 = scalar_lea.vmem %s6, %s388
      %s390 = smul.u32 2, %s24
      %p391 = scmp.lt.s32.totalorder %s25, 1
      %s392 = scalar_select %p391, %s25, 1
      %p393 = scmp.lt.s32.totalorder %s390, 1
      %s394 = scalar_select %p393, %s390, 1
      %s395 = smul.addr %s392, 2
      %s396 = sadd.s32 %s394, %s395
      %s397 = smul.addr %s396, 8
      %s398 = scalar_lea.vmem %s7, %s397
      %s399 = smul.u32 2, %s24
      %s400 = smul.u32 2, %s24
      %p401 = scmp.lt.s32.totalorder %s25, 1
      %s402 = scalar_select %p401, %s25, 1
      %p403 = scmp.lt.s32.totalorder %s400, 1
      %s404 = scalar_select %p403, %s400, 1
      %s405 = smul.addr %s402, 2
      %s406 = sadd.s32 %s404, %s405
      %s407 = smul.addr %s406, 8
      %s408 = scalar_lea.vmem %s8, %s407
      %s409 = smul.u32 2, %s24
      %v411 = vld [vmem:[%s389] sm:$0xf]
      %p412 = scmp.eq.s32.totalorder %s25, 0
      // Predicated region
      $region41: #{_lambda_.1} parent=39 // pred_check
        %p413 = pneg %p412
      $region42: #{_lambda_.1} parent=39 // pred_check_branch
        %415 = sbr.rel (%p413) target = $region44
      $region43: #{_lambda_.1} parent=39 // pred_region
        %s416 = smul.u32 %s24, 16
        %s417 = smul.addr %s416, 4
        %s418 = scalar_lea.vmem %s0, %s417
        %p420 = scmp.lt.u32.totalorder 64, 8
        %p421 = pneg %p420
        // Predicated region
        $region45: #{_lambda_.1} parent=43 // pred_check
          _
        $region46: #{_lambda_.1} parent=43 // pred_check_branch
          %423 = sbr.rel (%p420) target = $region48
        $region47: #{_lambda_.1} parent=43 // pred_region
          %s438 = sand.u32 64, 7
          %p439 = scmp.eq.s32.totalorder %s438, 0
          // Predicated region
          $region60: #{_lambda_.1} parent=47 // pred_check
            %p440 = pneg %p439
          $region61: #{_lambda_.1} parent=47 // pred_check_branch
            %442 = sbr.rel (%p440) target = $region63
          $region62: #{_lambda_.1} parent=47 // pred_region
            loop: start=0, step=1, limit=1
            $region64: #{_lambda_.1} parent=62 // loop_pre_header
              _
            $region65: #{_lambda_.1} parent=62 // loop_header
              %s444 = sphi 0, %s448
              %p445 = scmp.ge.s32.totalorder %s444, 1
              %s449 = sphi %s418, %s418
              %s450 = sphi [#allocation2], [#allocation2]
            $region66: #{_lambda_.1} parent=62 // loop_header_branch
              %447 = sbr.rel (%p445) target = $region70
            $region67: #{_lambda_.1} parent=62 // loop_body
              %v451 = vld [vmem:[%s449] sm:$0xff]
              %452 = vst [vmem:[%s450] sm:$0xff] %v451
              %v453 = vld [vmem:[%s449 + $0x8] sm:$0xff]
              %454 = vst [vmem:[%s450 + $0x8] sm:$0xff] %v453
              %v455 = vld [vmem:[%s449 + $0x10] sm:$0xff]
              %456 = vst [vmem:[%s450 + $0x10] sm:$0xff] %v455
              %v457 = vld [vmem:[%s449 + $0x18] sm:$0xff]
              %458 = vst [vmem:[%s450 + $0x18] sm:$0xff] %v457
              %v459 = vld [vmem:[%s449 + $0x20] sm:$0xff]
              %460 = vst [vmem:[%s450 + $0x20] sm:$0xff] %v459
              %v461 = vld [vmem:[%s449 + $0x28] sm:$0xff]
              %462 = vst [vmem:[%s450 + $0x28] sm:$0xff] %v461
              %v463 = vld [vmem:[%s449 + $0x30] sm:$0xff]
              %464 = vst [vmem:[%s450 + $0x30] sm:$0xff] %v463
              %v465 = vld [vmem:[%s449 + $0x38] sm:$0xff]
              %466 = vst [vmem:[%s450 + $0x38] sm:$0xff] %v465
            $region68: #{_lambda_.1} parent=62 // loop_footer
              %s448 = sadd.s32 1, %s444
            $region69: #{_lambda_.1} parent=62 // loop_footer_branch
              %443 = sbr.rel target = $region65
            $region70: #{_lambda_.1} parent=62 // loop_exit
              _
          $region63: #{_lambda_.1} parent=47 // pred_fallthru
            _
          %p467 = pneg %p439
          // Predicated region
          $region71: #{_lambda_.1} parent=47 // pred_check
            _
          $region72: #{_lambda_.1} parent=47 // pred_check_branch
            %469 = sbr.rel (%p439) target = $region74
          $region73: #{_lambda_.1} parent=47 // pred_region
            %s470 = sand.u32 64, 7
          $region74: #{_lambda_.1} parent=47 // pred_fallthru
            _
        $region48: #{_lambda_.1} parent=43 // pred_fallthru
          _
        // Predicated region
        $region49: #{_lambda_.1} parent=43 // pred_check
          %p424 = pneg %p420
        $region50: #{_lambda_.1} parent=43 // pred_check_branch
          %426 = sbr.rel (%p424) target = $region52
        $region51: #{_lambda_.1} parent=43 // pred_region
          %s427 = sshllo.u32 0, 64
          loop: start=0, step=1, limit=1
          $region53: #{_lambda_.1} parent=51 // loop_pre_header
            _
          $region54: #{_lambda_.1} parent=51 // loop_header
            %s429 = sphi 0, %s433
            %p430 = scmp.ge.s32.totalorder %s429, 1
            %s434 = sphi %s418, %s418
            %s435 = sphi [#allocation2], [#allocation2]
          $region55: #{_lambda_.1} parent=51 // loop_header_branch
            %432 = sbr.rel (%p430) target = $region59
          $region56: #{_lambda_.1} parent=51 // loop_body
            %v436 = vld [vmem:[%s434] sm:%s427]
            %437 = vst [vmem:[%s435] sm:%s427] %v436
          $region57: #{_lambda_.1} parent=51 // loop_footer
            %s433 = sadd.s32 1, %s429
          $region58: #{_lambda_.1} parent=51 // loop_footer_branch
            %428 = sbr.rel target = $region54
          $region59: #{_lambda_.1} parent=51 // loop_exit
            _
        $region52: #{_lambda_.1} parent=43 // pred_fallthru
          _
        // Predicated region
        $region75: #{_lambda_.1} parent=43 // pred_check
          _
        $region76: #{_lambda_.1} parent=43 // pred_check_branch
          %473 = sbr.rel (0) target = $region78
        $region77: #{_lambda_.1} parent=43 // pred_region
          %474 = vsyncadd [#allocation6], 1024
        $region78: #{_lambda_.1} parent=43 // pred_fallthru
          _
        %s475 = scalar_lea.sflag [#allocation6], 1
        %p477 = scmp.lt.u32.totalorder 4, 8
        %p478 = pneg %p477
        // Predicated region
        $region79: #{_lambda_.1} parent=43 // pred_check
          _
        $region80: #{_lambda_.1} parent=43 // pred_check_branch
          %480 = sbr.rel (%p477) target = $region82
        $region81: #{_lambda_.1} parent=43 // pred_region
          %s621 = sand.u32 4, 7
          %p622 = scmp.eq.s32.totalorder %s621, 0
          %p623 = pneg %p622
          // Predicated region
          $region94: #{_lambda_.1} parent=81 // pred_check
            _
          $region95: #{_lambda_.1} parent=81 // pred_check_branch
            %625 = sbr.rel (%p622) target = $region97
          $region96: #{_lambda_.1} parent=81 // pred_region
            %s626 = sand.u32 4, 7
            %s627 = ssub.s32 4, %s626
            %s628 = scalar_lea.vmem %s1, %s627
            %s629 = ssub.s32 4, %s626
            %s630 = scalar_lea.vmem [#allocation3], %s629
            loop: start=0, step=1, limit=1
            $region98: #{_lambda_.1} parent=96 // loop_pre_header
              _
            $region99: #{_lambda_.1} parent=96 // loop_header
              %s632 = sphi 0, %s636
              %p633 = scmp.ge.s32.totalorder %s632, 1
              %s637 = sphi %s1, %s1
              %s638 = sphi [#allocation3], [#allocation3]
            $region100: #{_lambda_.1} parent=96 // loop_header_branch
              %635 = sbr.rel (%p633) target = $region104
            $region101: #{_lambda_.1} parent=96 // loop_body
              _
            $region102: #{_lambda_.1} parent=96 // loop_footer
              %s636 = sadd.s32 1, %s632
            $region103: #{_lambda_.1} parent=96 // loop_footer_branch
              %631 = sbr.rel target = $region99
            $region104: #{_lambda_.1} parent=96 // loop_exit
              _
            %s639 = sshllo.u32 0, %s626
            loop: start=0, step=1, limit=1
            $region105: #{_lambda_.1} parent=96 // loop_pre_header
              _
            $region106: #{_lambda_.1} parent=96 // loop_header
              %s641 = sphi 0, %s645
              %p642 = scmp.ge.s32.totalorder %s641, 1
              %s646 = sphi %s628, %s628
              %s647 = sphi %s630, %s630
            $region107: #{_lambda_.1} parent=96 // loop_header_branch
              %644 = sbr.rel (%p642) target = $region111
            $region108: #{_lambda_.1} parent=96 // loop_body
              %v648 = vld [vmem:[%s646] sm:%s639]
              %649 = vst [vmem:[%s647] sm:%s639] %v648
              %v650 = vld [vmem:[%s646 + $0x10] sm:%s639]
              %651 = vst [vmem:[%s647 + $0x4] sm:%s639] %v650
              %v652 = vld [vmem:[%s646 + $0x4] sm:%s639]
              %653 = vst [vmem:[%s647 + $0x8] sm:%s639] %v652
              %v654 = vld [vmem:[%s646 + $0x14] sm:%s639]
              %655 = vst [vmem:[%s647 + $0xc] sm:%s639] %v654
              %v656 = vld [vmem:[%s646 + $0x8] sm:%s639]
              %657 = vst [vmem:[%s647 + $0x10] sm:%s639] %v656
              %v658 = vld [vmem:[%s646 + $0x18] sm:%s639]
              %659 = vst [vmem:[%s647 + $0x14] sm:%s639] %v658
              %v660 = vld [vmem:[%s646 + $0xc] sm:%s639]
              %661 = vst [vmem:[%s647 + $0x18] sm:%s639] %v660
              %v662 = vld [vmem:[%s646 + $0x1c] sm:%s639]
              %663 = vst [vmem:[%s647 + $0x1c] sm:%s639] %v662
              %v664 = vld [vmem:[%s646 + $0x20] sm:%s639]
              %665 = vst [vmem:[%s647 + $0x20] sm:%s639] %v664
              %v666 = vld [vmem:[%s646 + $0x30] sm:%s639]
              %667 = vst [vmem:[%s647 + $0x24] sm:%s639] %v666
              %v668 = vld [vmem:[%s646 + $0x24] sm:%s639]
              %669 = vst [vmem:[%s647 + $0x28] sm:%s639] %v668
              %v670 = vld [vmem:[%s646 + $0x34] sm:%s639]
              %671 = vst [vmem:[%s647 + $0x2c] sm:%s639] %v670
              %v672 = vld [vmem:[%s646 + $0x28] sm:%s639]
              %673 = vst [vmem:[%s647 + $0x30] sm:%s639] %v672
              %v674 = vld [vmem:[%s646 + $0x38] sm:%s639]
              %675 = vst [vmem:[%s647 + $0x34] sm:%s639] %v674
              %v676 = vld [vmem:[%s646 + $0x2c] sm:%s639]
              %677 = vst [vmem:[%s647 + $0x38] sm:%s639] %v676
              %v678 = vld [vmem:[%s646 + $0x3c] sm:%s639]
              %679 = vst [vmem:[%s647 + $0x3c] sm:%s639] %v678
              %v680 = vld [vmem:[%s646 + $0x40] sm:%s639]
              %681 = vst [vmem:[%s647 + $0x40] sm:%s639] %v680
              %v682 = vld [vmem:[%s646 + $0x50] sm:%s639]
              %683 = vst [vmem:[%s647 + $0x44] sm:%s639] %v682
              %v684 = vld [vmem:[%s646 + $0x44] sm:%s639]
              %685 = vst [vmem:[%s647 + $0x48] sm:%s639] %v684
              %v686 = vld [vmem:[%s646 + $0x54] sm:%s639]
              %687 = vst [vmem:[%s647 + $0x4c] sm:%s639] %v686
              %v688 = vld [vmem:[%s646 + $0x48] sm:%s639]
              %689 = vst [vmem:[%s647 + $0x50] sm:%s639] %v688
              %v690 = vld [vmem:[%s646 + $0x58] sm:%s639]
              %691 = vst [vmem:[%s647 + $0x54] sm:%s639] %v690
              %v692 = vld [vmem:[%s646 + $0x4c] sm:%s639]
              %693 = vst [vmem:[%s647 + $0x58] sm:%s639] %v692
              %v694 = vld [vmem:[%s646 + $0x5c] sm:%s639]
              %695 = vst [vmem:[%s647 + $0x5c] sm:%s639] %v694
              %v696 = vld [vmem:[%s646 + $0x60] sm:%s639]
              %697 = vst [vmem:[%s647 + $0x60] sm:%s639] %v696
              %v698 = vld [vmem:[%s646 + $0x70] sm:%s639]
              %699 = vst [vmem:[%s647 + $0x64] sm:%s639] %v698
              %v700 = vld [vmem:[%s646 + $0x64] sm:%s639]
              %701 = vst [vmem:[%s647 + $0x68] sm:%s639] %v700
              %v702 = vld [vmem:[%s646 + $0x74] sm:%s639]
              %703 = vst [vmem:[%s647 + $0x6c] sm:%s639] %v702
              %v704 = vld [vmem:[%s646 + $0x68] sm:%s639]
              %705 = vst [vmem:[%s647 + $0x70] sm:%s639] %v704
              %v706 = vld [vmem:[%s646 + $0x78] sm:%s639]
              %707 = vst [vmem:[%s647 + $0x74] sm:%s639] %v706
              %v708 = vld [vmem:[%s646 + $0x6c] sm:%s639]
              %709 = vst [vmem:[%s647 + $0x78] sm:%s639] %v708
              %v710 = vld [vmem:[%s646 + $0x7c] sm:%s639]
              %711 = vst [vmem:[%s647 + $0x7c] sm:%s639] %v710
              %v712 = vld [vmem:[%s646 + $0x80] sm:%s639]
              %713 = vst [vmem:[%s647 + $0x80] sm:%s639] %v712
              %v714 = vld [vmem:[%s646 + $0x90] sm:%s639]
              %715 = vst [vmem:[%s647 + $0x84] sm:%s639] %v714
              %v716 = vld [vmem:[%s646 + $0x84] sm:%s639]
              %717 = vst [vmem:[%s647 + $0x88] sm:%s639] %v716
              %v718 = vld [vmem:[%s646 + $0x94] sm:%s639]
              %719 = vst [vmem:[%s647 + $0x8c] sm:%s639] %v718
              %v720 = vld [vmem:[%s646 + $0x88] sm:%s639]
              %721 = vst [vmem:[%s647 + $0x90] sm:%s639] %v720
              %v722 = vld [vmem:[%s646 + $0x98] sm:%s639]
              %723 = vst [vmem:[%s647 + $0x94] sm:%s639] %v722
              %v724 = vld [vmem:[%s646 + $0x8c] sm:%s639]
              %725 = vst [vmem:[%s647 + $0x98] sm:%s639] %v724
              %v726 = vld [vmem:[%s646 + $0x9c] sm:%s639]
              %727 = vst [vmem:[%s647 + $0x9c] sm:%s639] %v726
              %v728 = vld [vmem:[%s646 + $0xa0] sm:%s639]
              %729 = vst [vmem:[%s647 + $0xa0] sm:%s639] %v728
              %v730 = vld [vmem:[%s646 + $0xb0] sm:%s639]
              %731 = vst [vmem:[%s647 + $0xa4] sm:%s639] %v730
              %v732 = vld [vmem:[%s646 + $0xa4] sm:%s639]
              %733 = vst [vmem:[%s647 + $0xa8] sm:%s639] %v732
              %v734 = vld [vmem:[%s646 + $0xb4] sm:%s639]
              %735 = vst [vmem:[%s647 + $0xac] sm:%s639] %v734
              %v736 = vld [vmem:[%s646 + $0xa8] sm:%s639]
              %737 = vst [vmem:[%s647 + $0xb0] sm:%s639] %v736
              %v738 = vld [vmem:[%s646 + $0xb8] sm:%s639]
              %739 = vst [vmem:[%s647 + $0xb4] sm:%s639] %v738
              %v740 = vld [vmem:[%s646 + $0xac] sm:%s639]
              %741 = vst [vmem:[%s647 + $0xb8] sm:%s639] %v740
              %v742 = vld [vmem:[%s646 + $0xbc] sm:%s639]
              %743 = vst [vmem:[%s647 + $0xbc] sm:%s639] %v742
              %v744 = vld [vmem:[%s646 + $0xc0] sm:%s639]
              %745 = vst [vmem:[%s647 + $0xc0] sm:%s639] %v744
              %v746 = vld [vmem:[%s646 + $0xd0] sm:%s639]
              %747 = vst [vmem:[%s647 + $0xc4] sm:%s639] %v746
              %v748 = vld [vmem:[%s646 + $0xc4] sm:%s639]
              %749 = vst [vmem:[%s647 + $0xc8] sm:%s639] %v748
              %v750 = vld [vmem:[%s646 + $0xd4] sm:%s639]
              %751 = vst [vmem:[%s647 + $0xcc] sm:%s639] %v750
              %v752 = vld [vmem:[%s646 + $0xc8] sm:%s639]
              %753 = vst [vmem:[%s647 + $0xd0] sm:%s639] %v752
              %v754 = vld [vmem:[%s646 + $0xd8] sm:%s639]
              %755 = vst [vmem:[%s647 + $0xd4] sm:%s639] %v754
              %v756 = vld [vmem:[%s646 + $0xcc] sm:%s639]
              %757 = vst [vmem:[%s647 + $0xd8] sm:%s639] %v756
              %v758 = vld [vmem:[%s646 + $0xdc] sm:%s639]
              %759 = vst [vmem:[%s647 + $0xdc] sm:%s639] %v758
              %v760 = vld [vmem:[%s646 + $0xe0] sm:%s639]
              %761 = vst [vmem:[%s647 + $0xe0] sm:%s639] %v760
              %v762 = vld [vmem:[%s646 + $0xf0] sm:%s639]
              %763 = vst [vmem:[%s647 + $0xe4] sm:%s639] %v762
              %v764 = vld [vmem:[%s646 + $0xe4] sm:%s639]
              %765 = vst [vmem:[%s647 + $0xe8] sm:%s639] %v764
              %v766 = vld [vmem:[%s646 + $0xf4] sm:%s639]
              %767 = vst [vmem:[%s647 + $0xec] sm:%s639] %v766
              %v768 = vld [vmem:[%s646 + $0xe8] sm:%s639]
              %769 = vst [vmem:[%s647 + $0xf0] sm:%s639] %v768
              %v770 = vld [vmem:[%s646 + $0xf8] sm:%s639]
              %771 = vst [vmem:[%s647 + $0xf4] sm:%s639] %v770
              %v772 = vld [vmem:[%s646 + $0xec] sm:%s639]
              %773 = vst [vmem:[%s647 + $0xf8] sm:%s639] %v772
              %v774 = vld [vmem:[%s646 + $0xfc] sm:%s639]
              %775 = vst [vmem:[%s647 + $0xfc] sm:%s639] %v774
            $region109: #{_lambda_.1} parent=96 // loop_footer
              %s645 = sadd.s32 1, %s641
            $region110: #{_lambda_.1} parent=96 // loop_footer_branch
              %640 = sbr.rel target = $region106
            $region111: #{_lambda_.1} parent=96 // loop_exit
              _
          $region97: #{_lambda_.1} parent=81 // pred_fallthru
            _
        $region82: #{_lambda_.1} parent=43 // pred_fallthru
          _
        // Predicated region
        $region83: #{_lambda_.1} parent=43 // pred_check
          %p481 = pneg %p477
        $region84: #{_lambda_.1} parent=43 // pred_check_branch
          %483 = sbr.rel (%p481) target = $region86
        $region85: #{_lambda_.1} parent=43 // pred_region
          %s484 = sshllo.u32 0, 4
          loop: start=0, step=1, limit=1
          $region87: #{_lambda_.1} parent=85 // loop_pre_header
            _
          $region88: #{_lambda_.1} parent=85 // loop_header
            %s486 = sphi 0, %s490
            %p487 = scmp.ge.s32.totalorder %s486, 1
            %s491 = sphi %s1, %s1
            %s492 = sphi [#allocation3], [#allocation3]
          $region89: #{_lambda_.1} parent=85 // loop_header_branch
            %489 = sbr.rel (%p487) target = $region93
          $region90: #{_lambda_.1} parent=85 // loop_body
            %v493 = vld [vmem:[%s491] sm:%s484]
            %494 = vst [vmem:[%s492] sm:%s484] %v493
            %v495 = vld [vmem:[%s491 + $0x10] sm:%s484]
            %496 = vst [vmem:[%s492 + $0x4] sm:%s484] %v495
            %v497 = vld [vmem:[%s491 + $0x4] sm:%s484]
            %498 = vst [vmem:[%s492 + $0x8] sm:%s484] %v497
            %v499 = vld [vmem:[%s491 + $0x14] sm:%s484]
            %500 = vst [vmem:[%s492 + $0xc] sm:%s484] %v499
            %v501 = vld [vmem:[%s491 + $0x8] sm:%s484]
            %502 = vst [vmem:[%s492 + $0x10] sm:%s484] %v501
            %v503 = vld [vmem:[%s491 + $0x18] sm:%s484]
            %504 = vst [vmem:[%s492 + $0x14] sm:%s484] %v503
            %v505 = vld [vmem:[%s491 + $0xc] sm:%s484]
            %506 = vst [vmem:[%s492 + $0x18] sm:%s484] %v505
            %v507 = vld [vmem:[%s491 + $0x1c] sm:%s484]
            %508 = vst [vmem:[%s492 + $0x1c] sm:%s484] %v507
            %v509 = vld [vmem:[%s491 + $0x20] sm:%s484]
            %510 = vst [vmem:[%s492 + $0x20] sm:%s484] %v509
            %v511 = vld [vmem:[%s491 + $0x30] sm:%s484]
            %512 = vst [vmem:[%s492 + $0x24] sm:%s484] %v511
            %v513 = vld [vmem:[%s491 + $0x24] sm:%s484]
            %514 = vst [vmem:[%s492 + $0x28] sm:%s484] %v513
            %v515 = vld [vmem:[%s491 + $0x34] sm:%s484]
            %516 = vst [vmem:[%s492 + $0x2c] sm:%s484] %v515
            %v517 = vld [vmem:[%s491 + $0x28] sm:%s484]
            %518 = vst [vmem:[%s492 + $0x30] sm:%s484] %v517
            %v519 = vld [vmem:[%s491 + $0x38] sm:%s484]
            %520 = vst [vmem:[%s492 + $0x34] sm:%s484] %v519
            %v521 = vld [vmem:[%s491 + $0x2c] sm:%s484]
            %522 = vst [vmem:[%s492 + $0x38] sm:%s484] %v521
            %v523 = vld [vmem:[%s491 + $0x3c] sm:%s484]
            %524 = vst [vmem:[%s492 + $0x3c] sm:%s484] %v523
            %v525 = vld [vmem:[%s491 + $0x40] sm:%s484]
            %526 = vst [vmem:[%s492 + $0x40] sm:%s484] %v525
            %v527 = vld [vmem:[%s491 + $0x50] sm:%s484]
            %528 = vst [vmem:[%s492 + $0x44] sm:%s484] %v527
            %v529 = vld [vmem:[%s491 + $0x44] sm:%s484]
            %530 = vst [vmem:[%s492 + $0x48] sm:%s484] %v529
            %v531 = vld [vmem:[%s491 + $0x54] sm:%s484]
            %532 = vst [vmem:[%s492 + $0x4c] sm:%s484] %v531
            %v533 = vld [vmem:[%s491 + $0x48] sm:%s484]
            %534 = vst [vmem:[%s492 + $0x50] sm:%s484] %v533
            %v535 = vld [vmem:[%s491 + $0x58] sm:%s484]
            %536 = vst [vmem:[%s492 + $0x54] sm:%s484] %v535
            %v537 = vld [vmem:[%s491 + $0x4c] sm:%s484]
            %538 = vst [vmem:[%s492 + $0x58] sm:%s484] %v537
            %v539 = vld [vmem:[%s491 + $0x5c] sm:%s484]
            %540 = vst [vmem:[%s492 + $0x5c] sm:%s484] %v539
            %v541 = vld [vmem:[%s491 + $0x60] sm:%s484]
            %542 = vst [vmem:[%s492 + $0x60] sm:%s484] %v541
            %v543 = vld [vmem:[%s491 + $0x70] sm:%s484]
            %544 = vst [vmem:[%s492 + $0x64] sm:%s484] %v543
            %v545 = vld [vmem:[%s491 + $0x64] sm:%s484]
            %546 = vst [vmem:[%s492 + $0x68] sm:%s484] %v545
            %v547 = vld [vmem:[%s491 + $0x74] sm:%s484]
            %548 = vst [vmem:[%s492 + $0x6c] sm:%s484] %v547
            %v549 = vld [vmem:[%s491 + $0x68] sm:%s484]
            %550 = vst [vmem:[%s492 + $0x70] sm:%s484] %v549
            %v551 = vld [vmem:[%s491 + $0x78] sm:%s484]
            %552 = vst [vmem:[%s492 + $0x74] sm:%s484] %v551
            %v553 = vld [vmem:[%s491 + $0x6c] sm:%s484]
            %554 = vst [vmem:[%s492 + $0x78] sm:%s484] %v553
            %v555 = vld [vmem:[%s491 + $0x7c] sm:%s484]
            %556 = vst [vmem:[%s492 + $0x7c] sm:%s484] %v555
            %v557 = vld [vmem:[%s491 + $0x80] sm:%s484]
            %558 = vst [vmem:[%s492 + $0x80] sm:%s484] %v557
            %v559 = vld [vmem:[%s491 + $0x90] sm:%s484]
            %560 = vst [vmem:[%s492 + $0x84] sm:%s484] %v559
            %v561 = vld [vmem:[%s491 + $0x84] sm:%s484]
            %562 = vst [vmem:[%s492 + $0x88] sm:%s484] %v561
            %v563 = vld [vmem:[%s491 + $0x94] sm:%s484]
            %564 = vst [vmem:[%s492 + $0x8c] sm:%s484] %v563
            %v565 = vld [vmem:[%s491 + $0x88] sm:%s484]
            %566 = vst [vmem:[%s492 + $0x90] sm:%s484] %v565
            %v567 = vld [vmem:[%s491 + $0x98] sm:%s484]
            %568 = vst [vmem:[%s492 + $0x94] sm:%s484] %v567
            %v569 = vld [vmem:[%s491 + $0x8c] sm:%s484]
            %570 = vst [vmem:[%s492 + $0x98] sm:%s484] %v569
            %v571 = vld [vmem:[%s491 + $0x9c] sm:%s484]
            %572 = vst [vmem:[%s492 + $0x9c] sm:%s484] %v571
            %v573 = vld [vmem:[%s491 + $0xa0] sm:%s484]
            %574 = vst [vmem:[%s492 + $0xa0] sm:%s484] %v573
            %v575 = vld [vmem:[%s491 + $0xb0] sm:%s484]
            %576 = vst [vmem:[%s492 + $0xa4] sm:%s484] %v575
            %v577 = vld [vmem:[%s491 + $0xa4] sm:%s484]
            %578 = vst [vmem:[%s492 + $0xa8] sm:%s484] %v577
            %v579 = vld [vmem:[%s491 + $0xb4] sm:%s484]
            %580 = vst [vmem:[%s492 + $0xac] sm:%s484] %v579
            %v581 = vld [vmem:[%s491 + $0xa8] sm:%s484]
            %582 = vst [vmem:[%s492 + $0xb0] sm:%s484] %v581
            %v583 = vld [vmem:[%s491 + $0xb8] sm:%s484]
            %584 = vst [vmem:[%s492 + $0xb4] sm:%s484] %v583
            %v585 = vld [vmem:[%s491 + $0xac] sm:%s484]
            %586 = vst [vmem:[%s492 + $0xb8] sm:%s484] %v585
            %v587 = vld [vmem:[%s491 + $0xbc] sm:%s484]
            %588 = vst [vmem:[%s492 + $0xbc] sm:%s484] %v587
            %v589 = vld [vmem:[%s491 + $0xc0] sm:%s484]
            %590 = vst [vmem:[%s492 + $0xc0] sm:%s484] %v589
            %v591 = vld [vmem:[%s491 + $0xd0] sm:%s484]
            %592 = vst [vmem:[%s492 + $0xc4] sm:%s484] %v591
            %v593 = vld [vmem:[%s491 + $0xc4] sm:%s484]
            %594 = vst [vmem:[%s492 + $0xc8] sm:%s484] %v593
            %v595 = vld [vmem:[%s491 + $0xd4] sm:%s484]
            %596 = vst [vmem:[%s492 + $0xcc] sm:%s484] %v595
            %v597 = vld [vmem:[%s491 + $0xc8] sm:%s484]
            %598 = vst [vmem:[%s492 + $0xd0] sm:%s484] %v597
            %v599 = vld [vmem:[%s491 + $0xd8] sm:%s484]
            %600 = vst [vmem:[%s492 + $0xd4] sm:%s484] %v599
            %v601 = vld [vmem:[%s491 + $0xcc] sm:%s484]
            %602 = vst [vmem:[%s492 + $0xd8] sm:%s484] %v601
            %v603 = vld [vmem:[%s491 + $0xdc] sm:%s484]
            %604 = vst [vmem:[%s492 + $0xdc] sm:%s484] %v603
            %v605 = vld [vmem:[%s491 + $0xe0] sm:%s484]
            %606 = vst [vmem:[%s492 + $0xe0] sm:%s484] %v605
            %v607 = vld [vmem:[%s491 + $0xf0] sm:%s484]
            %608 = vst [vmem:[%s492 + $0xe4] sm:%s484] %v607
            %v609 = vld [vmem:[%s491 + $0xe4] sm:%s484]
            %610 = vst [vmem:[%s492 + $0xe8] sm:%s484] %v609
            %v611 = vld [vmem:[%s491 + $0xf4] sm:%s484]
            %612 = vst [vmem:[%s492 + $0xec] sm:%s484] %v611
            %v613 = vld [vmem:[%s491 + $0xe8] sm:%s484]
            %614 = vst [vmem:[%s492 + $0xf0] sm:%s484] %v613
            %v615 = vld [vmem:[%s491 + $0xf8] sm:%s484]
            %616 = vst [vmem:[%s492 + $0xf4] sm:%s484] %v615
            %v617 = vld [vmem:[%s491 + $0xec] sm:%s484]
            %618 = vst [vmem:[%s492 + $0xf8] sm:%s484] %v617
            %v619 = vld [vmem:[%s491 + $0xfc] sm:%s484]
            %620 = vst [vmem:[%s492 + $0xfc] sm:%s484] %v619
          $region91: #{_lambda_.1} parent=85 // loop_footer
            %s490 = sadd.s32 1, %s486
          $region92: #{_lambda_.1} parent=85 // loop_footer_branch
            %485 = sbr.rel target = $region88
          $region93: #{_lambda_.1} parent=85 // loop_exit
            _
        $region86: #{_lambda_.1} parent=43 // pred_fallthru
          _
        // Predicated region
        $region112: #{_lambda_.1} parent=43 // pred_check
          _
        $region113: #{_lambda_.1} parent=43 // pred_check_branch
          %778 = sbr.rel (0) target = $region115
        $region114: #{_lambda_.1} parent=43 // pred_region
          %779 = vsyncadd %s475, 4096
        $region115: #{_lambda_.1} parent=43 // pred_fallthru
          _
        %s780 = smul.u32 4, 8
        %s781 = smul.u32 %s780, 2
        %s782 = smul.u32 %s781, 1
        %s783 = sshll.u32 %s782, 4
        %784 = dma.done [#allocation6], %s783
        %s785 = smul.u32 4, 16
        %s786 = smul.u32 %s785, 4
        %s787 = sshll.u32 %s786, 4
        %788 = dma.done %s475, %s787
        %v789 = vld [vmem:[#allocation2] sm:$0xff]
        %v790 = vld [vmem:[#allocation2 + $0x8] sm:$0xff]
        %v791 = vld [vmem:[#allocation2 + $0x10] sm:$0xff]
        %v792 = vld [vmem:[#allocation2 + $0x18] sm:$0xff]
        %v793 = vld [vmem:[#allocation2 + $0x20] sm:$0xff]
        %v794 = vld [vmem:[#allocation2 + $0x28] sm:$0xff]
        %v795 = vld [vmem:[#allocation2 + $0x30] sm:$0xff]
        %v796 = vld [vmem:[#allocation2 + $0x38] sm:$0xff]
        %v797 = vld [vmem:[#allocation3] sm:$0xff]
        %v798 = vld [vmem:[#allocation3 + $0x8] sm:$0xff]
        %v799 = vld [vmem:[#allocation3 + $0x10] sm:$0xff]
        %v800 = vld [vmem:[#allocation3 + $0x18] sm:$0xff]
        %v801 = vld [vmem:[#allocation3 + $0x20] sm:$0xff]
        %v802 = vld [vmem:[#allocation3 + $0x28] sm:$0xff]
        %v803 = vld [vmem:[#allocation3 + $0x30] sm:$0xff]
        %v804 = vld [vmem:[#allocation3 + $0x38] sm:$0xff]
        %v805 = vld [vmem:[#allocation3 + $0x40] sm:$0xff]
        %v806 = vld [vmem:[#allocation3 + $0x48] sm:$0xff]
        %v807 = vld [vmem:[#allocation3 + $0x50] sm:$0xff]
        %v808 = vld [vmem:[#allocation3 + $0x58] sm:$0xff]
        %v809 = vld [vmem:[#allocation3 + $0x60] sm:$0xff]
        %v810 = vld [vmem:[#allocation3 + $0x68] sm:$0xff]
        %v811 = vld [vmem:[#allocation3 + $0x70] sm:$0xff]
        %v812 = vld [vmem:[#allocation3 + $0x78] sm:$0xff]
        %v813 = vld [vmem:[#allocation3 + $0x80] sm:$0xff]
        %v814 = vld [vmem:[#allocation3 + $0x88] sm:$0xff]
        %v815 = vld [vmem:[#allocation3 + $0x90] sm:$0xff]
        %v816 = vld [vmem:[#allocation3 + $0x98] sm:$0xff]
        %v817 = vld [vmem:[#allocation3 + $0xa0] sm:$0xff]
        %v818 = vld [vmem:[#allocation3 + $0xa8] sm:$0xff]
        %v819 = vld [vmem:[#allocation3 + $0xb0] sm:$0xff]
        %v820 = vld [vmem:[#allocation3 + $0xb8] sm:$0xff]
        %v821 = vld [vmem:[#allocation3 + $0xc0] sm:$0xff]
        %v822 = vld [vmem:[#allocation3 + $0xc8] sm:$0xff]
        %v823 = vld [vmem:[#allocation3 + $0xd0] sm:$0xff]
        %v824 = vld [vmem:[#allocation3 + $0xd8] sm:$0xff]
        %v825 = vld [vmem:[#allocation3 + $0xe0] sm:$0xff]
        %v826 = vld [vmem:[#allocation3 + $0xe8] sm:$0xff]
        %v827 = vld [vmem:[#allocation3 + $0xf0] sm:$0xff]
        %v828 = vld [vmem:[#allocation3 + $0xf8] sm:$0xff]
        %v830 = vlaneseq
        %v831 = vshrl.u32 %v830, 7
        %v832 = vsub.s32 0, %v831
        %v833 = vrot.slane %v411, %v832
        %v834 = vlaneseq
        %v835 = vshrl.u32 %v834, 7
        %v836 = vsub.s32 1, %v835
        %v837 = vrot.slane %v411, %v836
        %v838 = vlaneseq
        %v839 = vshrl.u32 %v838, 7
        %v840 = vsub.s32 2, %v839
        %v841 = vrot.slane %v411, %v840
        %v842 = vlaneseq
        %v843 = vshrl.u32 %v842, 7
        %v844 = vsub.s32 3, %v843
        %v845 = vrot.slane %v411, %v844
        %850 = vmatprep.subr.bf16.mxu0 %v798
        %851 = vmatpush1.bf16.msra.mxu0 %v797
        %852 = vmatprep.subr.bf16.mxu0 %v802
        %853 = vmatpush1.bf16.msra.mxu0 %v801
        %854 = vmatprep.subr.bf16.mxu0 %v806
        %855 = vmatpush1.bf16.msra.mxu0 %v805
        %856 = vmatprep.subr.bf16.mxu0 %v810
        %857 = vmatpush1.bf16.msra.mxu0 %v809
        %858 = vmatprep.subr.bf16.mxu0 %v814
        %859 = vmatpush1.bf16.msra.mxu0 %v813
        %860 = vmatprep.subr.bf16.mxu0 %v818
        %861 = vmatpush1.bf16.msra.mxu0 %v817
        %862 = vmatprep.subr.bf16.mxu0 %v822
        %863 = vmatpush1.bf16.msra.mxu0 %v821
        %864 = vmatprep.subr.bf16.mxu0 %v826
        %865 = vmatpush1.bf16.msra.mxu0 %v825
        %866 = vmatprep.subr.bf16.mxu0 0
        %867 = vmatpush1.bf16.msra.mxu0 0
        %868 = vmatprep.subr.bf16.mxu0 0
        %869 = vmatpush1.bf16.msra.mxu0 0
        %870 = vmatprep.subr.bf16.mxu0 0
        %871 = vmatpush1.bf16.msra.mxu0 0
        %872 = vmatprep.subr.bf16.mxu0 0
        %873 = vmatpush1.bf16.msra.mxu0 0
        %874 = vmatprep.subr.bf16.mxu0 0
        %875 = vmatpush1.bf16.msra.mxu0 0
        %876 = vmatprep.subr.bf16.mxu0 0
        %877 = vmatpush1.bf16.msra.mxu0 0
        %878 = vmatprep.subr.bf16.mxu0 0
        %879 = vmatpush1.bf16.msra.mxu0 0
        %880 = vmatprep.subr.bf16.mxu0 0
        %881 = vmatpush1.bf16.msra.mxu0 0
        %882 = vmatprep.mubr.bf16.mxu0 0
        %883 = vmatmul.mubr.bf16.gmra.mrb[0].mxu0 %v789
        %v884 = vpop.f32.mrb[0].mxu0
        %v885 = vadd.f32 %v833, %v884
        %v886 = vpop.f32.mrb[0].mxu0
        %v887 = vadd.f32 %v837, %v886
        %v888 = vpop.f32.mrb[0].mxu0
        %v889 = vadd.f32 %v833, %v888
        %v890 = vpop.f32.mrb[0].mxu0
        %v891 = vadd.f32 %v837, %v890
        %892 = vmatprep.mubr.bf16.mxu0 0
        %893 = vmatmul.mubr.bf16.gmra.mrb[0].mxu0 %v790
        %v894 = vpop.f32.mrb[0].mxu0
        %v895 = vadd.f32 %v833, %v894
        %v896 = vpop.f32.mrb[0].mxu0
        %v897 = vadd.f32 %v837, %v896
        %v898 = vpop.f32.mrb[0].mxu0
        %v899 = vadd.f32 %v833, %v898
        %v900 = vpop.f32.mrb[0].mxu0
        %v901 = vadd.f32 %v837, %v900
        %902 = vmatprep.mubr.bf16.mxu0 0
        %903 = vmatmul.mubr.bf16.gmra.mrb[0].mxu0 %v791
        %v904 = vpop.f32.mrb[0].mxu0
        %v905 = vadd.f32 %v833, %v904
        %v906 = vpop.f32.mrb[0].mxu0
        %v907 = vadd.f32 %v837, %v906
        %v908 = vpop.f32.mrb[0].mxu0
        %v909 = vadd.f32 %v833, %v908
        %v910 = vpop.f32.mrb[0].mxu0
        %v911 = vadd.f32 %v837, %v910
        %912 = vmatprep.mubr.bf16.mxu0 0
        %913 = vmatmul.mubr.bf16.gmra.mrb[0].mxu0 %v792
        %v914 = vpop.f32.mrb[0].mxu0
        %v915 = vadd.f32 %v833, %v914
        %v916 = vpop.f32.mrb[0].mxu0
        %v917 = vadd.f32 %v837, %v916
        %v918 = vpop.f32.mrb[0].mxu0
        %v919 = vadd.f32 %v833, %v918
        %v920 = vpop.f32.mrb[0].mxu0
        %v921 = vadd.f32 %v837, %v920
        %922 = vmatprep.mubr.bf16.mxu0 0
        %923 = vmatmul.mubr.bf16.gmra.mrb[0].mxu0 %v793
        %v924 = vpop.f32.mrb[0].mxu0
        %v925 = vadd.f32 %v833, %v924
        %v926 = vpop.f32.mrb[0].mxu0
        %v927 = vadd.f32 %v837, %v926
        %v928 = vpop.f32.mrb[0].mxu0
        %v929 = vadd.f32 %v833, %v928
        %v930 = vpop.f32.mrb[0].mxu0
        %v931 = vadd.f32 %v837, %v930
        %932 = vmatprep.mubr.bf16.mxu0 0
        %933 = vmatmul.mubr.bf16.gmra.mrb[0].mxu0 %v794
        %v934 = vpop.f32.mrb[0].mxu0
        %v935 = vadd.f32 %v833, %v934
        %v936 = vpop.f32.mrb[0].mxu0
        %v937 = vadd.f32 %v837, %v936
        %v938 = vpop.f32.mrb[0].mxu0
        %v939 = vadd.f32 %v833, %v938
        %v940 = vpop.f32.mrb[0].mxu0
        %v941 = vadd.f32 %v837, %v940
        %942 = vmatprep.mubr.bf16.mxu0 0
        %943 = vmatmul.mubr.bf16.gmra.mrb[0].mxu0 %v795
        %v944 = vpop.f32.mrb[0].mxu0
        %v945 = vadd.f32 %v833, %v944
        %v946 = vpop.f32.mrb[0].mxu0
        %v947 = vadd.f32 %v837, %v946
        %v948 = vpop.f32.mrb[0].mxu0
        %v949 = vadd.f32 %v833, %v948
        %v950 = vpop.f32.mrb[0].mxu0
        %v951 = vadd.f32 %v837, %v950
        %952 = vmatprep.mubr.bf16.mxu0 0
        %953 = vmatmul.mubr.bf16.gmra.mrb[0].mxu0 %v796
        %v954 = vpop.f32.mrb[0].mxu0
        %v955 = vadd.f32 %v833, %v954
        %v956 = vpop.f32.mrb[0].mxu0
        %v957 = vadd.f32 %v837, %v956
        %v958 = vpop.f32.mrb[0].mxu0
        %v959 = vadd.f32 %v833, %v958
        %v960 = vpop.f32.mrb[0].mxu0
        %v961 = vadd.f32 %v837, %v960
        %962 = vdwg.mxu0
        %963 = vmatprep.subr.bf16.mxu0 %v800
        %964 = vmatpush1.bf16.msra.mxu0 %v799
        %965 = vmatprep.subr.bf16.mxu0 %v804
        %966 = vmatpush1.bf16.msra.mxu0 %v803
        %967 = vmatprep.subr.bf16.mxu0 %v808
        %968 = vmatpush1.bf16.msra.mxu0 %v807
        %969 = vmatprep.subr.bf16.mxu0 %v812
        %970 = vmatpush1.bf16.msra.mxu0 %v811
        %971 = vmatprep.subr.bf16.mxu0 %v816
        %972 = vmatpush1.bf16.msra.mxu0 %v815
        %973 = vmatprep.subr.bf16.mxu0 %v820
        %974 = vmatpush1.bf16.msra.mxu0 %v819
        %975 = vmatprep.subr.bf16.mxu0 %v824
        %976 = vmatpush1.bf16.msra.mxu0 %v823
        %977 = vmatprep.subr.bf16.mxu0 %v828
        %978 = vmatpush1.bf16.msra.mxu0 %v827
        %979 = vmatprep.subr.bf16.mxu0 0
        %980 = vmatpush1.bf16.msra.mxu0 0
        %981 = vmatprep.subr.bf16.mxu0 0
        %982 = vmatpush1.bf16.msra.mxu0 0
        %983 = vmatprep.subr.bf16.mxu0 0
        %984 = vmatpush1.bf16.msra.mxu0 0
        %985 = vmatprep.subr.bf16.mxu0 0
        %986 = vmatpush1.bf16.msra.mxu0 0
        %987 = vmatprep.subr.bf16.mxu0 0
        %988 = vmatpush1.bf16.msra.mxu0 0
        %989 = vmatprep.subr.bf16.mxu0 0
        %990 = vmatpush1.bf16.msra.mxu0 0
        %991 = vmatprep.subr.bf16.mxu0 0
        %992 = vmatpush1.bf16.msra.mxu0 0
        %993 = vmatprep.subr.bf16.mxu0 0
        %994 = vmatpush1.bf16.msra.mxu0 0
        %995 = vmatprep.mubr.bf16.mxu0 0
        %996 = vmatmul.mubr.bf16.gmra.mrb[0].mxu0 %v789
        %v997 = vpop.f32.mrb[0].mxu0
        %v998 = vadd.f32 %v841, %v997
        %v999 = vpop.f32.mrb[0].mxu0
        %v1000 = vadd.f32 %v845, %v999
        %v1001 = vpop.f32.mrb[0].mxu0
        %v1002 = vadd.f32 %v841, %v1001
        %v1003 = vpop.f32.mrb[0].mxu0
        %v1004 = vadd.f32 %v845, %v1003
        %1005 = vmatprep.mubr.bf16.mxu0 0
        %1006 = vmatmul.mubr.bf16.gmra.mrb[0].mxu0 %v790
        %v1007 = vpop.f32.mrb[0].mxu0
        %v1008 = vadd.f32 %v841, %v1007
        %v1009 = vpop.f32.mrb[0].mxu0
        %v1010 = vadd.f32 %v845, %v1009
        %v1011 = vpop.f32.mrb[0].mxu0
        %v1012 = vadd.f32 %v841, %v1011
        %v1013 = vpop.f32.mrb[0].mxu0
        %v1014 = vadd.f32 %v845, %v1013
        %1015 = vmatprep.mubr.bf16.mxu0 0
        %1016 = vmatmul.mubr.bf16.gmra.mrb[0].mxu0 %v791
        %v1017 = vpop.f32.mrb[0].mxu0
        %v1018 = vadd.f32 %v841, %v1017
        %v1019 = vpop.f32.mrb[0].mxu0
        %v1020 = vadd.f32 %v845, %v1019
        %v1021 = vpop.f32.mrb[0].mxu0
        %v1022 = vadd.f32 %v841, %v1021
        %v1023 = vpop.f32.mrb[0].mxu0
        %v1024 = vadd.f32 %v845, %v1023
        %1025 = vmatprep.mubr.bf16.mxu0 0
        %1026 = vmatmul.mubr.bf16.gmra.mrb[0].mxu0 %v792
        %v1027 = vpop.f32.mrb[0].mxu0
        %v1028 = vadd.f32 %v841, %v1027
        %v1029 = vpop.f32.mrb[0].mxu0
        %v1030 = vadd.f32 %v845, %v1029
        %v1031 = vpop.f32.mrb[0].mxu0
        %v1032 = vadd.f32 %v841, %v1031
        %v1033 = vpop.f32.mrb[0].mxu0
        %v1034 = vadd.f32 %v845, %v1033
        %1035 = vmatprep.mubr.bf16.mxu0 0
        %1036 = vmatmul.mubr.bf16.gmra.mrb[0].mxu0 %v793
        %v1037 = vpop.f32.mrb[0].mxu0
        %v1038 = vadd.f32 %v841, %v1037
        %v1039 = vpop.f32.mrb[0].mxu0
        %v1040 = vadd.f32 %v845, %v1039
        %v1041 = vpop.f32.mrb[0].mxu0
        %v1042 = vadd.f32 %v841, %v1041
        %v1043 = vpop.f32.mrb[0].mxu0
        %v1044 = vadd.f32 %v845, %v1043
        %1045 = vmatprep.mubr.bf16.mxu0 0
        %1046 = vmatmul.mubr.bf16.gmra.mrb[0].mxu0 %v794
        %v1047 = vpop.f32.mrb[0].mxu0
        %v1048 = vadd.f32 %v841, %v1047
        %v1049 = vpop.f32.mrb[0].mxu0
        %v1050 = vadd.f32 %v845, %v1049
        %v1051 = vpop.f32.mrb[0].mxu0
        %v1052 = vadd.f32 %v841, %v1051
        %v1053 = vpop.f32.mrb[0].mxu0
        %v1054 = vadd.f32 %v845, %v1053
        %1055 = vmatprep.mubr.bf16.mxu0 0
        %1056 = vmatmul.mubr.bf16.gmra.mrb[0].mxu0 %v795
        %v1057 = vpop.f32.mrb[0].mxu0
        %v1058 = vadd.f32 %v841, %v1057
        %v1059 = vpop.f32.mrb[0].mxu0
        %v1060 = vadd.f32 %v845, %v1059
        %v1061 = vpop.f32.mrb[0].mxu0
        %v1062 = vadd.f32 %v841, %v1061
        %v1063 = vpop.f32.mrb[0].mxu0
        %v1064 = vadd.f32 %v845, %v1063
        %1065 = vmatprep.mubr.bf16.mxu0 0
        %1066 = vmatmul.mubr.bf16.gmra.mrb[0].mxu0 %v796
        %v1067 = vpop.f32.mrb[0].mxu0
        %v1068 = vadd.f32 %v841, %v1067
        %v1069 = vpop.f32.mrb[0].mxu0
        %v1070 = vadd.f32 %v845, %v1069
        %v1071 = vpop.f32.mrb[0].mxu0
        %v1072 = vadd.f32 %v841, %v1071
        %v1073 = vpop.f32.mrb[0].mxu0
        %v1074 = vadd.f32 %v845, %v1073
        %1075 = vdwg.mxu0
        %1076 = vst [vmem:[#allocation5] sm:$0xff] %v885
        %1077 = vst [vmem:[#allocation5 + $0x8] sm:$0xff] %v887
        %1078 = vst [vmem:[#allocation5 + $0x10] sm:$0xff] %v998
        %1079 = vst [vmem:[#allocation5 + $0x18] sm:$0xff] %v1000
        %1080 = vst [vmem:[#allocation5 + $0x20] sm:$0xff] %v889
        %1081 = vst [vmem:[#allocation5 + $0x28] sm:$0xff] %v891
        %1082 = vst [vmem:[#allocation5 + $0x30] sm:$0xff] %v1002
        %1083 = vst [vmem:[#allocation5 + $0x38] sm:$0xff] %v1004
        %1084 = vst [vmem:[#allocation5 + $0x40] sm:$0xff] %v895
        %1085 = vst [vmem:[#allocation5 + $0x48] sm:$0xff] %v897
        %1086 = vst [vmem:[#allocation5 + $0x50] sm:$0xff] %v1008
        %1087 = vst [vmem:[#allocation5 + $0x58] sm:$0xff] %v1010
        %1088 = vst [vmem:[#allocation5 + $0x60] sm:$0xff] %v899
        %1089 = vst [vmem:[#allocation5 + $0x68] sm:$0xff] %v901
        %1090 = vst [vmem:[#allocation5 + $0x70] sm:$0xff] %v1012
        %1091 = vst [vmem:[#allocation5 + $0x78] sm:$0xff] %v1014
        %1092 = vst [vmem:[#allocation5 + $0x80] sm:$0xff] %v905
        %1093 = vst [vmem:[#allocation5 + $0x88] sm:$0xff] %v907
        %1094 = vst [vmem:[#allocation5 + $0x90] sm:$0xff] %v1018
        %1095 = vst [vmem:[#allocation5 + $0x98] sm:$0xff] %v1020
        %1096 = vst [vmem:[#allocation5 + $0xa0] sm:$0xff] %v909
        %1097 = vst [vmem:[#allocation5 + $0xa8] sm:$0xff] %v911
        %1098 = vst [vmem:[#allocation5 + $0xb0] sm:$0xff] %v1022
        %1099 = vst [vmem:[#allocation5 + $0xb8] sm:$0xff] %v1024
        %1100 = vst [vmem:[#allocation5 + $0xc0] sm:$0xff] %v915
        %1101 = vst [vmem:[#allocation5 + $0xc8] sm:$0xff] %v917
        %1102 = vst [vmem:[#allocation5 + $0xd0] sm:$0xff] %v1028
        %1103 = vst [vmem:[#allocation5 + $0xd8] sm:$0xff] %v1030
        %1104 = vst [vmem:[#allocation5 + $0xe0] sm:$0xff] %v919
        %1105 = vst [vmem:[#allocation5 + $0xe8] sm:$0xff] %v921
        %1106 = vst [vmem:[#allocation5 + $0xf0] sm:$0xff] %v1032
        %1107 = vst [vmem:[#allocation5 + $0xf8] sm:$0xff] %v1034
        %1108 = vst [vmem:[#allocation5 + $0x100] sm:$0xff] %v925
        %1109 = vst [vmem:[#allocation5 + $0x108] sm:$0xff] %v927
        %1110 = vst [vmem:[#allocation5 + $0x110] sm:$0xff] %v1038
        %1111 = vst [vmem:[#allocation5 + $0x118] sm:$0xff] %v1040
        %1112 = vst [vmem:[#allocation5 + $0x120] sm:$0xff] %v929
        %1113 = vst [vmem:[#allocation5 + $0x128] sm:$0xff] %v931
        %1114 = vst [vmem:[#allocation5 + $0x130] sm:$0xff] %v1042
        %1115 = vst [vmem:[#allocation5 + $0x138] sm:$0xff] %v1044
        %1116 = vst [vmem:[#allocation5 + $0x140] sm:$0xff] %v935
        %1117 = vst [vmem:[#allocation5 + $0x148] sm:$0xff] %v937
        %1118 = vst [vmem:[#allocation5 + $0x150] sm:$0xff] %v1048
        %1119 = vst [vmem:[#allocation5 + $0x158] sm:$0xff] %v1050
        %1120 = vst [vmem:[#allocation5 + $0x160] sm:$0xff] %v939
        %1121 = vst [vmem:[#allocation5 + $0x168] sm:$0xff] %v941
        %1122 = vst [vmem:[#allocation5 + $0x170] sm:$0xff] %v1052
        %1123 = vst [vmem:[#allocation5 + $0x178] sm:$0xff] %v1054
        %1124 = vst [vmem:[#allocation5 + $0x180] sm:$0xff] %v945
        %1125 = vst [vmem:[#allocation5 + $0x188] sm:$0xff] %v947
        %1126 = vst [vmem:[#allocation5 + $0x190] sm:$0xff] %v1058
        %1127 = vst [vmem:[#allocation5 + $0x198] sm:$0xff] %v1060
        %1128 = vst [vmem:[#allocation5 + $0x1a0] sm:$0xff] %v949
        %1129 = vst [vmem:[#allocation5 + $0x1a8] sm:$0xff] %v951
        %1130 = vst [vmem:[#allocation5 + $0x1b0] sm:$0xff] %v1062
        %1131 = vst [vmem:[#allocation5 + $0x1b8] sm:$0xff] %v1064
        %1132 = vst [vmem:[#allocation5 + $0x1c0] sm:$0xff] %v955
        %1133 = vst [vmem:[#allocation5 + $0x1c8] sm:$0xff] %v957
        %1134 = vst [vmem:[#allocation5 + $0x1d0] sm:$0xff] %v1068
        %1135 = vst [vmem:[#allocation5 + $0x1d8] sm:$0xff] %v1070
        %1136 = vst [vmem:[#allocation5 + $0x1e0] sm:$0xff] %v959
        %1137 = vst [vmem:[#allocation5 + $0x1e8] sm:$0xff] %v961
        %1138 = vst [vmem:[#allocation5 + $0x1f0] sm:$0xff] %v1072
        %1139 = vst [vmem:[#allocation5 + $0x1f8] sm:$0xff] %v1074
      $region44: #{_lambda_.1} parent=39 // pred_fallthru
        _
      %p1140 = scmp.gt.s32.totalorder %s25, 0
      // Predicated region
      $region116: #{_lambda_.1} parent=39 // pred_check
        %p1141 = pneg %p1140
      $region117: #{_lambda_.1} parent=39 // pred_check_branch
        %1143 = sbr.rel (%p1141) target = $region119
      $region118: #{_lambda_.1} parent=39 // pred_region
        %v1144 = vld [vmem:[#allocation4] sm:$0xff]
        %v1145 = vld [vmem:[#allocation4 + $0x8] sm:$0xff]
        %v1146 = vld [vmem:[#allocation4 + $0x10] sm:$0xff]
        %v1147 = vld [vmem:[#allocation4 + $0x18] sm:$0xff]
        %v1148 = vld [vmem:[#allocation4 + $0x20] sm:$0xff]
        %v1149 = vld [vmem:[#allocation4 + $0x28] sm:$0xff]
        %v1150 = vld [vmem:[#allocation4 + $0x30] sm:$0xff]
        %v1151 = vld [vmem:[#allocation4 + $0x38] sm:$0xff]
        %v1152 = vld [vmem:[%s380] sm:$0xff]
        %v1153 = vld [vmem:[%s380 + $0x8] sm:$0xff]
        %v1154 = vld [vmem:[%s380 + $0x10] sm:$0xff]
        %v1155 = vld [vmem:[%s380 + $0x18] sm:$0xff]
        %v1156 = vld [vmem:[%s380 + $0x20] sm:$0xff]
        %v1157 = vld [vmem:[%s380 + $0x28] sm:$0xff]
        %v1158 = vld [vmem:[%s380 + $0x30] sm:$0xff]
        %v1159 = vld [vmem:[%s380 + $0x38] sm:$0xff]
        %v1160 = vld [vmem:[%s380 + $0x40] sm:$0xff]
        %v1161 = vld [vmem:[%s380 + $0x48] sm:$0xff]
        %v1162 = vld [vmem:[%s380 + $0x50] sm:$0xff]
        %v1163 = vld [vmem:[%s380 + $0x58] sm:$0xff]
        %v1164 = vld [vmem:[%s380 + $0x60] sm:$0xff]
        %v1165 = vld [vmem:[%s380 + $0x68] sm:$0xff]
        %v1166 = vld [vmem:[%s380 + $0x70] sm:$0xff]
        %v1167 = vld [vmem:[%s380 + $0x78] sm:$0xff]
        %v1168 = vld [vmem:[%s380 + $0x80] sm:$0xff]
        %v1169 = vld [vmem:[%s380 + $0x88] sm:$0xff]
        %v1170 = vld [vmem:[%s380 + $0x90] sm:$0xff]
        %v1171 = vld [vmem:[%s380 + $0x98] sm:$0xff]
        %v1172 = vld [vmem:[%s380 + $0xa0] sm:$0xff]
        %v1173 = vld [vmem:[%s380 + $0xa8] sm:$0xff]
        %v1174 = vld [vmem:[%s380 + $0xb0] sm:$0xff]
        %v1175 = vld [vmem:[%s380 + $0xb8] sm:$0xff]
        %v1176 = vld [vmem:[%s380 + $0xc0] sm:$0xff]
        %v1177 = vld [vmem:[%s380 + $0xc8] sm:$0xff]
        %v1178 = vld [vmem:[%s380 + $0xd0] sm:$0xff]
        %v1179 = vld [vmem:[%s380 + $0xd8] sm:$0xff]
        %v1180 = vld [vmem:[%s380 + $0xe0] sm:$0xff]
        %v1181 = vld [vmem:[%s380 + $0xe8] sm:$0xff]
        %v1182 = vld [vmem:[%s380 + $0xf0] sm:$0xff]
        %v1183 = vld [vmem:[%s380 + $0xf8] sm:$0xff]
        %v1185 = vlaneseq
        %v1186 = vshrl.u32 %v1185, 7
        %v1187 = vsub.s32 0, %v1186
        %v1188 = vrot.slane %v411, %v1187
        %v1189 = vlaneseq
        %v1190 = vshrl.u32 %v1189, 7
        %v1191 = vsub.s32 1, %v1190
        %v1192 = vrot.slane %v411, %v1191
        %v1193 = vlaneseq
        %v1194 = vshrl.u32 %v1193, 7
        %v1195 = vsub.s32 2, %v1194
        %v1196 = vrot.slane %v411, %v1195
        %v1197 = vlaneseq
        %v1198 = vshrl.u32 %v1197, 7
        %v1199 = vsub.s32 3, %v1198
        %v1200 = vrot.slane %v411, %v1199
        %v1237 = vunpack.c.l.b16 %v1152
        %v1238 = vunpack.c.h.b16 %v1152
        %v1239 = vunpack.c.l.b16 %v1153
        %v1240 = vunpack.c.h.b16 %v1153
        %v1241 = vunpack.c.l.b16 %v1154
        %v1242 = vunpack.c.h.b16 %v1154
        %v1243 = vunpack.c.l.b16 %v1155
        %v1244 = vunpack.c.h.b16 %v1155
        %v1245 = vunpack.c.l.b16 %v1156
        %v1246 = vunpack.c.h.b16 %v1156
        %v1247 = vunpack.c.l.b16 %v1157
        %v1248 = vunpack.c.h.b16 %v1157
        %v1249 = vunpack.c.l.b16 %v1158
        %v1250 = vunpack.c.h.b16 %v1158
        %v1251 = vunpack.c.l.b16 %v1159
        %v1252 = vunpack.c.h.b16 %v1159
        %v1253 = vunpack.c.l.b16 %v1160
        %v1254 = vunpack.c.h.b16 %v1160
        %v1255 = vunpack.c.l.b16 %v1161
        %v1256 = vunpack.c.h.b16 %v1161
        %v1257 = vunpack.c.l.b16 %v1162
        %v1258 = vunpack.c.h.b16 %v1162
        %v1259 = vunpack.c.l.b16 %v1163
        %v1260 = vunpack.c.h.b16 %v1163
        %v1261 = vunpack.c.l.b16 %v1164
        %v1262 = vunpack.c.h.b16 %v1164
        %v1263 = vunpack.c.l.b16 %v1165
        %v1264 = vunpack.c.h.b16 %v1165
        %v1265 = vunpack.c.l.b16 %v1166
        %v1266 = vunpack.c.h.b16 %v1166
        %v1267 = vunpack.c.l.b16 %v1167
        %v1268 = vunpack.c.h.b16 %v1167
        %v1269 = vunpack.c.l.b16 %v1168
        %v1270 = vunpack.c.h.b16 %v1168
        %v1271 = vunpack.c.l.b16 %v1169
        %v1272 = vunpack.c.h.b16 %v1169
        %v1273 = vunpack.c.l.b16 %v1170
        %v1274 = vunpack.c.h.b16 %v1170
        %v1275 = vunpack.c.l.b16 %v1171
        %v1276 = vunpack.c.h.b16 %v1171
        %v1277 = vunpack.c.l.b16 %v1172
        %v1278 = vunpack.c.h.b16 %v1172
        %v1279 = vunpack.c.l.b16 %v1173
        %v1280 = vunpack.c.h.b16 %v1173
        %v1281 = vunpack.c.l.b16 %v1174
        %v1282 = vunpack.c.h.b16 %v1174
        %v1283 = vunpack.c.l.b16 %v1175
        %v1284 = vunpack.c.h.b16 %v1175
        %v1285 = vunpack.c.l.b16 %v1176
        %v1286 = vunpack.c.h.b16 %v1176
        %v1287 = vunpack.c.l.b16 %v1177
        %v1288 = vunpack.c.h.b16 %v1177
        %v1289 = vunpack.c.l.b16 %v1178
        %v1290 = vunpack.c.h.b16 %v1178
        %v1291 = vunpack.c.l.b16 %v1179
        %v1292 = vunpack.c.h.b16 %v1179
        %v1293 = vunpack.c.l.b16 %v1180
        %v1294 = vunpack.c.h.b16 %v1180
        %v1295 = vunpack.c.l.b16 %v1181
        %v1296 = vunpack.c.h.b16 %v1181
        %v1297 = vunpack.c.l.b16 %v1182
        %v1298 = vunpack.c.h.b16 %v1182
        %v1299 = vunpack.c.l.b16 %v1183
        %v1300 = vunpack.c.h.b16 %v1183
        %v1301 = vpack.c.b16 %v1241, %v1237
        %v1302 = vpack.c.b16 %v1242, %v1238
        %v1303 = vpack.c.b16 %v1243, %v1239
        %v1304 = vpack.c.b16 %v1244, %v1240
        %v1305 = vpack.c.b16 %v1249, %v1245
        %v1306 = vpack.c.b16 %v1250, %v1246
        %v1307 = vpack.c.b16 %v1251, %v1247
        %v1308 = vpack.c.b16 %v1252, %v1248
        %v1309 = vpack.c.b16 %v1257, %v1253
        %v1310 = vpack.c.b16 %v1258, %v1254
        %v1311 = vpack.c.b16 %v1259, %v1255
        %v1312 = vpack.c.b16 %v1260, %v1256
        %v1313 = vpack.c.b16 %v1265, %v1261
        %v1314 = vpack.c.b16 %v1266, %v1262
        %v1315 = vpack.c.b16 %v1267, %v1263
        %v1316 = vpack.c.b16 %v1268, %v1264
        %v1317 = vpack.c.b16 %v1273, %v1269
        %v1318 = vpack.c.b16 %v1274, %v1270
        %v1319 = vpack.c.b16 %v1275, %v1271
        %v1320 = vpack.c.b16 %v1276, %v1272
        %v1321 = vpack.c.b16 %v1281, %v1277
        %v1322 = vpack.c.b16 %v1282, %v1278
        %v1323 = vpack.c.b16 %v1283, %v1279
        %v1324 = vpack.c.b16 %v1284, %v1280
        %v1325 = vpack.c.b16 %v1289, %v1285
        %v1326 = vpack.c.b16 %v1290, %v1286
        %v1327 = vpack.c.b16 %v1291, %v1287
        %v1328 = vpack.c.b16 %v1292, %v1288
        %v1329 = vpack.c.b16 %v1297, %v1293
        %v1330 = vpack.c.b16 %v1298, %v1294
        %v1331 = vpack.c.b16 %v1299, %v1295
        %v1332 = vpack.c.b16 %v1300, %v1296
        %1365 = vmatprep.subr.bf16.mxu0 %v1302
        %1366 = vmatpush1.bf16.msra.mxu0 %v1301
        %1367 = vmatprep.subr.bf16.mxu0 %v1306
        %1368 = vmatpush1.bf16.msra.mxu0 %v1305
        %1369 = vmatprep.subr.bf16.mxu0 %v1310
        %1370 = vmatpush1.bf16.msra.mxu0 %v1309
        %1371 = vmatprep.subr.bf16.mxu0 %v1314
        %1372 = vmatpush1.bf16.msra.mxu0 %v1313
        %1373 = vmatprep.subr.bf16.mxu0 %v1318
        %1374 = vmatpush1.bf16.msra.mxu0 %v1317
        %1375 = vmatprep.subr.bf16.mxu0 %v1322
        %1376 = vmatpush1.bf16.msra.mxu0 %v1321
        %1377 = vmatprep.subr.bf16.mxu0 %v1326
        %1378 = vmatpush1.bf16.msra.mxu0 %v1325
        %1379 = vmatprep.subr.bf16.mxu0 %v1330
        %1380 = vmatpush1.bf16.msra.mxu0 %v1329
        %1381 = vmatprep.subr.bf16.mxu0 0
        %1382 = vmatpush1.bf16.msra.mxu0 0
        %1383 = vmatprep.subr.bf16.mxu0 0
        %1384 = vmatpush1.bf16.msra.mxu0 0
        %1385 = vmatprep.subr.bf16.mxu0 0
        %1386 = vmatpush1.bf16.msra.mxu0 0
        %1387 = vmatprep.subr.bf16.mxu0 0
        %1388 = vmatpush1.bf16.msra.mxu0 0
        %1389 = vmatprep.subr.bf16.mxu0 0
        %1390 = vmatpush1.bf16.msra.mxu0 0
        %1391 = vmatprep.subr.bf16.mxu0 0
        %1392 = vmatpush1.bf16.msra.mxu0 0
        %1393 = vmatprep.subr.bf16.mxu0 0
        %1394 = vmatpush1.bf16.msra.mxu0 0
        %1395 = vmatprep.subr.bf16.mxu0 0
        %1396 = vmatpush1.bf16.msra.mxu0 0
        %1397 = vmatprep.mubr.bf16.mxu0 0
        %1398 = vmatmul.mubr.bf16.gmra.mrb[0].mxu0 %v1144
        %v1399 = vpop.f32.mrb[0].mxu0
        %v1400 = vadd.f32 %v1188, %v1399
        %v1401 = vpop.f32.mrb[0].mxu0
        %v1402 = vadd.f32 %v1192, %v1401
        %v1403 = vpop.f32.mrb[0].mxu0
        %v1404 = vadd.f32 %v1188, %v1403
        %v1405 = vpop.f32.mrb[0].mxu0
        %v1406 = vadd.f32 %v1192, %v1405
        %1407 = vmatprep.mubr.bf16.mxu0 0
        %1408 = vmatmul.mubr.bf16.gmra.mrb[0].mxu0 %v1145
        %v1409 = vpop.f32.mrb[0].mxu0
        %v1410 = vadd.f32 %v1188, %v1409
        %v1411 = vpop.f32.mrb[0].mxu0
        %v1412 = vadd.f32 %v1192, %v1411
        %v1413 = vpop.f32.mrb[0].mxu0
        %v1414 = vadd.f32 %v1188, %v1413
        %v1415 = vpop.f32.mrb[0].mxu0
        %v1416 = vadd.f32 %v1192, %v1415
        %1417 = vmatprep.mubr.bf16.mxu0 0
        %1418 = vmatmul.mubr.bf16.gmra.mrb[0].mxu0 %v1146
        %v1419 = vpop.f32.mrb[0].mxu0
        %v1420 = vadd.f32 %v1188, %v1419
        %v1421 = vpop.f32.mrb[0].mxu0
        %v1422 = vadd.f32 %v1192, %v1421
        %v1423 = vpop.f32.mrb[0].mxu0
        %v1424 = vadd.f32 %v1188, %v1423
        %v1425 = vpop.f32.mrb[0].mxu0
        %v1426 = vadd.f32 %v1192, %v1425
        %1427 = vmatprep.mubr.bf16.mxu0 0
        %1428 = vmatmul.mubr.bf16.gmra.mrb[0].mxu0 %v1147
        %v1429 = vpop.f32.mrb[0].mxu0
        %v1430 = vadd.f32 %v1188, %v1429
        %v1431 = vpop.f32.mrb[0].mxu0
        %v1432 = vadd.f32 %v1192, %v1431
        %v1433 = vpop.f32.mrb[0].mxu0
        %v1434 = vadd.f32 %v1188, %v1433
        %v1435 = vpop.f32.mrb[0].mxu0
        %v1436 = vadd.f32 %v1192, %v1435
        %1437 = vmatprep.mubr.bf16.mxu0 0
        %1438 = vmatmul.mubr.bf16.gmra.mrb[0].mxu0 %v1148
        %v1439 = vpop.f32.mrb[0].mxu0
        %v1440 = vadd.f32 %v1188, %v1439
        %v1441 = vpop.f32.mrb[0].mxu0
        %v1442 = vadd.f32 %v1192, %v1441
        %v1443 = vpop.f32.mrb[0].mxu0
        %v1444 = vadd.f32 %v1188, %v1443
        %v1445 = vpop.f32.mrb[0].mxu0
        %v1446 = vadd.f32 %v1192, %v1445
        %1447 = vmatprep.mubr.bf16.mxu0 0
        %1448 = vmatmul.mubr.bf16.gmra.mrb[0].mxu0 %v1149
        %v1449 = vpop.f32.mrb[0].mxu0
        %v1450 = vadd.f32 %v1188, %v1449
        %v1451 = vpop.f32.mrb[0].mxu0
        %v1452 = vadd.f32 %v1192, %v1451
        %v1453 = vpop.f32.mrb[0].mxu0
        %v1454 = vadd.f32 %v1188, %v1453
        %v1455 = vpop.f32.mrb[0].mxu0
        %v1456 = vadd.f32 %v1192, %v1455
        %1457 = vmatprep.mubr.bf16.mxu0 0
        %1458 = vmatmul.mubr.bf16.gmra.mrb[0].mxu0 %v1150
        %v1459 = vpop.f32.mrb[0].mxu0
        %v1460 = vadd.f32 %v1188, %v1459
        %v1461 = vpop.f32.mrb[0].mxu0
        %v1462 = vadd.f32 %v1192, %v1461
        %v1463 = vpop.f32.mrb[0].mxu0
        %v1464 = vadd.f32 %v1188, %v1463
        %v1465 = vpop.f32.mrb[0].mxu0
        %v1466 = vadd.f32 %v1192, %v1465
        %1467 = vmatprep.mubr.bf16.mxu0 0
        %1468 = vmatmul.mubr.bf16.gmra.mrb[0].mxu0 %v1151
        %v1469 = vpop.f32.mrb[0].mxu0
        %v1470 = vadd.f32 %v1188, %v1469
        %v1471 = vpop.f32.mrb[0].mxu0
        %v1472 = vadd.f32 %v1192, %v1471
        %v1473 = vpop.f32.mrb[0].mxu0
        %v1474 = vadd.f32 %v1188, %v1473
        %v1475 = vpop.f32.mrb[0].mxu0
        %v1476 = vadd.f32 %v1192, %v1475
        %1477 = vdwg.mxu0
        %1478 = vmatprep.subr.bf16.mxu0 %v1304
        %1479 = vmatpush1.bf16.msra.mxu0 %v1303
        %1480 = vmatprep.subr.bf16.mxu0 %v1308
        %1481 = vmatpush1.bf16.msra.mxu0 %v1307
        %1482 = vmatprep.subr.bf16.mxu0 %v1312
        %1483 = vmatpush1.bf16.msra.mxu0 %v1311
        %1484 = vmatprep.subr.bf16.mxu0 %v1316
        %1485 = vmatpush1.bf16.msra.mxu0 %v1315
        %1486 = vmatprep.subr.bf16.mxu0 %v1320
        %1487 = vmatpush1.bf16.msra.mxu0 %v1319
        %1488 = vmatprep.subr.bf16.mxu0 %v1324
        %1489 = vmatpush1.bf16.msra.mxu0 %v1323
        %1490 = vmatprep.subr.bf16.mxu0 %v1328
        %1491 = vmatpush1.bf16.msra.mxu0 %v1327
        %1492 = vmatprep.subr.bf16.mxu0 %v1332
        %1493 = vmatpush1.bf16.msra.mxu0 %v1331
        %1494 = vmatprep.subr.bf16.mxu0 0
        %1495 = vmatpush1.bf16.msra.mxu0 0
        %1496 = vmatprep.subr.bf16.mxu0 0
        %1497 = vmatpush1.bf16.msra.mxu0 0
        %1498 = vmatprep.subr.bf16.mxu0 0
        %1499 = vmatpush1.bf16.msra.mxu0 0
        %1500 = vmatprep.subr.bf16.mxu0 0
        %1501 = vmatpush1.bf16.msra.mxu0 0
        %1502 = vmatprep.subr.bf16.mxu0 0
        %1503 = vmatpush1.bf16.msra.mxu0 0
        %1504 = vmatprep.subr.bf16.mxu0 0
        %1505 = vmatpush1.bf16.msra.mxu0 0
        %1506 = vmatprep.subr.bf16.mxu0 0
        %1507 = vmatpush1.bf16.msra.mxu0 0
        %1508 = vmatprep.subr.bf16.mxu0 0
        %1509 = vmatpush1.bf16.msra.mxu0 0
        %1510 = vmatprep.mubr.bf16.mxu0 0
        %1511 = vmatmul.mubr.bf16.gmra.mrb[0].mxu0 %v1144
        %v1512 = vpop.f32.mrb[0].mxu0
        %v1513 = vadd.f32 %v1196, %v1512
        %v1514 = vpop.f32.mrb[0].mxu0
        %v1515 = vadd.f32 %v1200, %v1514
        %v1516 = vpop.f32.mrb[0].mxu0
        %v1517 = vadd.f32 %v1196, %v1516
        %v1518 = vpop.f32.mrb[0].mxu0
        %v1519 = vadd.f32 %v1200, %v1518
        %1520 = vmatprep.mubr.bf16.mxu0 0
        %1521 = vmatmul.mubr.bf16.gmra.mrb[0].mxu0 %v1145
        %v1522 = vpop.f32.mrb[0].mxu0
        %v1523 = vadd.f32 %v1196, %v1522
        %v1524 = vpop.f32.mrb[0].mxu0
        %v1525 = vadd.f32 %v1200, %v1524
        %v1526 = vpop.f32.mrb[0].mxu0
        %v1527 = vadd.f32 %v1196, %v1526
        %v1528 = vpop.f32.mrb[0].mxu0
        %v1529 = vadd.f32 %v1200, %v1528
        %1530 = vmatprep.mubr.bf16.mxu0 0
        %1531 = vmatmul.mubr.bf16.gmra.mrb[0].mxu0 %v1146
        %v1532 = vpop.f32.mrb[0].mxu0
        %v1533 = vadd.f32 %v1196, %v1532
        %v1534 = vpop.f32.mrb[0].mxu0
        %v1535 = vadd.f32 %v1200, %v1534
        %v1536 = vpop.f32.mrb[0].mxu0
        %v1537 = vadd.f32 %v1196, %v1536
        %v1538 = vpop.f32.mrb[0].mxu0
        %v1539 = vadd.f32 %v1200, %v1538
        %1540 = vmatprep.mubr.bf16.mxu0 0
        %1541 = vmatmul.mubr.bf16.gmra.mrb[0].mxu0 %v1147
        %v1542 = vpop.f32.mrb[0].mxu0
        %v1543 = vadd.f32 %v1196, %v1542
        %v1544 = vpop.f32.mrb[0].mxu0
        %v1545 = vadd.f32 %v1200, %v1544
        %v1546 = vpop.f32.mrb[0].mxu0
        %v1547 = vadd.f32 %v1196, %v1546
        %v1548 = vpop.f32.mrb[0].mxu0
        %v1549 = vadd.f32 %v1200, %v1548
        %1550 = vmatprep.mubr.bf16.mxu0 0
        %1551 = vmatmul.mubr.bf16.gmra.mrb[0].mxu0 %v1148
        %v1552 = vpop.f32.mrb[0].mxu0
        %v1553 = vadd.f32 %v1196, %v1552
        %v1554 = vpop.f32.mrb[0].mxu0
        %v1555 = vadd.f32 %v1200, %v1554
        %v1556 = vpop.f32.mrb[0].mxu0
        %v1557 = vadd.f32 %v1196, %v1556
        %v1558 = vpop.f32.mrb[0].mxu0
        %v1559 = vadd.f32 %v1200, %v1558
        %1560 = vmatprep.mubr.bf16.mxu0 0
        %1561 = vmatmul.mubr.bf16.gmra.mrb[0].mxu0 %v1149
        %v1562 = vpop.f32.mrb[0].mxu0
        %v1563 = vadd.f32 %v1196, %v1562
        %v1564 = vpop.f32.mrb[0].mxu0
        %v1565 = vadd.f32 %v1200, %v1564
        %v1566 = vpop.f32.mrb[0].mxu0
        %v1567 = vadd.f32 %v1196, %v1566
        %v1568 = vpop.f32.mrb[0].mxu0
        %v1569 = vadd.f32 %v1200, %v1568
        %1570 = vmatprep.mubr.bf16.mxu0 0
        %1571 = vmatmul.mubr.bf16.gmra.mrb[0].mxu0 %v1150
        %v1572 = vpop.f32.mrb[0].mxu0
        %v1573 = vadd.f32 %v1196, %v1572
        %v1574 = vpop.f32.mrb[0].mxu0
        %v1575 = vadd.f32 %v1200, %v1574
        %v1576 = vpop.f32.mrb[0].mxu0
        %v1577 = vadd.f32 %v1196, %v1576
        %v1578 = vpop.f32.mrb[0].mxu0
        %v1579 = vadd.f32 %v1200, %v1578
        %1580 = vmatprep.mubr.bf16.mxu0 0
        %1581 = vmatmul.mubr.bf16.gmra.mrb[0].mxu0 %v1151
        %v1582 = vpop.f32.mrb[0].mxu0
        %v1583 = vadd.f32 %v1196, %v1582
        %v1584 = vpop.f32.mrb[0].mxu0
        %v1585 = vadd.f32 %v1200, %v1584
        %v1586 = vpop.f32.mrb[0].mxu0
        %v1587 = vadd.f32 %v1196, %v1586
        %v1588 = vpop.f32.mrb[0].mxu0
        %v1589 = vadd.f32 %v1200, %v1588
        %1590 = vdwg.mxu0
        %1591 = vst [vmem:[#allocation5] sm:$0xff] %v1400
        %1592 = vst [vmem:[#allocation5 + $0x8] sm:$0xff] %v1402
        %1593 = vst [vmem:[#allocation5 + $0x10] sm:$0xff] %v1513
        %1594 = vst [vmem:[#allocation5 + $0x18] sm:$0xff] %v1515
        %1595 = vst [vmem:[#allocation5 + $0x20] sm:$0xff] %v1404
        %1596 = vst [vmem:[#allocation5 + $0x28] sm:$0xff] %v1406
        %1597 = vst [vmem:[#allocation5 + $0x30] sm:$0xff] %v1517
        %1598 = vst [vmem:[#allocation5 + $0x38] sm:$0xff] %v1519
        %1599 = vst [vmem:[#allocation5 + $0x40] sm:$0xff] %v1410
        %1600 = vst [vmem:[#allocation5 + $0x48] sm:$0xff] %v1412
        %1601 = vst [vmem:[#allocation5 + $0x50] sm:$0xff] %v1523
        %1602 = vst [vmem:[#allocation5 + $0x58] sm:$0xff] %v1525
        %1603 = vst [vmem:[#allocation5 + $0x60] sm:$0xff] %v1414
        %1604 = vst [vmem:[#allocation5 + $0x68] sm:$0xff] %v1416
        %1605 = vst [vmem:[#allocation5 + $0x70] sm:$0xff] %v1527
        %1606 = vst [vmem:[#allocation5 + $0x78] sm:$0xff] %v1529
        %1607 = vst [vmem:[#allocation5 + $0x80] sm:$0xff] %v1420
        %1608 = vst [vmem:[#allocation5 + $0x88] sm:$0xff] %v1422
        %1609 = vst [vmem:[#allocation5 + $0x90] sm:$0xff] %v1533
        %1610 = vst [vmem:[#allocation5 + $0x98] sm:$0xff] %v1535
        %1611 = vst [vmem:[#allocation5 + $0xa0] sm:$0xff] %v1424
        %1612 = vst [vmem:[#allocation5 + $0xa8] sm:$0xff] %v1426
        %1613 = vst [vmem:[#allocation5 + $0xb0] sm:$0xff] %v1537
        %1614 = vst [vmem:[#allocation5 + $0xb8] sm:$0xff] %v1539
        %1615 = vst [vmem:[#allocation5 + $0xc0] sm:$0xff] %v1430
        %1616 = vst [vmem:[#allocation5 + $0xc8] sm:$0xff] %v1432
        %1617 = vst [vmem:[#allocation5 + $0xd0] sm:$0xff] %v1543
        %1618 = vst [vmem:[#allocation5 + $0xd8] sm:$0xff] %v1545
        %1619 = vst [vmem:[#allocation5 + $0xe0] sm:$0xff] %v1434
        %1620 = vst [vmem:[#allocation5 + $0xe8] sm:$0xff] %v1436
        %1621 = vst [vmem:[#allocation5 + $0xf0] sm:$0xff] %v1547
        %1622 = vst [vmem:[#allocation5 + $0xf8] sm:$0xff] %v1549
        %1623 = vst [vmem:[#allocation5 + $0x100] sm:$0xff] %v1440
        %1624 = vst [vmem:[#allocation5 + $0x108] sm:$0xff] %v1442
        %1625 = vst [vmem:[#allocation5 + $0x110] sm:$0xff] %v1553
        %1626 = vst [vmem:[#allocation5 + $0x118] sm:$0xff] %v1555
        %1627 = vst [vmem:[#allocation5 + $0x120] sm:$0xff] %v1444
        %1628 = vst [vmem:[#allocation5 + $0x128] sm:$0xff] %v1446
        %1629 = vst [vmem:[#allocation5 + $0x130] sm:$0xff] %v1557
        %1630 = vst [vmem:[#allocation5 + $0x138] sm:$0xff] %v1559
        %1631 = vst [vmem:[#allocation5 + $0x140] sm:$0xff] %v1450
        %1632 = vst [vmem:[#allocation5 + $0x148] sm:$0xff] %v1452
        %1633 = vst [vmem:[#allocation5 + $0x150] sm:$0xff] %v1563
        %1634 = vst [vmem:[#allocation5 + $0x158] sm:$0xff] %v1565
        %1635 = vst [vmem:[#allocation5 + $0x160] sm:$0xff] %v1454
        %1636 = vst [vmem:[#allocation5 + $0x168] sm:$0xff] %v1456
        %1637 = vst [vmem:[#allocation5 + $0x170] sm:$0xff] %v1567
        %1638 = vst [vmem:[#allocation5 + $0x178] sm:$0xff] %v1569
        %1639 = vst [vmem:[#allocation5 + $0x180] sm:$0xff] %v1460
        %1640 = vst [vmem:[#allocation5 + $0x188] sm:$0xff] %v1462
        %1641 = vst [vmem:[#allocation5 + $0x190] sm:$0xff] %v1573
        %1642 = vst [vmem:[#allocation5 + $0x198] sm:$0xff] %v1575
        %1643 = vst [vmem:[#allocation5 + $0x1a0] sm:$0xff] %v1464
        %1644 = vst [vmem:[#allocation5 + $0x1a8] sm:$0xff] %v1466
        %1645 = vst [vmem:[#allocation5 + $0x1b0] sm:$0xff] %v1577
        %1646 = vst [vmem:[#allocation5 + $0x1b8] sm:$0xff] %v1579
        %1647 = vst [vmem:[#allocation5 + $0x1c0] sm:$0xff] %v1470
        %1648 = vst [vmem:[#allocation5 + $0x1c8] sm:$0xff] %v1472
        %1649 = vst [vmem:[#allocation5 + $0x1d0] sm:$0xff] %v1583
        %1650 = vst [vmem:[#allocation5 + $0x1d8] sm:$0xff] %v1585
        %1651 = vst [vmem:[#allocation5 + $0x1e0] sm:$0xff] %v1474
        %1652 = vst [vmem:[#allocation5 + $0x1e8] sm:$0xff] %v1476
        %1653 = vst [vmem:[#allocation5 + $0x1f0] sm:$0xff] %v1587
        %1654 = vst [vmem:[#allocation5 + $0x1f8] sm:$0xff] %v1589
      $region119: #{_lambda_.1} parent=39 // pred_fallthru
        _
      %p1655 = scmp.lt.s32.totalorder %s25, 1
      %v1656 = vld [vmem:[%s364] sm:$0xff]
      %v1657 = vld [vmem:[%s364 + $0x8] sm:$0xff]
      %v1658 = vld [vmem:[%s374] sm:$0xff]
      %v1659 = vld [vmem:[%s374 + $0x8] sm:$0xff]
      %v1660 = vld [vmem:[#allocation5] sm:$0xff]
      %v1661 = vld [vmem:[#allocation5 + $0x8] sm:$0xff]
      %v1662 = vld [vmem:[#allocation5 + $0x10] sm:$0xff]
      %v1663 = vld [vmem:[#allocation5 + $0x18] sm:$0xff]
      %v1664 = vld [vmem:[#allocation5 + $0x20] sm:$0xff]
      %v1665 = vld [vmem:[#allocation5 + $0x28] sm:$0xff]
      %v1666 = vld [vmem:[#allocation5 + $0x30] sm:$0xff]
      %v1667 = vld [vmem:[#allocation5 + $0x38] sm:$0xff]
      %v1668 = vpack.c.bf16 %v1657, %v1656
      %v1669 = vld [vmem:[%s385] sm:$0xff]
      %v1670 = vld [vmem:[%s385 + $0x8] sm:$0xff]
      %v1671 = vld [vmem:[%s385 + $0x10] sm:$0xff]
      %v1672 = vld [vmem:[%s385 + $0x18] sm:$0xff]
      %v1673 = vld [vmem:[%s385 + $0x20] sm:$0xff]
      %v1674 = vld [vmem:[%s385 + $0x28] sm:$0xff]
      %v1675 = vld [vmem:[%s385 + $0x30] sm:$0xff]
      %v1676 = vld [vmem:[%s385 + $0x38] sm:$0xff]
      %v1677 = vld [vmem:[%s385 + $0x40] sm:$0xff]
      %v1678 = vld [vmem:[%s385 + $0x48] sm:$0xff]
      %v1679 = vld [vmem:[%s385 + $0x50] sm:$0xff]
      %v1680 = vld [vmem:[%s385 + $0x58] sm:$0xff]
      %v1681 = vld [vmem:[%s385 + $0x60] sm:$0xff]
      %v1682 = vld [vmem:[%s385 + $0x68] sm:$0xff]
      %v1683 = vld [vmem:[%s385 + $0x70] sm:$0xff]
      %v1684 = vld [vmem:[%s385 + $0x78] sm:$0xff]
      %v1685 = vld [vmem:[%s385 + $0x80] sm:$0xff]
      %v1686 = vld [vmem:[%s385 + $0x88] sm:$0xff]
      %v1687 = vld [vmem:[%s385 + $0x90] sm:$0xff]
      %v1688 = vld [vmem:[%s385 + $0x98] sm:$0xff]
      %v1689 = vld [vmem:[%s385 + $0xa0] sm:$0xff]
      %v1690 = vld [vmem:[%s385 + $0xa8] sm:$0xff]
      %v1691 = vld [vmem:[%s385 + $0xb0] sm:$0xff]
      %v1692 = vld [vmem:[%s385 + $0xb8] sm:$0xff]
      %v1693 = vld [vmem:[%s385 + $0xc0] sm:$0xff]
      %v1694 = vld [vmem:[%s385 + $0xc8] sm:$0xff]
      %v1695 = vld [vmem:[%s385 + $0xd0] sm:$0xff]
      %v1696 = vld [vmem:[%s385 + $0xd8] sm:$0xff]
      %v1697 = vld [vmem:[%s385 + $0xe0] sm:$0xff]
      %v1698 = vld [vmem:[%s385 + $0xe8] sm:$0xff]
      %v1699 = vld [vmem:[%s385 + $0xf0] sm:$0xff]
      %v1700 = vld [vmem:[%s385 + $0xf8] sm:$0xff]
      %v1733 = vunpack.c.l.b16 %v1669
      %v1734 = vunpack.c.h.b16 %v1669
      %v1735 = vunpack.c.l.b16 %v1670
      %v1736 = vunpack.c.h.b16 %v1670
      %v1737 = vunpack.c.l.b16 %v1671
      %v1738 = vunpack.c.h.b16 %v1671
      %v1739 = vunpack.c.l.b16 %v1672
      %v1740 = vunpack.c.h.b16 %v1672
      %v1741 = vunpack.c.l.b16 %v1673
      %v1742 = vunpack.c.h.b16 %v1673
      %v1743 = vunpack.c.l.b16 %v1674
      %v1744 = vunpack.c.h.b16 %v1674
      %v1745 = vunpack.c.l.b16 %v1675
      %v1746 = vunpack.c.h.b16 %v1675
      %v1747 = vunpack.c.l.b16 %v1676
      %v1748 = vunpack.c.h.b16 %v1676
      %v1749 = vunpack.c.l.b16 %v1677
      %v1750 = vunpack.c.h.b16 %v1677
      %v1751 = vunpack.c.l.b16 %v1678
      %v1752 = vunpack.c.h.b16 %v1678
      %v1753 = vunpack.c.l.b16 %v1679
      %v1754 = vunpack.c.h.b16 %v1679
      %v1755 = vunpack.c.l.b16 %v1680
      %v1756 = vunpack.c.h.b16 %v1680
      %v1757 = vunpack.c.l.b16 %v1681
      %v1758 = vunpack.c.h.b16 %v1681
      %v1759 = vunpack.c.l.b16 %v1682
      %v1760 = vunpack.c.h.b16 %v1682
      %v1761 = vunpack.c.l.b16 %v1683
      %v1762 = vunpack.c.h.b16 %v1683
      %v1763 = vunpack.c.l.b16 %v1684
      %v1764 = vunpack.c.h.b16 %v1684
      %v1765 = vunpack.c.l.b16 %v1685
      %v1766 = vunpack.c.h.b16 %v1685
      %v1767 = vunpack.c.l.b16 %v1686
      %v1768 = vunpack.c.h.b16 %v1686
      %v1769 = vunpack.c.l.b16 %v1687
      %v1770 = vunpack.c.h.b16 %v1687
      %v1771 = vunpack.c.l.b16 %v1688
      %v1772 = vunpack.c.h.b16 %v1688
      %v1773 = vunpack.c.l.b16 %v1689
      %v1774 = vunpack.c.h.b16 %v1689
      %v1775 = vunpack.c.l.b16 %v1690
      %v1776 = vunpack.c.h.b16 %v1690
      %v1777 = vunpack.c.l.b16 %v1691
      %v1778 = vunpack.c.h.b16 %v1691
      %v1779 = vunpack.c.l.b16 %v1692
      %v1780 = vunpack.c.h.b16 %v1692
      %v1781 = vunpack.c.l.b16 %v1693
      %v1782 = vunpack.c.h.b16 %v1693
      %v1783 = vunpack.c.l.b16 %v1694
      %v1784 = vunpack.c.h.b16 %v1694
      %v1785 = vunpack.c.l.b16 %v1695
      %v1786 = vunpack.c.h.b16 %v1695
      %v1787 = vunpack.c.l.b16 %v1696
      %v1788 = vunpack.c.h.b16 %v1696
      %v1789 = vunpack.c.l.b16 %v1697
      %v1790 = vunpack.c.h.b16 %v1697
      %v1791 = vunpack.c.l.b16 %v1698
      %v1792 = vunpack.c.h.b16 %v1698
      %v1793 = vunpack.c.l.b16 %v1699
      %v1794 = vunpack.c.h.b16 %v1699
      %v1795 = vunpack.c.l.b16 %v1700
      %v1796 = vunpack.c.h.b16 %v1700
      %v1797 = vpack.c.b16 %v1737, %v1733
      %v1798 = vpack.c.b16 %v1738, %v1734
      %v1799 = vpack.c.b16 %v1739, %v1735
      %v1800 = vpack.c.b16 %v1740, %v1736
      %v1801 = vpack.c.b16 %v1745, %v1741
      %v1802 = vpack.c.b16 %v1746, %v1742
      %v1803 = vpack.c.b16 %v1747, %v1743
      %v1804 = vpack.c.b16 %v1748, %v1744
      %v1805 = vpack.c.b16 %v1753, %v1749
      %v1806 = vpack.c.b16 %v1754, %v1750
      %v1807 = vpack.c.b16 %v1755, %v1751
      %v1808 = vpack.c.b16 %v1756, %v1752
      %v1809 = vpack.c.b16 %v1761, %v1757
      %v1810 = vpack.c.b16 %v1762, %v1758
      %v1811 = vpack.c.b16 %v1763, %v1759
      %v1812 = vpack.c.b16 %v1764, %v1760
      %v1813 = vpack.c.b16 %v1769, %v1765
      %v1814 = vpack.c.b16 %v1770, %v1766
      %v1815 = vpack.c.b16 %v1771, %v1767
      %v1816 = vpack.c.b16 %v1772, %v1768
      %v1817 = vpack.c.b16 %v1777, %v1773
      %v1818 = vpack.c.b16 %v1778, %v1774
      %v1819 = vpack.c.b16 %v1779, %v1775
      %v1820 = vpack.c.b16 %v1780, %v1776
      %v1821 = vpack.c.b16 %v1785, %v1781
      %v1822 = vpack.c.b16 %v1786, %v1782
      %v1823 = vpack.c.b16 %v1787, %v1783
      %v1824 = vpack.c.b16 %v1788, %v1784
      %v1825 = vpack.c.b16 %v1793, %v1789
      %v1826 = vpack.c.b16 %v1794, %v1790
      %v1827 = vpack.c.b16 %v1795, %v1791
      %v1828 = vpack.c.b16 %v1796, %v1792
      %1861 = vmatprep.subr.bf16.mxu0 %v1798
      %1862 = vmatpush1.bf16.msra.mxu0 %v1797
      %1863 = vmatprep.subr.bf16.mxu0 %v1802
      %1864 = vmatpush1.bf16.msra.mxu0 %v1801
      %1865 = vmatprep.subr.bf16.mxu0 %v1806
      %1866 = vmatpush1.bf16.msra.mxu0 %v1805
      %1867 = vmatprep.subr.bf16.mxu0 %v1810
      %1868 = vmatpush1.bf16.msra.mxu0 %v1809
      %1869 = vmatprep.subr.bf16.mxu0 %v1814
      %1870 = vmatpush1.bf16.msra.mxu0 %v1813
      %1871 = vmatprep.subr.bf16.mxu0 %v1818
      %1872 = vmatpush1.bf16.msra.mxu0 %v1817
      %1873 = vmatprep.subr.bf16.mxu0 %v1822
      %1874 = vmatpush1.bf16.msra.mxu0 %v1821
      %1875 = vmatprep.subr.bf16.mxu0 %v1826
      %1876 = vmatpush1.bf16.msra.mxu0 %v1825
      %1877 = vmatprep.subr.bf16.mxu0 0
      %1878 = vmatpush1.bf16.msra.mxu0 0
      %1879 = vmatprep.subr.bf16.mxu0 0
      %1880 = vmatpush1.bf16.msra.mxu0 0
      %1881 = vmatprep.subr.bf16.mxu0 0
      %1882 = vmatpush1.bf16.msra.mxu0 0
      %1883 = vmatprep.subr.bf16.mxu0 0
      %1884 = vmatpush1.bf16.msra.mxu0 0
      %1885 = vmatprep.subr.bf16.mxu0 0
      %1886 = vmatpush1.bf16.msra.mxu0 0
      %1887 = vmatprep.subr.bf16.mxu0 0
      %1888 = vmatpush1.bf16.msra.mxu0 0
      %1889 = vmatprep.subr.bf16.mxu0 0
      %1890 = vmatpush1.bf16.msra.mxu0 0
      %1891 = vmatprep.subr.bf16.mxu0 0
      %1892 = vmatpush1.bf16.msra.mxu0 0
      %1893 = vmatprep.mubr.bf16.mxu0 0
      %1894 = vmatmul.mubr.bf16.gmra.mrb[0].mxu0 %v1668
      %v1895 = vpop.f32.mrb[0].mxu0
      %v1896 = vadd.f32 0.0, %v1895
      %v1897 = vpop.f32.mrb[0].mxu0
      %v1898 = vadd.f32 0.0, %v1897
      %v1899 = vpop.f32.mrb[0].mxu0
      %v1900 = vadd.f32 0.0, %v1899
      %v1901 = vpop.f32.mrb[0].mxu0
      %v1902 = vadd.f32 0.0, %v1901
      %1903 = vdwg.mxu0
      %1904 = vmatprep.subr.bf16.mxu0 %v1800
      %1905 = vmatpush1.bf16.msra.mxu0 %v1799
      %1906 = vmatprep.subr.bf16.mxu0 %v1804
      %1907 = vmatpush1.bf16.msra.mxu0 %v1803
      %1908 = vmatprep.subr.bf16.mxu0 %v1808
      %1909 = vmatpush1.bf16.msra.mxu0 %v1807
      %1910 = vmatprep.subr.bf16.mxu0 %v1812
      %1911 = vmatpush1.bf16.msra.mxu0 %v1811
      %1912 = vmatprep.subr.bf16.mxu0 %v1816
      %1913 = vmatpush1.bf16.msra.mxu0 %v1815
      %1914 = vmatprep.subr.bf16.mxu0 %v1820
      %1915 = vmatpush1.bf16.msra.mxu0 %v1819
      %1916 = vmatprep.subr.bf16.mxu0 %v1824
      %1917 = vmatpush1.bf16.msra.mxu0 %v1823
      %1918 = vmatprep.subr.bf16.mxu0 %v1828
      %1919 = vmatpush1.bf16.msra.mxu0 %v1827
      %1920 = vmatprep.subr.bf16.mxu0 0
      %1921 = vmatpush1.bf16.msra.mxu0 0
      %1922 = vmatprep.subr.bf16.mxu0 0
      %1923 = vmatpush1.bf16.msra.mxu0 0
      %1924 = vmatprep.subr.bf16.mxu0 0
      %1925 = vmatpush1.bf16.msra.mxu0 0
      %1926 = vmatprep.subr.bf16.mxu0 0
      %1927 = vmatpush1.bf16.msra.mxu0 0
      %1928 = vmatprep.subr.bf16.mxu0 0
      %1929 = vmatpush1.bf16.msra.mxu0 0
      %1930 = vmatprep.subr.bf16.mxu0 0
      %1931 = vmatpush1.bf16.msra.mxu0 0
      %1932 = vmatprep.subr.bf16.mxu0 0
      %1933 = vmatpush1.bf16.msra.mxu0 0
      %1934 = vmatprep.subr.bf16.mxu0 0
      %1935 = vmatpush1.bf16.msra.mxu0 0
      %1936 = vmatprep.mubr.bf16.mxu0 0
      %1937 = vmatmul.mubr.bf16.gmra.mrb[0].mxu0 %v1668
      %v1938 = vpop.f32.mrb[0].mxu0
      %v1939 = vadd.f32 0.0, %v1938
      %v1940 = vpop.f32.mrb[0].mxu0
      %v1941 = vadd.f32 0.0, %v1940
      %v1942 = vpop.f32.mrb[0].mxu0
      %v1943 = vadd.f32 0.0, %v1942
      %v1944 = vpop.f32.mrb[0].mxu0
      %v1945 = vadd.f32 0.0, %v1944
      %1946 = vdwg.mxu0
      %v1947 = vadd.f32 %v1660, %v1896
      %v1948 = vadd.f32 %v1661, %v1898
      %v1949 = vadd.f32 %v1662, %v1939
      %v1950 = vadd.f32 %v1663, %v1941
      %v1951 = vadd.f32 %v1664, %v1900
      %v1952 = vadd.f32 %v1665, %v1902
      %v1953 = vadd.f32 %v1666, %v1943
      %v1954 = vadd.f32 %v1667, %v1945
      %v1955 = vmul.f32 %v1947, 0.5
      %v1956 = vmul.f32 %v1951, 0.5
      %v1957 = vtanh.pop %v1955
      %v1958 = vtanh.pop %v1956
      %v1959 = vmul.f32 %v1957, 0.5
      %v1960 = vmul.f32 %v1958, 0.5
      %v1961 = vadd.f32 %v1959, 0.5
      %v1962 = vadd.f32 %v1960, 0.5
      %v1963 = vmul.f32 %v1948, 0.5
      %v1964 = vmul.f32 %v1952, 0.5
      %v1965 = vtanh.pop %v1963
      %v1966 = vtanh.pop %v1964
      %v1967 = vmul.f32 %v1965, 0.5
      %v1968 = vmul.f32 %v1966, 0.5
      %v1969 = vadd.f32 %v1967, 0.5
      %v1970 = vadd.f32 %v1968, 0.5
      %v1971 = vtanh.pop %v1949
      %v1972 = vtanh.pop %v1953
      %v1973 = vmul.f32 %v1950, 0.5
      %v1974 = vmul.f32 %v1954, 0.5
      %v1975 = vtanh.pop %v1973
      %v1976 = vtanh.pop %v1974
      %v1977 = vmul.f32 %v1975, 0.5
      %v1978 = vmul.f32 %v1976, 0.5
      %v1979 = vadd.f32 %v1977, 0.5
      %v1980 = vadd.f32 %v1978, 0.5
      %v1981 = vmul.f32 %v1969, %v1658
      %v1982 = vmul.f32 %v1970, %v1659
      %v1983 = vmul.f32 %v1961, %v1971
      %v1984 = vmul.f32 %v1962, %v1972
      %v1985 = vadd.f32 %v1981, %v1983
      %v1986 = vadd.f32 %v1982, %v1984
      %v1987 = vtanh.pop %v1985
      %v1988 = vtanh.pop %v1986
      %v1989 = vmul.f32 %v1979, %v1987
      %v1990 = vmul.f32 %v1980, %v1988
      // Predicated region
      $region120: #{_lambda_.1} parent=39 // pred_check
        %p1991 = pneg %p1655
      $region121: #{_lambda_.1} parent=39 // pred_check_branch
        %1993 = sbr.rel (%p1991) target = $region123
      $region122: #{_lambda_.1} parent=39 // pred_region
        %v1994 = vpack.c.bf16 %v1990, %v1989
        %1995 = vst [vmem:[#allocation4] sm:$0xff] %v1994
      $region123: #{_lambda_.1} parent=39 // pred_fallthru
        _
      %s1996 = scalar_lea.vmem [#allocation5], 64
      %v1997 = vld [vmem:[%s1996] sm:$0xff]
      %v1998 = vld [vmem:[%s1996 + $0x8] sm:$0xff]
      %v1999 = vld [vmem:[%s1996 + $0x10] sm:$0xff]
      %v2000 = vld [vmem:[%s1996 + $0x18] sm:$0xff]
      %v2001 = vld [vmem:[%s1996 + $0x20] sm:$0xff]
      %v2002 = vld [vmem:[%s1996 + $0x28] sm:$0xff]
      %v2003 = vld [vmem:[%s1996 + $0x30] sm:$0xff]
      %v2004 = vld [vmem:[%s1996 + $0x38] sm:$0xff]
      %v2005 = vpack.c.bf16 %v1990, %v1989
      %v2006 = vld [vmem:[%s385] sm:$0xff]
      %v2007 = vld [vmem:[%s385 + $0x8] sm:$0xff]
      %v2008 = vld [vmem:[%s385 + $0x10] sm:$0xff]
      %v2009 = vld [vmem:[%s385 + $0x18] sm:$0xff]
      %v2010 = vld [vmem:[%s385 + $0x20] sm:$0xff]
      %v2011 = vld [vmem:[%s385 + $0x28] sm:$0xff]
      %v2012 = vld [vmem:[%s385 + $0x30] sm:$0xff]
      %v2013 = vld [vmem:[%s385 + $0x38] sm:$0xff]
      %v2014 = vld [vmem:[%s385 + $0x40] sm:$0xff]
      %v2015 = vld [vmem:[%s385 + $0x48] sm:$0xff]
      %v2016 = vld [vmem:[%s385 + $0x50] sm:$0xff]
      %v2017 = vld [vmem:[%s385 + $0x58] sm:$0xff]
      %v2018 = vld [vmem:[%s385 + $0x60] sm:$0xff]
      %v2019 = vld [vmem:[%s385 + $0x68] sm:$0xff]
      %v2020 = vld [vmem:[%s385 + $0x70] sm:$0xff]
      %v2021 = vld [vmem:[%s385 + $0x78] sm:$0xff]
      %v2022 = vld [vmem:[%s385 + $0x80] sm:$0xff]
      %v2023 = vld [vmem:[%s385 + $0x88] sm:$0xff]
      %v2024 = vld [vmem:[%s385 + $0x90] sm:$0xff]
      %v2025 = vld [vmem:[%s385 + $0x98] sm:$0xff]
      %v2026 = vld [vmem:[%s385 + $0xa0] sm:$0xff]
      %v2027 = vld [vmem:[%s385 + $0xa8] sm:$0xff]
      %v2028 = vld [vmem:[%s385 + $0xb0] sm:$0xff]
      %v2029 = vld [vmem:[%s385 + $0xb8] sm:$0xff]
      %v2030 = vld [vmem:[%s385 + $0xc0] sm:$0xff]
      %v2031 = vld [vmem:[%s385 + $0xc8] sm:$0xff]
      %v2032 = vld [vmem:[%s385 + $0xd0] sm:$0xff]
      %v2033 = vld [vmem:[%s385 + $0xd8] sm:$0xff]
      %v2034 = vld [vmem:[%s385 + $0xe0] sm:$0xff]
      %v2035 = vld [vmem:[%s385 + $0xe8] sm:$0xff]
      %v2036 = vld [vmem:[%s385 + $0xf0] sm:$0xff]
      %v2037 = vld [vmem:[%s385 + $0xf8] sm:$0xff]
      %v2070 = vunpack.c.l.b16 %v2006
      %v2071 = vunpack.c.h.b16 %v2006
      %v2072 = vunpack.c.l.b16 %v2007
      %v2073 = vunpack.c.h.b16 %v2007
      %v2074 = vunpack.c.l.b16 %v2008
      %v2075 = vunpack.c.h.b16 %v2008
      %v2076 = vunpack.c.l.b16 %v2009
      %v2077 = vunpack.c.h.b16 %v2009
      %v2078 = vunpack.c.l.b16 %v2010
      %v2079 = vunpack.c.h.b16 %v2010
      %v2080 = vunpack.c.l.b16 %v2011
      %v2081 = vunpack.c.h.b16 %v2011
      %v2082 = vunpack.c.l.b16 %v2012
      %v2083 = vunpack.c.h.b16 %v2012
      %v2084 = vunpack.c.l.b16 %v2013
      %v2085 = vunpack.c.h.b16 %v2013
      %v2086 = vunpack.c.l.b16 %v2014
      %v2087 = vunpack.c.h.b16 %v2014
      %v2088 = vunpack.c.l.b16 %v2015
      %v2089 = vunpack.c.h.b16 %v2015
      %v2090 = vunpack.c.l.b16 %v2016
      %v2091 = vunpack.c.h.b16 %v2016
      %v2092 = vunpack.c.l.b16 %v2017
      %v2093 = vunpack.c.h.b16 %v2017
      %v2094 = vunpack.c.l.b16 %v2018
      %v2095 = vunpack.c.h.b16 %v2018
      %v2096 = vunpack.c.l.b16 %v2019
      %v2097 = vunpack.c.h.b16 %v2019
      %v2098 = vunpack.c.l.b16 %v2020
      %v2099 = vunpack.c.h.b16 %v2020
      %v2100 = vunpack.c.l.b16 %v2021
      %v2101 = vunpack.c.h.b16 %v2021
      %v2102 = vunpack.c.l.b16 %v2022
      %v2103 = vunpack.c.h.b16 %v2022
      %v2104 = vunpack.c.l.b16 %v2023
      %v2105 = vunpack.c.h.b16 %v2023
      %v2106 = vunpack.c.l.b16 %v2024
      %v2107 = vunpack.c.h.b16 %v2024
      %v2108 = vunpack.c.l.b16 %v2025
      %v2109 = vunpack.c.h.b16 %v2025
      %v2110 = vunpack.c.l.b16 %v2026
      %v2111 = vunpack.c.h.b16 %v2026
      %v2112 = vunpack.c.l.b16 %v2027
      %v2113 = vunpack.c.h.b16 %v2027
      %v2114 = vunpack.c.l.b16 %v2028
      %v2115 = vunpack.c.h.b16 %v2028
      %v2116 = vunpack.c.l.b16 %v2029
      %v2117 = vunpack.c.h.b16 %v2029
      %v2118 = vunpack.c.l.b16 %v2030
      %v2119 = vunpack.c.h.b16 %v2030
      %v2120 = vunpack.c.l.b16 %v2031
      %v2121 = vunpack.c.h.b16 %v2031
      %v2122 = vunpack.c.l.b16 %v2032
      %v2123 = vunpack.c.h.b16 %v2032
      %v2124 = vunpack.c.l.b16 %v2033
      %v2125 = vunpack.c.h.b16 %v2033
      %v2126 = vunpack.c.l.b16 %v2034
      %v2127 = vunpack.c.h.b16 %v2034
      %v2128 = vunpack.c.l.b16 %v2035
      %v2129 = vunpack.c.h.b16 %v2035
      %v2130 = vunpack.c.l.b16 %v2036
      %v2131 = vunpack.c.h.b16 %v2036
      %v2132 = vunpack.c.l.b16 %v2037
      %v2133 = vunpack.c.h.b16 %v2037
      %v2134 = vpack.c.b16 %v2074, %v2070
      %v2135 = vpack.c.b16 %v2075, %v2071
      %v2136 = vpack.c.b16 %v2076, %v2072
      %v2137 = vpack.c.b16 %v2077, %v2073
      %v2138 = vpack.c.b16 %v2082, %v2078
      %v2139 = vpack.c.b16 %v2083, %v2079
      %v2140 = vpack.c.b16 %v2084, %v2080
      %v2141 = vpack.c.b16 %v2085, %v2081
      %v2142 = vpack.c.b16 %v2090, %v2086
      %v2143 = vpack.c.b16 %v2091, %v2087
      %v2144 = vpack.c.b16 %v2092, %v2088
      %v2145 = vpack.c.b16 %v2093, %v2089
      %v2146 = vpack.c.b16 %v2098, %v2094
      %v2147 = vpack.c.b16 %v2099, %v2095
      %v2148 = vpack.c.b16 %v2100, %v2096
      %v2149 = vpack.c.b16 %v2101, %v2097
      %v2150 = vpack.c.b16 %v2106, %v2102
      %v2151 = vpack.c.b16 %v2107, %v2103
      %v2152 = vpack.c.b16 %v2108, %v2104
      %v2153 = vpack.c.b16 %v2109, %v2105
      %v2154 = vpack.c.b16 %v2114, %v2110
      %v2155 = vpack.c.b16 %v2115, %v2111
      %v2156 = vpack.c.b16 %v2116, %v2112
      %v2157 = vpack.c.b16 %v2117, %v2113
      %v2158 = vpack.c.b16 %v2122, %v2118
      %v2159 = vpack.c.b16 %v2123, %v2119
      %v2160 = vpack.c.b16 %v2124, %v2120
      %v2161 = vpack.c.b16 %v2125, %v2121
      %v2162 = vpack.c.b16 %v2130, %v2126
      %v2163 = vpack.c.b16 %v2131, %v2127
      %v2164 = vpack.c.b16 %v2132, %v2128
      %v2165 = vpack.c.b16 %v2133, %v2129
      %2198 = vmatprep.subr.bf16.mxu0 %v2135
      %2199 = vmatpush1.bf16.msra.mxu0 %v2134
      %2200 = vmatprep.subr.bf16.mxu0 %v2139
      %2201 = vmatpush1.bf16.msra.mxu0 %v2138
      %2202 = vmatprep.subr.bf16.mxu0 %v2143
      %2203 = vmatpush1.bf16.msra.mxu0 %v2142
      %2204 = vmatprep.subr.bf16.mxu0 %v2147
      %2205 = vmatpush1.bf16.msra.mxu0 %v2146
      %2206 = vmatprep.subr.bf16.mxu0 %v2151
      %2207 = vmatpush1.bf16.msra.mxu0 %v2150
      %2208 = vmatprep.subr.bf16.mxu0 %v2155
      %2209 = vmatpush1.bf16.msra.mxu0 %v2154
      %2210 = vmatprep.subr.bf16.mxu0 %v2159
      %2211 = vmatpush1.bf16.msra.mxu0 %v2158
      %2212 = vmatprep.subr.bf16.mxu0 %v2163
      %2213 = vmatpush1.bf16.msra.mxu0 %v2162
      %2214 = vmatprep.subr.bf16.mxu0 0
      %2215 = vmatpush1.bf16.msra.mxu0 0
      %2216 = vmatprep.subr.bf16.mxu0 0
      %2217 = vmatpush1.bf16.msra.mxu0 0
      %2218 = vmatprep.subr.bf16.mxu0 0
      %2219 = vmatpush1.bf16.msra.mxu0 0
      %2220 = vmatprep.subr.bf16.mxu0 0
      %2221 = vmatpush1.bf16.msra.mxu0 0
      %2222 = vmatprep.subr.bf16.mxu0 0
      %2223 = vmatpush1.bf16.msra.mxu0 0
      %2224 = vmatprep.subr.bf16.mxu0 0
      %2225 = vmatpush1.bf16.msra.mxu0 0
      %2226 = vmatprep.subr.bf16.mxu0 0
      %2227 = vmatpush1.bf16.msra.mxu0 0
      %2228 = vmatprep.subr.bf16.mxu0 0
      %2229 = vmatpush1.bf16.msra.mxu0 0
      %2230 = vmatprep.mubr.bf16.mxu0 0
      %2231 = vmatmul.mubr.bf16.gmra.mrb[0].mxu0 %v2005
      %v2232 = vpop.f32.mrb[0].mxu0
      %v2233 = vadd.f32 0.0, %v2232
      %v2234 = vpop.f32.mrb[0].mxu0
      %v2235 = vadd.f32 0.0, %v2234
      %v2236 = vpop.f32.mrb[0].mxu0
      %v2237 = vadd.f32 0.0, %v2236
      %v2238 = vpop.f32.mrb[0].mxu0
      %v2239 = vadd.f32 0.0, %v2238
      %2240 = vdwg.mxu0
      %2241 = vmatprep.subr.bf16.mxu0 %v2137
      %2242 = vmatpush1.bf16.msra.mxu0 %v2136
      %2243 = vmatprep.subr.bf16.mxu0 %v2141
      %2244 = vmatpush1.bf16.msra.mxu0 %v2140
      %2245 = vmatprep.subr.bf16.mxu0 %v2145
      %2246 = vmatpush1.bf16.msra.mxu0 %v2144
      %2247 = vmatprep.subr.bf16.mxu0 %v2149
      %2248 = vmatpush1.bf16.msra.mxu0 %v2148
      %2249 = vmatprep.subr.bf16.mxu0 %v2153
      %2250 = vmatpush1.bf16.msra.mxu0 %v2152
      %2251 = vmatprep.subr.bf16.mxu0 %v2157
      %2252 = vmatpush1.bf16.msra.mxu0 %v2156
      %2253 = vmatprep.subr.bf16.mxu0 %v2161
      %2254 = vmatpush1.bf16.msra.mxu0 %v2160
      %2255 = vmatprep.subr.bf16.mxu0 %v2165
      %2256 = vmatpush1.bf16.msra.mxu0 %v2164
      %2257 = vmatprep.subr.bf16.mxu0 0
      %2258 = vmatpush1.bf16.msra.mxu0 0
      %2259 = vmatprep.subr.bf16.mxu0 0
      %2260 = vmatpush1.bf16.msra.mxu0 0
      %2261 = vmatprep.subr.bf16.mxu0 0
      %2262 = vmatpush1.bf16.msra.mxu0 0
      %2263 = vmatprep.subr.bf16.mxu0 0
      %2264 = vmatpush1.bf16.msra.mxu0 0
      %2265 = vmatprep.subr.bf16.mxu0 0
      %2266 = vmatpush1.bf16.msra.mxu0 0
      %2267 = vmatprep.subr.bf16.mxu0 0
      %2268 = vmatpush1.bf16.msra.mxu0 0
      %2269 = vmatprep.subr.bf16.mxu0 0
      %2270 = vmatpush1.bf16.msra.mxu0 0
      %2271 = vmatprep.subr.bf16.mxu0 0
      %2272 = vmatpush1.bf16.msra.mxu0 0
      %2273 = vmatprep.mubr.bf16.mxu0 0
      %2274 = vmatmul.mubr.bf16.gmra.mrb[0].mxu0 %v2005
      %v2275 = vpop.f32.mrb[0].mxu0
      %v2276 = vadd.f32 0.0, %v2275
      %v2277 = vpop.f32.mrb[0].mxu0
      %v2278 = vadd.f32 0.0, %v2277
      %v2279 = vpop.f32.mrb[0].mxu0
      %v2280 = vadd.f32 0.0, %v2279
      %v2281 = vpop.f32.mrb[0].mxu0
      %v2282 = vadd.f32 0.0, %v2281
      %2283 = vdwg.mxu0
      %v2284 = vadd.f32 %v1997, %v2233
      %v2285 = vadd.f32 %v1998, %v2235
      %v2286 = vadd.f32 %v1999, %v2276
      %v2287 = vadd.f32 %v2000, %v2278
      %v2288 = vadd.f32 %v2001, %v2237
      %v2289 = vadd.f32 %v2002, %v2239
      %v2290 = vadd.f32 %v2003, %v2280
      %v2291 = vadd.f32 %v2004, %v2282
      %v2292 = vmul.f32 %v2284, 0.5
      %v2293 = vmul.f32 %v2288, 0.5
      %v2294 = vtanh.pop %v2292
      %v2295 = vtanh.pop %v2293
      %v2296 = vmul.f32 %v2294, 0.5
      %v2297 = vmul.f32 %v2295, 0.5
      %v2298 = vadd.f32 %v2296, 0.5
      %v2299 = vadd.f32 %v2297, 0.5
      %v2300 = vmul.f32 %v2285, 0.5
      %v2301 = vmul.f32 %v2289, 0.5
      %v2302 = vtanh.pop %v2300
      %v2303 = vtanh.pop %v2301
      %v2304 = vmul.f32 %v2302, 0.5
      %v2305 = vmul.f32 %v2303, 0.5
      %v2306 = vadd.f32 %v2304, 0.5
      %v2307 = vadd.f32 %v2305, 0.5
      %v2308 = vtanh.pop %v2286
      %v2309 = vtanh.pop %v2290
      %v2310 = vmul.f32 %v2287, 0.5
      %v2311 = vmul.f32 %v2291, 0.5
      %v2312 = vtanh.pop %v2310
      %v2313 = vtanh.pop %v2311
      %v2314 = vmul.f32 %v2312, 0.5
      %v2315 = vmul.f32 %v2313, 0.5
      %v2316 = vadd.f32 %v2314, 0.5
      %v2317 = vadd.f32 %v2315, 0.5
      %v2318 = vmul.f32 %v2306, %v1985
      %v2319 = vmul.f32 %v2307, %v1986
      %v2320 = vmul.f32 %v2298, %v2308
      %v2321 = vmul.f32 %v2299, %v2309
      %v2322 = vadd.f32 %v2318, %v2320
      %v2323 = vadd.f32 %v2319, %v2321
      %v2324 = vtanh.pop %v2322
      %v2325 = vtanh.pop %v2323
      %v2326 = vmul.f32 %v2316, %v2324
      %v2327 = vmul.f32 %v2317, %v2325
      // Predicated region
      $region124: #{_lambda_.1} parent=39 // pred_check
        %p2328 = pneg %p1655
      $region125: #{_lambda_.1} parent=39 // pred_check_branch
        %2330 = sbr.rel (%p2328) target = $region127
      $region126: #{_lambda_.1} parent=39 // pred_region
        %v2331 = vpack.c.bf16 %v2327, %v2326
        %s2332 = scalar_lea.vmem [#allocation4], 8
        %2333 = vst [vmem:[%s2332] sm:$0xff] %v2331
      $region127: #{_lambda_.1} parent=39 // pred_fallthru
        _
      %s2334 = scalar_lea.vmem [#allocation5], 128
      %v2335 = vld [vmem:[%s2334] sm:$0xff]
      %v2336 = vld [vmem:[%s2334 + $0x8] sm:$0xff]
      %v2337 = vld [vmem:[%s2334 + $0x10] sm:$0xff]
      %v2338 = vld [vmem:[%s2334 + $0x18] sm:$0xff]
      %v2339 = vld [vmem:[%s2334 + $0x20] sm:$0xff]
      %v2340 = vld [vmem:[%s2334 + $0x28] sm:$0xff]
      %v2341 = vld [vmem:[%s2334 + $0x30] sm:$0xff]
      %v2342 = vld [vmem:[%s2334 + $0x38] sm:$0xff]
      %v2343 = vpack.c.bf16 %v2327, %v2326
      %v2344 = vld [vmem:[%s385] sm:$0xff]
      %v2345 = vld [vmem:[%s385 + $0x8] sm:$0xff]
      %v2346 = vld [vmem:[%s385 + $0x10] sm:$0xff]
      %v2347 = vld [vmem:[%s385 + $0x18] sm:$0xff]
      %v2348 = vld [vmem:[%s385 + $0x20] sm:$0xff]
      %v2349 = vld [vmem:[%s385 + $0x28] sm:$0xff]
      %v2350 = vld [vmem:[%s385 + $0x30] sm:$0xff]
      %v2351 = vld [vmem:[%s385 + $0x38] sm:$0xff]
      %v2352 = vld [vmem:[%s385 + $0x40] sm:$0xff]
      %v2353 = vld [vmem:[%s385 + $0x48] sm:$0xff]
      %v2354 = vld [vmem:[%s385 + $0x50] sm:$0xff]
      %v2355 = vld [vmem:[%s385 + $0x58] sm:$0xff]
      %v2356 = vld [vmem:[%s385 + $0x60] sm:$0xff]
      %v2357 = vld [vmem:[%s385 + $0x68] sm:$0xff]
      %v2358 = vld [vmem:[%s385 + $0x70] sm:$0xff]
      %v2359 = vld [vmem:[%s385 + $0x78] sm:$0xff]
      %v2360 = vld [vmem:[%s385 + $0x80] sm:$0xff]
      %v2361 = vld [vmem:[%s385 + $0x88] sm:$0xff]
      %v2362 = vld [vmem:[%s385 + $0x90] sm:$0xff]
      %v2363 = vld [vmem:[%s385 + $0x98] sm:$0xff]
      %v2364 = vld [vmem:[%s385 + $0xa0] sm:$0xff]
      %v2365 = vld [vmem:[%s385 + $0xa8] sm:$0xff]
      %v2366 = vld [vmem:[%s385 + $0xb0] sm:$0xff]
      %v2367 = vld [vmem:[%s385 + $0xb8] sm:$0xff]
      %v2368 = vld [vmem:[%s385 + $0xc0] sm:$0xff]
      %v2369 = vld [vmem:[%s385 + $0xc8] sm:$0xff]
      %v2370 = vld [vmem:[%s385 + $0xd0] sm:$0xff]
      %v2371 = vld [vmem:[%s385 + $0xd8] sm:$0xff]
      %v2372 = vld [vmem:[%s385 + $0xe0] sm:$0xff]
      %v2373 = vld [vmem:[%s385 + $0xe8] sm:$0xff]
      %v2374 = vld [vmem:[%s385 + $0xf0] sm:$0xff]
      %v2375 = vld [vmem:[%s385 + $0xf8] sm:$0xff]
      %v2408 = vunpack.c.l.b16 %v2344
      %v2409 = vunpack.c.h.b16 %v2344
      %v2410 = vunpack.c.l.b16 %v2345
      %v2411 = vunpack.c.h.b16 %v2345
      %v2412 = vunpack.c.l.b16 %v2346
      %v2413 = vunpack.c.h.b16 %v2346
      %v2414 = vunpack.c.l.b16 %v2347
      %v2415 = vunpack.c.h.b16 %v2347
      %v2416 = vunpack.c.l.b16 %v2348
      %v2417 = vunpack.c.h.b16 %v2348
      %v2418 = vunpack.c.l.b16 %v2349
      %v2419 = vunpack.c.h.b16 %v2349
      %v2420 = vunpack.c.l.b16 %v2350
      %v2421 = vunpack.c.h.b16 %v2350
      %v2422 = vunpack.c.l.b16 %v2351
      %v2423 = vunpack.c.h.b16 %v2351
      %v2424 = vunpack.c.l.b16 %v2352
      %v2425 = vunpack.c.h.b16 %v2352
      %v2426 = vunpack.c.l.b16 %v2353
      %v2427 = vunpack.c.h.b16 %v2353
      %v2428 = vunpack.c.l.b16 %v2354
      %v2429 = vunpack.c.h.b16 %v2354
      %v2430 = vunpack.c.l.b16 %v2355
      %v2431 = vunpack.c.h.b16 %v2355
      %v2432 = vunpack.c.l.b16 %v2356
      %v2433 = vunpack.c.h.b16 %v2356
      %v2434 = vunpack.c.l.b16 %v2357
      %v2435 = vunpack.c.h.b16 %v2357
      %v2436 = vunpack.c.l.b16 %v2358
      %v2437 = vunpack.c.h.b16 %v2358
      %v2438 = vunpack.c.l.b16 %v2359
      %v2439 = vunpack.c.h.b16 %v2359
      %v2440 = vunpack.c.l.b16 %v2360
      %v2441 = vunpack.c.h.b16 %v2360
      %v2442 = vunpack.c.l.b16 %v2361
      %v2443 = vunpack.c.h.b16 %v2361
      %v2444 = vunpack.c.l.b16 %v2362
      %v2445 = vunpack.c.h.b16 %v2362
      %v2446 = vunpack.c.l.b16 %v2363
      %v2447 = vunpack.c.h.b16 %v2363
      %v2448 = vunpack.c.l.b16 %v2364
      %v2449 = vunpack.c.h.b16 %v2364
      %v2450 = vunpack.c.l.b16 %v2365
      %v2451 = vunpack.c.h.b16 %v2365
      %v2452 = vunpack.c.l.b16 %v2366
      %v2453 = vunpack.c.h.b16 %v2366
      %v2454 = vunpack.c.l.b16 %v2367
      %v2455 = vunpack.c.h.b16 %v2367
      %v2456 = vunpack.c.l.b16 %v2368
      %v2457 = vunpack.c.h.b16 %v2368
      %v2458 = vunpack.c.l.b16 %v2369
      %v2459 = vunpack.c.h.b16 %v2369
      %v2460 = vunpack.c.l.b16 %v2370
      %v2461 = vunpack.c.h.b16 %v2370
      %v2462 = vunpack.c.l.b16 %v2371
      %v2463 = vunpack.c.h.b16 %v2371
      %v2464 = vunpack.c.l.b16 %v2372
      %v2465 = vunpack.c.h.b16 %v2372
      %v2466 = vunpack.c.l.b16 %v2373
      %v2467 = vunpack.c.h.b16 %v2373
      %v2468 = vunpack.c.l.b16 %v2374
      %v2469 = vunpack.c.h.b16 %v2374
      %v2470 = vunpack.c.l.b16 %v2375
      %v2471 = vunpack.c.h.b16 %v2375
      %v2472 = vpack.c.b16 %v2412, %v2408
      %v2473 = vpack.c.b16 %v2413, %v2409
      %v2474 = vpack.c.b16 %v2414, %v2410
      %v2475 = vpack.c.b16 %v2415, %v2411
      %v2476 = vpack.c.b16 %v2420, %v2416
      %v2477 = vpack.c.b16 %v2421, %v2417
      %v2478 = vpack.c.b16 %v2422, %v2418
      %v2479 = vpack.c.b16 %v2423, %v2419
      %v2480 = vpack.c.b16 %v2428, %v2424
      %v2481 = vpack.c.b16 %v2429, %v2425
      %v2482 = vpack.c.b16 %v2430, %v2426
      %v2483 = vpack.c.b16 %v2431, %v2427
      %v2484 = vpack.c.b16 %v2436, %v2432
      %v2485 = vpack.c.b16 %v2437, %v2433
      %v2486 = vpack.c.b16 %v2438, %v2434
      %v2487 = vpack.c.b16 %v2439, %v2435
      %v2488 = vpack.c.b16 %v2444, %v2440
      %v2489 = vpack.c.b16 %v2445, %v2441
      %v2490 = vpack.c.b16 %v2446, %v2442
      %v2491 = vpack.c.b16 %v2447, %v2443
      %v2492 = vpack.c.b16 %v2452, %v2448
      %v2493 = vpack.c.b16 %v2453, %v2449
      %v2494 = vpack.c.b16 %v2454, %v2450
      %v2495 = vpack.c.b16 %v2455, %v2451
      %v2496 = vpack.c.b16 %v2460, %v2456
      %v2497 = vpack.c.b16 %v2461, %v2457
      %v2498 = vpack.c.b16 %v2462, %v2458
      %v2499 = vpack.c.b16 %v2463, %v2459
      %v2500 = vpack.c.b16 %v2468, %v2464
      %v2501 = vpack.c.b16 %v2469, %v2465
      %v2502 = vpack.c.b16 %v2470, %v2466
      %v2503 = vpack.c.b16 %v2471, %v2467
      %2536 = vmatprep.subr.bf16.mxu0 %v2473
      %2537 = vmatpush1.bf16.msra.mxu0 %v2472
      %2538 = vmatprep.subr.bf16.mxu0 %v2477
      %2539 = vmatpush1.bf16.msra.mxu0 %v2476
      %2540 = vmatprep.subr.bf16.mxu0 %v2481
      %2541 = vmatpush1.bf16.msra.mxu0 %v2480
      %2542 = vmatprep.subr.bf16.mxu0 %v2485
      %2543 = vmatpush1.bf16.msra.mxu0 %v2484
      %2544 = vmatprep.subr.bf16.mxu0 %v2489
      %2545 = vmatpush1.bf16.msra.mxu0 %v2488
      %2546 = vmatprep.subr.bf16.mxu0 %v2493
      %2547 = vmatpush1.bf16.msra.mxu0 %v2492
      %2548 = vmatprep.subr.bf16.mxu0 %v2497
      %2549 = vmatpush1.bf16.msra.mxu0 %v2496
      %2550 = vmatprep.subr.bf16.mxu0 %v2501
      %2551 = vmatpush1.bf16.msra.mxu0 %v2500
      %2552 = vmatprep.subr.bf16.mxu0 0
      %2553 = vmatpush1.bf16.msra.mxu0 0
      %2554 = vmatprep.subr.bf16.mxu0 0
      %2555 = vmatpush1.bf16.msra.mxu0 0
      %2556 = vmatprep.subr.bf16.mxu0 0
      %2557 = vmatpush1.bf16.msra.mxu0 0
      %2558 = vmatprep.subr.bf16.mxu0 0
      %2559 = vmatpush1.bf16.msra.mxu0 0
      %2560 = vmatprep.subr.bf16.mxu0 0
      %2561 = vmatpush1.bf16.msra.mxu0 0
      %2562 = vmatprep.subr.bf16.mxu0 0
      %2563 = vmatpush1.bf16.msra.mxu0 0
      %2564 = vmatprep.subr.bf16.mxu0 0
      %2565 = vmatpush1.bf16.msra.mxu0 0
      %2566 = vmatprep.subr.bf16.mxu0 0
      %2567 = vmatpush1.bf16.msra.mxu0 0
      %2568 = vmatprep.mubr.bf16.mxu0 0
      %2569 = vmatmul.mubr.bf16.gmra.mrb[0].mxu0 %v2343
      %v2570 = vpop.f32.mrb[0].mxu0
      %v2571 = vadd.f32 0.0, %v2570
      %v2572 = vpop.f32.mrb[0].mxu0
      %v2573 = vadd.f32 0.0, %v2572
      %v2574 = vpop.f32.mrb[0].mxu0
      %v2575 = vadd.f32 0.0, %v2574
      %v2576 = vpop.f32.mrb[0].mxu0
      %v2577 = vadd.f32 0.0, %v2576
      %2578 = vdwg.mxu0
      %2579 = vmatprep.subr.bf16.mxu0 %v2475
      %2580 = vmatpush1.bf16.msra.mxu0 %v2474
      %2581 = vmatprep.subr.bf16.mxu0 %v2479
      %2582 = vmatpush1.bf16.msra.mxu0 %v2478
      %2583 = vmatprep.subr.bf16.mxu0 %v2483
      %2584 = vmatpush1.bf16.msra.mxu0 %v2482
      %2585 = vmatprep.subr.bf16.mxu0 %v2487
      %2586 = vmatpush1.bf16.msra.mxu0 %v2486
      %2587 = vmatprep.subr.bf16.mxu0 %v2491
      %2588 = vmatpush1.bf16.msra.mxu0 %v2490
      %2589 = vmatprep.subr.bf16.mxu0 %v2495
      %2590 = vmatpush1.bf16.msra.mxu0 %v2494
      %2591 = vmatprep.subr.bf16.mxu0 %v2499
      %2592 = vmatpush1.bf16.msra.mxu0 %v2498
      %2593 = vmatprep.subr.bf16.mxu0 %v2503
      %2594 = vmatpush1.bf16.msra.mxu0 %v2502
      %2595 = vmatprep.subr.bf16.mxu0 0
      %2596 = vmatpush1.bf16.msra.mxu0 0
      %2597 = vmatprep.subr.bf16.mxu0 0
      %2598 = vmatpush1.bf16.msra.mxu0 0
      %2599 = vmatprep.subr.bf16.mxu0 0
      %2600 = vmatpush1.bf16.msra.mxu0 0
      %2601 = vmatprep.subr.bf16.mxu0 0
      %2602 = vmatpush1.bf16.msra.mxu0 0
      %2603 = vmatprep.subr.bf16.mxu0 0
      %2604 = vmatpush1.bf16.msra.mxu0 0
      %2605 = vmatprep.subr.bf16.mxu0 0
      %2606 = vmatpush1.bf16.msra.mxu0 0
      %2607 = vmatprep.subr.bf16.mxu0 0
      %2608 = vmatpush1.bf16.msra.mxu0 0
      %2609 = vmatprep.subr.bf16.mxu0 0
      %2610 = vmatpush1.bf16.msra.mxu0 0
      %2611 = vmatprep.mubr.bf16.mxu0 0
      %2612 = vmatmul.mubr.bf16.gmra.mrb[0].mxu0 %v2343
      %v2613 = vpop.f32.mrb[0].mxu0
      %v2614 = vadd.f32 0.0, %v2613
      %v2615 = vpop.f32.mrb[0].mxu0
      %v2616 = vadd.f32 0.0, %v2615
      %v2617 = vpop.f32.mrb[0].mxu0
      %v2618 = vadd.f32 0.0, %v2617
      %v2619 = vpop.f32.mrb[0].mxu0
      %v2620 = vadd.f32 0.0, %v2619
      %2621 = vdwg.mxu0
      %v2622 = vadd.f32 %v2335, %v2571
      %v2623 = vadd.f32 %v2336, %v2573
      %v2624 = vadd.f32 %v2337, %v2614
      %v2625 = vadd.f32 %v2338, %v2616
      %v2626 = vadd.f32 %v2339, %v2575
      %v2627 = vadd.f32 %v2340, %v2577
      %v2628 = vadd.f32 %v2341, %v2618
      %v2629 = vadd.f32 %v2342, %v2620
      %v2630 = vmul.f32 %v2622, 0.5
      %v2631 = vmul.f32 %v2626, 0.5
      %v2632 = vtanh.pop %v2630
      %v2633 = vtanh.pop %v2631
      %v2634 = vmul.f32 %v2632, 0.5
      %v2635 = vmul.f32 %v2633, 0.5
      %v2636 = vadd.f32 %v2634, 0.5
      %v2637 = vadd.f32 %v2635, 0.5
      %v2638 = vmul.f32 %v2623, 0.5
      %v2639 = vmul.f32 %v2627, 0.5
      %v2640 = vtanh.pop %v2638
      %v2641 = vtanh.pop %v2639
      %v2642 = vmul.f32 %v2640, 0.5
      %v2643 = vmul.f32 %v2641, 0.5
      %v2644 = vadd.f32 %v2642, 0.5
      %v2645 = vadd.f32 %v2643, 0.5
      %v2646 = vtanh.pop %v2624
      %v2647 = vtanh.pop %v2628
      %v2648 = vmul.f32 %v2625, 0.5
      %v2649 = vmul.f32 %v2629, 0.5
      %v2650 = vtanh.pop %v2648
      %v2651 = vtanh.pop %v2649
      %v2652 = vmul.f32 %v2650, 0.5
      %v2653 = vmul.f32 %v2651, 0.5
      %v2654 = vadd.f32 %v2652, 0.5
      %v2655 = vadd.f32 %v2653, 0.5
      %v2656 = vmul.f32 %v2644, %v2322
      %v2657 = vmul.f32 %v2645, %v2323
      %v2658 = vmul.f32 %v2636, %v2646
      %v2659 = vmul.f32 %v2637, %v2647
      %v2660 = vadd.f32 %v2656, %v2658
      %v2661 = vadd.f32 %v2657, %v2659
      %v2662 = vtanh.pop %v2660
      %v2663 = vtanh.pop %v2661
      %v2664 = vmul.f32 %v2654, %v2662
      %v2665 = vmul.f32 %v2655, %v2663
      // Predicated region
      $region128: #{_lambda_.1} parent=39 // pred_check
        %p2666 = pneg %p1655
      $region129: #{_lambda_.1} parent=39 // pred_check_branch
        %2668 = sbr.rel (%p2666) target = $region131
      $region130: #{_lambda_.1} parent=39 // pred_region
        %v2669 = vpack.c.bf16 %v2665, %v2664
        %s2670 = scalar_lea.vmem [#allocation4], 16
        %2671 = vst [vmem:[%s2670] sm:$0xff] %v2669
      $region131: #{_lambda_.1} parent=39 // pred_fallthru
        _
      %s2672 = scalar_lea.vmem [#allocation5], 192
      %v2673 = vld [vmem:[%s2672] sm:$0xff]
      %v2674 = vld [vmem:[%s2672 + $0x8] sm:$0xff]
      %v2675 = vld [vmem:[%s2672 + $0x10] sm:$0xff]
      %v2676 = vld [vmem:[%s2672 + $0x18] sm:$0xff]
      %v2677 = vld [vmem:[%s2672 + $0x20] sm:$0xff]
      %v2678 = vld [vmem:[%s2672 + $0x28] sm:$0xff]
      %v2679 = vld [vmem:[%s2672 + $0x30] sm:$0xff]
      %v2680 = vld [vmem:[%s2672 + $0x38] sm:$0xff]
      %v2681 = vpack.c.bf16 %v2665, %v2664
      %v2682 = vld [vmem:[%s385] sm:$0xff]
      %v2683 = vld [vmem:[%s385 + $0x8] sm:$0xff]
      %v2684 = vld [vmem:[%s385 + $0x10] sm:$0xff]
      %v2685 = vld [vmem:[%s385 + $0x18] sm:$0xff]
      %v2686 = vld [vmem:[%s385 + $0x20] sm:$0xff]
      %v2687 = vld [vmem:[%s385 + $0x28] sm:$0xff]
      %v2688 = vld [vmem:[%s385 + $0x30] sm:$0xff]
      %v2689 = vld [vmem:[%s385 + $0x38] sm:$0xff]
      %v2690 = vld [vmem:[%s385 + $0x40] sm:$0xff]
      %v2691 = vld [vmem:[%s385 + $0x48] sm:$0xff]
      %v2692 = vld [vmem:[%s385 + $0x50] sm:$0xff]
      %v2693 = vld [vmem:[%s385 + $0x58] sm:$0xff]
      %v2694 = vld [vmem:[%s385 + $0x60] sm:$0xff]
      %v2695 = vld [vmem:[%s385 + $0x68] sm:$0xff]
      %v2696 = vld [vmem:[%s385 + $0x70] sm:$0xff]
      %v2697 = vld [vmem:[%s385 + $0x78] sm:$0xff]
      %v2698 = vld [vmem:[%s385 + $0x80] sm:$0xff]
      %v2699 = vld [vmem:[%s385 + $0x88] sm:$0xff]
      %v2700 = vld [vmem:[%s385 + $0x90] sm:$0xff]
      %v2701 = vld [vmem:[%s385 + $0x98] sm:$0xff]
      %v2702 = vld [vmem:[%s385 + $0xa0] sm:$0xff]
      %v2703 = vld [vmem:[%s385 + $0xa8] sm:$0xff]
      %v2704 = vld [vmem:[%s385 + $0xb0] sm:$0xff]
      %v2705 = vld [vmem:[%s385 + $0xb8] sm:$0xff]
      %v2706 = vld [vmem:[%s385 + $0xc0] sm:$0xff]
      %v2707 = vld [vmem:[%s385 + $0xc8] sm:$0xff]
      %v2708 = vld [vmem:[%s385 + $0xd0] sm:$0xff]
      %v2709 = vld [vmem:[%s385 + $0xd8] sm:$0xff]
      %v2710 = vld [vmem:[%s385 + $0xe0] sm:$0xff]
      %v2711 = vld [vmem:[%s385 + $0xe8] sm:$0xff]
      %v2712 = vld [vmem:[%s385 + $0xf0] sm:$0xff]
      %v2713 = vld [vmem:[%s385 + $0xf8] sm:$0xff]
      %v2746 = vunpack.c.l.b16 %v2682
      %v2747 = vunpack.c.h.b16 %v2682
      %v2748 = vunpack.c.l.b16 %v2683
      %v2749 = vunpack.c.h.b16 %v2683
      %v2750 = vunpack.c.l.b16 %v2684
      %v2751 = vunpack.c.h.b16 %v2684
      %v2752 = vunpack.c.l.b16 %v2685
      %v2753 = vunpack.c.h.b16 %v2685
      %v2754 = vunpack.c.l.b16 %v2686
      %v2755 = vunpack.c.h.b16 %v2686
      %v2756 = vunpack.c.l.b16 %v2687
      %v2757 = vunpack.c.h.b16 %v2687
      %v2758 = vunpack.c.l.b16 %v2688
      %v2759 = vunpack.c.h.b16 %v2688
      %v2760 = vunpack.c.l.b16 %v2689
      %v2761 = vunpack.c.h.b16 %v2689
      %v2762 = vunpack.c.l.b16 %v2690
      %v2763 = vunpack.c.h.b16 %v2690
      %v2764 = vunpack.c.l.b16 %v2691
      %v2765 = vunpack.c.h.b16 %v2691
      %v2766 = vunpack.c.l.b16 %v2692
      %v2767 = vunpack.c.h.b16 %v2692
      %v2768 = vunpack.c.l.b16 %v2693
      %v2769 = vunpack.c.h.b16 %v2693
      %v2770 = vunpack.c.l.b16 %v2694
      %v2771 = vunpack.c.h.b16 %v2694
      %v2772 = vunpack.c.l.b16 %v2695
      %v2773 = vunpack.c.h.b16 %v2695
      %v2774 = vunpack.c.l.b16 %v2696
      %v2775 = vunpack.c.h.b16 %v2696
      %v2776 = vunpack.c.l.b16 %v2697
      %v2777 = vunpack.c.h.b16 %v2697
      %v2778 = vunpack.c.l.b16 %v2698
      %v2779 = vunpack.c.h.b16 %v2698
      %v2780 = vunpack.c.l.b16 %v2699
      %v2781 = vunpack.c.h.b16 %v2699
      %v2782 = vunpack.c.l.b16 %v2700
      %v2783 = vunpack.c.h.b16 %v2700
      %v2784 = vunpack.c.l.b16 %v2701
      %v2785 = vunpack.c.h.b16 %v2701
      %v2786 = vunpack.c.l.b16 %v2702
      %v2787 = vunpack.c.h.b16 %v2702
      %v2788 = vunpack.c.l.b16 %v2703
      %v2789 = vunpack.c.h.b16 %v2703
      %v2790 = vunpack.c.l.b16 %v2704
      %v2791 = vunpack.c.h.b16 %v2704
      %v2792 = vunpack.c.l.b16 %v2705
      %v2793 = vunpack.c.h.b16 %v2705
      %v2794 = vunpack.c.l.b16 %v2706
      %v2795 = vunpack.c.h.b16 %v2706
      %v2796 = vunpack.c.l.b16 %v2707
      %v2797 = vunpack.c.h.b16 %v2707
      %v2798 = vunpack.c.l.b16 %v2708
      %v2799 = vunpack.c.h.b16 %v2708
      %v2800 = vunpack.c.l.b16 %v2709
      %v2801 = vunpack.c.h.b16 %v2709
      %v2802 = vunpack.c.l.b16 %v2710
      %v2803 = vunpack.c.h.b16 %v2710
      %v2804 = vunpack.c.l.b16 %v2711
      %v2805 = vunpack.c.h.b16 %v2711
      %v2806 = vunpack.c.l.b16 %v2712
      %v2807 = vunpack.c.h.b16 %v2712
      %v2808 = vunpack.c.l.b16 %v2713
      %v2809 = vunpack.c.h.b16 %v2713
      %v2810 = vpack.c.b16 %v2750, %v2746
      %v2811 = vpack.c.b16 %v2751, %v2747
      %v2812 = vpack.c.b16 %v2752, %v2748
      %v2813 = vpack.c.b16 %v2753, %v2749
      %v2814 = vpack.c.b16 %v2758, %v2754
      %v2815 = vpack.c.b16 %v2759, %v2755
      %v2816 = vpack.c.b16 %v2760, %v2756
      %v2817 = vpack.c.b16 %v2761, %v2757
      %v2818 = vpack.c.b16 %v2766, %v2762
      %v2819 = vpack.c.b16 %v2767, %v2763
      %v2820 = vpack.c.b16 %v2768, %v2764
      %v2821 = vpack.c.b16 %v2769, %v2765
      %v2822 = vpack.c.b16 %v2774, %v2770
      %v2823 = vpack.c.b16 %v2775, %v2771
      %v2824 = vpack.c.b16 %v2776, %v2772
      %v2825 = vpack.c.b16 %v2777, %v2773
      %v2826 = vpack.c.b16 %v2782, %v2778
      %v2827 = vpack.c.b16 %v2783, %v2779
      %v2828 = vpack.c.b16 %v2784, %v2780
      %v2829 = vpack.c.b16 %v2785, %v2781
      %v2830 = vpack.c.b16 %v2790, %v2786
      %v2831 = vpack.c.b16 %v2791, %v2787
      %v2832 = vpack.c.b16 %v2792, %v2788
      %v2833 = vpack.c.b16 %v2793, %v2789
      %v2834 = vpack.c.b16 %v2798, %v2794
      %v2835 = vpack.c.b16 %v2799, %v2795
      %v2836 = vpack.c.b16 %v2800, %v2796
      %v2837 = vpack.c.b16 %v2801, %v2797
      %v2838 = vpack.c.b16 %v2806, %v2802
      %v2839 = vpack.c.b16 %v2807, %v2803
      %v2840 = vpack.c.b16 %v2808, %v2804
      %v2841 = vpack.c.b16 %v2809, %v2805
      %2874 = vmatprep.subr.bf16.mxu0 %v2811
      %2875 = vmatpush1.bf16.msra.mxu0 %v2810
      %2876 = vmatprep.subr.bf16.mxu0 %v2815
      %2877 = vmatpush1.bf16.msra.mxu0 %v2814
      %2878 = vmatprep.subr.bf16.mxu0 %v2819
      %2879 = vmatpush1.bf16.msra.mxu0 %v2818
      %2880 = vmatprep.subr.bf16.mxu0 %v2823
      %2881 = vmatpush1.bf16.msra.mxu0 %v2822
      %2882 = vmatprep.subr.bf16.mxu0 %v2827
      %2883 = vmatpush1.bf16.msra.mxu0 %v2826
      %2884 = vmatprep.subr.bf16.mxu0 %v2831
      %2885 = vmatpush1.bf16.msra.mxu0 %v2830
      %2886 = vmatprep.subr.bf16.mxu0 %v2835
      %2887 = vmatpush1.bf16.msra.mxu0 %v2834
      %2888 = vmatprep.subr.bf16.mxu0 %v2839
      %2889 = vmatpush1.bf16.msra.mxu0 %v2838
      %2890 = vmatprep.subr.bf16.mxu0 0
      %2891 = vmatpush1.bf16.msra.mxu0 0
      %2892 = vmatprep.subr.bf16.mxu0 0
      %2893 = vmatpush1.bf16.msra.mxu0 0
      %2894 = vmatprep.subr.bf16.mxu0 0
      %2895 = vmatpush1.bf16.msra.mxu0 0
      %2896 = vmatprep.subr.bf16.mxu0 0
      %2897 = vmatpush1.bf16.msra.mxu0 0
      %2898 = vmatprep.subr.bf16.mxu0 0
      %2899 = vmatpush1.bf16.msra.mxu0 0
      %2900 = vmatprep.subr.bf16.mxu0 0
      %2901 = vmatpush1.bf16.msra.mxu0 0
      %2902 = vmatprep.subr.bf16.mxu0 0
      %2903 = vmatpush1.bf16.msra.mxu0 0
      %2904 = vmatprep.subr.bf16.mxu0 0
      %2905 = vmatpush1.bf16.msra.mxu0 0
      %2906 = vmatprep.mubr.bf16.mxu0 0
      %2907 = vmatmul.mubr.bf16.gmra.mrb[0].mxu0 %v2681
      %v2908 = vpop.f32.mrb[0].mxu0
      %v2909 = vadd.f32 0.0, %v2908
      %v2910 = vpop.f32.mrb[0].mxu0
      %v2911 = vadd.f32 0.0, %v2910
      %v2912 = vpop.f32.mrb[0].mxu0
      %v2913 = vadd.f32 0.0, %v2912
      %v2914 = vpop.f32.mrb[0].mxu0
      %v2915 = vadd.f32 0.0, %v2914
      %2916 = vdwg.mxu0
      %2917 = vmatprep.subr.bf16.mxu0 %v2813
      %2918 = vmatpush1.bf16.msra.mxu0 %v2812
      %2919 = vmatprep.subr.bf16.mxu0 %v2817
      %2920 = vmatpush1.bf16.msra.mxu0 %v2816
      %2921 = vmatprep.subr.bf16.mxu0 %v2821
      %2922 = vmatpush1.bf16.msra.mxu0 %v2820
      %2923 = vmatprep.subr.bf16.mxu0 %v2825
      %2924 = vmatpush1.bf16.msra.mxu0 %v2824
      %2925 = vmatprep.subr.bf16.mxu0 %v2829
      %2926 = vmatpush1.bf16.msra.mxu0 %v2828
      %2927 = vmatprep.subr.bf16.mxu0 %v2833
      %2928 = vmatpush1.bf16.msra.mxu0 %v2832
      %2929 = vmatprep.subr.bf16.mxu0 %v2837
      %2930 = vmatpush1.bf16.msra.mxu0 %v2836
      %2931 = vmatprep.subr.bf16.mxu0 %v2841
      %2932 = vmatpush1.bf16.msra.mxu0 %v2840
      %2933 = vmatprep.subr.bf16.mxu0 0
      %2934 = vmatpush1.bf16.msra.mxu0 0
      %2935 = vmatprep.subr.bf16.mxu0 0
      %2936 = vmatpush1.bf16.msra.mxu0 0
      %2937 = vmatprep.subr.bf16.mxu0 0
      %2938 = vmatpush1.bf16.msra.mxu0 0
      %2939 = vmatprep.subr.bf16.mxu0 0
      %2940 = vmatpush1.bf16.msra.mxu0 0
      %2941 = vmatprep.subr.bf16.mxu0 0
      %2942 = vmatpush1.bf16.msra.mxu0 0
      %2943 = vmatprep.subr.bf16.mxu0 0
      %2944 = vmatpush1.bf16.msra.mxu0 0
      %2945 = vmatprep.subr.bf16.mxu0 0
      %2946 = vmatpush1.bf16.msra.mxu0 0
      %2947 = vmatprep.subr.bf16.mxu0 0
      %2948 = vmatpush1.bf16.msra.mxu0 0
      %2949 = vmatprep.mubr.bf16.mxu0 0
      %2950 = vmatmul.mubr.bf16.gmra.mrb[0].mxu0 %v2681
      %v2951 = vpop.f32.mrb[0].mxu0
      %v2952 = vadd.f32 0.0, %v2951
      %v2953 = vpop.f32.mrb[0].mxu0
      %v2954 = vadd.f32 0.0, %v2953
      %v2955 = vpop.f32.mrb[0].mxu0
      %v2956 = vadd.f32 0.0, %v2955
      %v2957 = vpop.f32.mrb[0].mxu0
      %v2958 = vadd.f32 0.0, %v2957
      %2959 = vdwg.mxu0
      %v2960 = vadd.f32 %v2673, %v2909
      %v2961 = vadd.f32 %v2674, %v2911
      %v2962 = vadd.f32 %v2675, %v2952
      %v2963 = vadd.f32 %v2676, %v2954
      %v2964 = vadd.f32 %v2677, %v2913
      %v2965 = vadd.f32 %v2678, %v2915
      %v2966 = vadd.f32 %v2679, %v2956
      %v2967 = vadd.f32 %v2680, %v2958
      %v2968 = vmul.f32 %v2960, 0.5
      %v2969 = vmul.f32 %v2964, 0.5
      %v2970 = vtanh.pop %v2968
      %v2971 = vtanh.pop %v2969
      %v2972 = vmul.f32 %v2970, 0.5
      %v2973 = vmul.f32 %v2971, 0.5
      %v2974 = vadd.f32 %v2972, 0.5
      %v2975 = vadd.f32 %v2973, 0.5
      %v2976 = vmul.f32 %v2961, 0.5
      %v2977 = vmul.f32 %v2965, 0.5
      %v2978 = vtanh.pop %v2976
      %v2979 = vtanh.pop %v2977
      %v2980 = vmul.f32 %v2978, 0.5
      %v2981 = vmul.f32 %v2979, 0.5
      %v2982 = vadd.f32 %v2980, 0.5
      %v2983 = vadd.f32 %v2981, 0.5
      %v2984 = vtanh.pop %v2962
      %v2985 = vtanh.pop %v2966
      %v2986 = vmul.f32 %v2963, 0.5
      %v2987 = vmul.f32 %v2967, 0.5
      %v2988 = vtanh.pop %v2986
      %v2989 = vtanh.pop %v2987
      %v2990 = vmul.f32 %v2988, 0.5
      %v2991 = vmul.f32 %v2989, 0.5
      %v2992 = vadd.f32 %v2990, 0.5
      %v2993 = vadd.f32 %v2991, 0.5
      %v2994 = vmul.f32 %v2982, %v2660
      %v2995 = vmul.f32 %v2983, %v2661
      %v2996 = vmul.f32 %v2974, %v2984
      %v2997 = vmul.f32 %v2975, %v2985
      %v2998 = vadd.f32 %v2994, %v2996
      %v2999 = vadd.f32 %v2995, %v2997
      %v3000 = vtanh.pop %v2998
      %v3001 = vtanh.pop %v2999
      %v3002 = vmul.f32 %v2992, %v3000
      %v3003 = vmul.f32 %v2993, %v3001
      // Predicated region
      $region132: #{_lambda_.1} parent=39 // pred_check
        %p3004 = pneg %p1655
      $region133: #{_lambda_.1} parent=39 // pred_check_branch
        %3006 = sbr.rel (%p3004) target = $region135
      $region134: #{_lambda_.1} parent=39 // pred_region
        %v3007 = vpack.c.bf16 %v3003, %v3002
        %s3008 = scalar_lea.vmem [#allocation4], 24
        %3009 = vst [vmem:[%s3008] sm:$0xff] %v3007
      $region135: #{_lambda_.1} parent=39 // pred_fallthru
        _
      %s3010 = scalar_lea.vmem [#allocation5], 256
      %v3011 = vld [vmem:[%s3010] sm:$0xff]
      %v3012 = vld [vmem:[%s3010 + $0x8] sm:$0xff]
      %v3013 = vld [vmem:[%s3010 + $0x10] sm:$0xff]
      %v3014 = vld [vmem:[%s3010 + $0x18] sm:$0xff]
      %v3015 = vld [vmem:[%s3010 + $0x20] sm:$0xff]
      %v3016 = vld [vmem:[%s3010 + $0x28] sm:$0xff]
      %v3017 = vld [vmem:[%s3010 + $0x30] sm:$0xff]
      %v3018 = vld [vmem:[%s3010 + $0x38] sm:$0xff]
      %v3019 = vpack.c.bf16 %v3003, %v3002
      %v3020 = vld [vmem:[%s385] sm:$0xff]
      %v3021 = vld [vmem:[%s385 + $0x8] sm:$0xff]
      %v3022 = vld [vmem:[%s385 + $0x10] sm:$0xff]
      %v3023 = vld [vmem:[%s385 + $0x18] sm:$0xff]
      %v3024 = vld [vmem:[%s385 + $0x20] sm:$0xff]
      %v3025 = vld [vmem:[%s385 + $0x28] sm:$0xff]
      %v3026 = vld [vmem:[%s385 + $0x30] sm:$0xff]
      %v3027 = vld [vmem:[%s385 + $0x38] sm:$0xff]
      %v3028 = vld [vmem:[%s385 + $0x40] sm:$0xff]
      %v3029 = vld [vmem:[%s385 + $0x48] sm:$0xff]
      %v3030 = vld [vmem:[%s385 + $0x50] sm:$0xff]
      %v3031 = vld [vmem:[%s385 + $0x58] sm:$0xff]
      %v3032 = vld [vmem:[%s385 + $0x60] sm:$0xff]
      %v3033 = vld [vmem:[%s385 + $0x68] sm:$0xff]
      %v3034 = vld [vmem:[%s385 + $0x70] sm:$0xff]
      %v3035 = vld [vmem:[%s385 + $0x78] sm:$0xff]
      %v3036 = vld [vmem:[%s385 + $0x80] sm:$0xff]
      %v3037 = vld [vmem:[%s385 + $0x88] sm:$0xff]
      %v3038 = vld [vmem:[%s385 + $0x90] sm:$0xff]
      %v3039 = vld [vmem:[%s385 + $0x98] sm:$0xff]
      %v3040 = vld [vmem:[%s385 + $0xa0] sm:$0xff]
      %v3041 = vld [vmem:[%s385 + $0xa8] sm:$0xff]
      %v3042 = vld [vmem:[%s385 + $0xb0] sm:$0xff]
      %v3043 = vld [vmem:[%s385 + $0xb8] sm:$0xff]
      %v3044 = vld [vmem:[%s385 + $0xc0] sm:$0xff]
      %v3045 = vld [vmem:[%s385 + $0xc8] sm:$0xff]
      %v3046 = vld [vmem:[%s385 + $0xd0] sm:$0xff]
      %v3047 = vld [vmem:[%s385 + $0xd8] sm:$0xff]
      %v3048 = vld [vmem:[%s385 + $0xe0] sm:$0xff]
      %v3049 = vld [vmem:[%s385 + $0xe8] sm:$0xff]
      %v3050 = vld [vmem:[%s385 + $0xf0] sm:$0xff]
      %v3051 = vld [vmem:[%s385 + $0xf8] sm:$0xff]
      %v3084 = vunpack.c.l.b16 %v3020
      %v3085 = vunpack.c.h.b16 %v3020
      %v3086 = vunpack.c.l.b16 %v3021
      %v3087 = vunpack.c.h.b16 %v3021
      %v3088 = vunpack.c.l.b16 %v3022
      %v3089 = vunpack.c.h.b16 %v3022
      %v3090 = vunpack.c.l.b16 %v3023
      %v3091 = vunpack.c.h.b16 %v3023
      %v3092 = vunpack.c.l.b16 %v3024
      %v3093 = vunpack.c.h.b16 %v3024
      %v3094 = vunpack.c.l.b16 %v3025
      %v3095 = vunpack.c.h.b16 %v3025
      %v3096 = vunpack.c.l.b16 %v3026
      %v3097 = vunpack.c.h.b16 %v3026
      %v3098 = vunpack.c.l.b16 %v3027
      %v3099 = vunpack.c.h.b16 %v3027
      %v3100 = vunpack.c.l.b16 %v3028
      %v3101 = vunpack.c.h.b16 %v3028
      %v3102 = vunpack.c.l.b16 %v3029
      %v3103 = vunpack.c.h.b16 %v3029
      %v3104 = vunpack.c.l.b16 %v3030
      %v3105 = vunpack.c.h.b16 %v3030
      %v3106 = vunpack.c.l.b16 %v3031
      %v3107 = vunpack.c.h.b16 %v3031
      %v3108 = vunpack.c.l.b16 %v3032
      %v3109 = vunpack.c.h.b16 %v3032
      %v3110 = vunpack.c.l.b16 %v3033
      %v3111 = vunpack.c.h.b16 %v3033
      %v3112 = vunpack.c.l.b16 %v3034
      %v3113 = vunpack.c.h.b16 %v3034
      %v3114 = vunpack.c.l.b16 %v3035
      %v3115 = vunpack.c.h.b16 %v3035
      %v3116 = vunpack.c.l.b16 %v3036
      %v3117 = vunpack.c.h.b16 %v3036
      %v3118 = vunpack.c.l.b16 %v3037
      %v3119 = vunpack.c.h.b16 %v3037
      %v3120 = vunpack.c.l.b16 %v3038
      %v3121 = vunpack.c.h.b16 %v3038
      %v3122 = vunpack.c.l.b16 %v3039
      %v3123 = vunpack.c.h.b16 %v3039
      %v3124 = vunpack.c.l.b16 %v3040
      %v3125 = vunpack.c.h.b16 %v3040
      %v3126 = vunpack.c.l.b16 %v3041
      %v3127 = vunpack.c.h.b16 %v3041
      %v3128 = vunpack.c.l.b16 %v3042
      %v3129 = vunpack.c.h.b16 %v3042
      %v3130 = vunpack.c.l.b16 %v3043
      %v3131 = vunpack.c.h.b16 %v3043
      %v3132 = vunpack.c.l.b16 %v3044
      %v3133 = vunpack.c.h.b16 %v3044
      %v3134 = vunpack.c.l.b16 %v3045
      %v3135 = vunpack.c.h.b16 %v3045
      %v3136 = vunpack.c.l.b16 %v3046
      %v3137 = vunpack.c.h.b16 %v3046
      %v3138 = vunpack.c.l.b16 %v3047
      %v3139 = vunpack.c.h.b16 %v3047
      %v3140 = vunpack.c.l.b16 %v3048
      %v3141 = vunpack.c.h.b16 %v3048
      %v3142 = vunpack.c.l.b16 %v3049
      %v3143 = vunpack.c.h.b16 %v3049
      %v3144 = vunpack.c.l.b16 %v3050
      %v3145 = vunpack.c.h.b16 %v3050
      %v3146 = vunpack.c.l.b16 %v3051
      %v3147 = vunpack.c.h.b16 %v3051
      %v3148 = vpack.c.b16 %v3088, %v3084
      %v3149 = vpack.c.b16 %v3089, %v3085
      %v3150 = vpack.c.b16 %v3090, %v3086
      %v3151 = vpack.c.b16 %v3091, %v3087
      %v3152 = vpack.c.b16 %v3096, %v3092
      %v3153 = vpack.c.b16 %v3097, %v3093
      %v3154 = vpack.c.b16 %v3098, %v3094
      %v3155 = vpack.c.b16 %v3099, %v3095
      %v3156 = vpack.c.b16 %v3104, %v3100
      %v3157 = vpack.c.b16 %v3105, %v3101
      %v3158 = vpack.c.b16 %v3106, %v3102
      %v3159 = vpack.c.b16 %v3107, %v3103
      %v3160 = vpack.c.b16 %v3112, %v3108
      %v3161 = vpack.c.b16 %v3113, %v3109
      %v3162 = vpack.c.b16 %v3114, %v3110
      %v3163 = vpack.c.b16 %v3115, %v3111
      %v3164 = vpack.c.b16 %v3120, %v3116
      %v3165 = vpack.c.b16 %v3121, %v3117
      %v3166 = vpack.c.b16 %v3122, %v3118
      %v3167 = vpack.c.b16 %v3123, %v3119
      %v3168 = vpack.c.b16 %v3128, %v3124
      %v3169 = vpack.c.b16 %v3129, %v3125
      %v3170 = vpack.c.b16 %v3130, %v3126
      %v3171 = vpack.c.b16 %v3131, %v3127
      %v3172 = vpack.c.b16 %v3136, %v3132
      %v3173 = vpack.c.b16 %v3137, %v3133
      %v3174 = vpack.c.b16 %v3138, %v3134
      %v3175 = vpack.c.b16 %v3139, %v3135
      %v3176 = vpack.c.b16 %v3144, %v3140
      %v3177 = vpack.c.b16 %v3145, %v3141
      %v3178 = vpack.c.b16 %v3146, %v3142
      %v3179 = vpack.c.b16 %v3147, %v3143
      %3212 = vmatprep.subr.bf16.mxu0 %v3149
      %3213 = vmatpush1.bf16.msra.mxu0 %v3148
      %3214 = vmatprep.subr.bf16.mxu0 %v3153
      %3215 = vmatpush1.bf16.msra.mxu0 %v3152
      %3216 = vmatprep.subr.bf16.mxu0 %v3157
      %3217 = vmatpush1.bf16.msra.mxu0 %v3156
      %3218 = vmatprep.subr.bf16.mxu0 %v3161
      %3219 = vmatpush1.bf16.msra.mxu0 %v3160
      %3220 = vmatprep.subr.bf16.mxu0 %v3165
      %3221 = vmatpush1.bf16.msra.mxu0 %v3164
      %3222 = vmatprep.subr.bf16.mxu0 %v3169
      %3223 = vmatpush1.bf16.msra.mxu0 %v3168
      %3224 = vmatprep.subr.bf16.mxu0 %v3173
      %3225 = vmatpush1.bf16.msra.mxu0 %v3172
      %3226 = vmatprep.subr.bf16.mxu0 %v3177
      %3227 = vmatpush1.bf16.msra.mxu0 %v3176
      %3228 = vmatprep.subr.bf16.mxu0 0
      %3229 = vmatpush1.bf16.msra.mxu0 0
      %3230 = vmatprep.subr.bf16.mxu0 0
      %3231 = vmatpush1.bf16.msra.mxu0 0
      %3232 = vmatprep.subr.bf16.mxu0 0
      %3233 = vmatpush1.bf16.msra.mxu0 0
      %3234 = vmatprep.subr.bf16.mxu0 0
      %3235 = vmatpush1.bf16.msra.mxu0 0
      %3236 = vmatprep.subr.bf16.mxu0 0
      %3237 = vmatpush1.bf16.msra.mxu0 0
      %3238 = vmatprep.subr.bf16.mxu0 0
      %3239 = vmatpush1.bf16.msra.mxu0 0
      %3240 = vmatprep.subr.bf16.mxu0 0
      %3241 = vmatpush1.bf16.msra.mxu0 0
      %3242 = vmatprep.subr.bf16.mxu0 0
      %3243 = vmatpush1.bf16.msra.mxu0 0
      %3244 = vmatprep.mubr.bf16.mxu0 0
      %3245 = vmatmul.mubr.bf16.gmra.mrb[0].mxu0 %v3019
      %v3246 = vpop.f32.mrb[0].mxu0
      %v3247 = vadd.f32 0.0, %v3246
      %v3248 = vpop.f32.mrb[0].mxu0
      %v3249 = vadd.f32 0.0, %v3248
      %v3250 = vpop.f32.mrb[0].mxu0
      %v3251 = vadd.f32 0.0, %v3250
      %v3252 = vpop.f32.mrb[0].mxu0
      %v3253 = vadd.f32 0.0, %v3252
      %3254 = vdwg.mxu0
      %3255 = vmatprep.subr.bf16.mxu0 %v3151
      %3256 = vmatpush1.bf16.msra.mxu0 %v3150
      %3257 = vmatprep.subr.bf16.mxu0 %v3155
      %3258 = vmatpush1.bf16.msra.mxu0 %v3154
      %3259 = vmatprep.subr.bf16.mxu0 %v3159
      %3260 = vmatpush1.bf16.msra.mxu0 %v3158
      %3261 = vmatprep.subr.bf16.mxu0 %v3163
      %3262 = vmatpush1.bf16.msra.mxu0 %v3162
      %3263 = vmatprep.subr.bf16.mxu0 %v3167
      %3264 = vmatpush1.bf16.msra.mxu0 %v3166
      %3265 = vmatprep.subr.bf16.mxu0 %v3171
      %3266 = vmatpush1.bf16.msra.mxu0 %v3170
      %3267 = vmatprep.subr.bf16.mxu0 %v3175
      %3268 = vmatpush1.bf16.msra.mxu0 %v3174
      %3269 = vmatprep.subr.bf16.mxu0 %v3179
      %3270 = vmatpush1.bf16.msra.mxu0 %v3178
      %3271 = vmatprep.subr.bf16.mxu0 0
      %3272 = vmatpush1.bf16.msra.mxu0 0
      %3273 = vmatprep.subr.bf16.mxu0 0
      %3274 = vmatpush1.bf16.msra.mxu0 0
      %3275 = vmatprep.subr.bf16.mxu0 0
      %3276 = vmatpush1.bf16.msra.mxu0 0
      %3277 = vmatprep.subr.bf16.mxu0 0
      %3278 = vmatpush1.bf16.msra.mxu0 0
      %3279 = vmatprep.subr.bf16.mxu0 0
      %3280 = vmatpush1.bf16.msra.mxu0 0
      %3281 = vmatprep.subr.bf16.mxu0 0
      %3282 = vmatpush1.bf16.msra.mxu0 0
      %3283 = vmatprep.subr.bf16.mxu0 0
      %3284 = vmatpush1.bf16.msra.mxu0 0
      %3285 = vmatprep.subr.bf16.mxu0 0
      %3286 = vmatpush1.bf16.msra.mxu0 0
      %3287 = vmatprep.mubr.bf16.mxu0 0
      %3288 = vmatmul.mubr.bf16.gmra.mrb[0].mxu0 %v3019
      %v3289 = vpop.f32.mrb[0].mxu0
      %v3290 = vadd.f32 0.0, %v3289
      %v3291 = vpop.f32.mrb[0].mxu0
      %v3292 = vadd.f32 0.0, %v3291
      %v3293 = vpop.f32.mrb[0].mxu0
      %v3294 = vadd.f32 0.0, %v3293
      %v3295 = vpop.f32.mrb[0].mxu0
      %v3296 = vadd.f32 0.0, %v3295
      %3297 = vdwg.mxu0
      %v3298 = vadd.f32 %v3011, %v3247
      %v3299 = vadd.f32 %v3012, %v3249
      %v3300 = vadd.f32 %v3013, %v3290
      %v3301 = vadd.f32 %v3014, %v3292
      %v3302 = vadd.f32 %v3015, %v3251
      %v3303 = vadd.f32 %v3016, %v3253
      %v3304 = vadd.f32 %v3017, %v3294
      %v3305 = vadd.f32 %v3018, %v3296
      %v3306 = vmul.f32 %v3298, 0.5
      %v3307 = vmul.f32 %v3302, 0.5
      %v3308 = vtanh.pop %v3306
      %v3309 = vtanh.pop %v3307
      %v3310 = vmul.f32 %v3308, 0.5
      %v3311 = vmul.f32 %v3309, 0.5
      %v3312 = vadd.f32 %v3310, 0.5
      %v3313 = vadd.f32 %v3311, 0.5
      %v3314 = vmul.f32 %v3299, 0.5
      %v3315 = vmul.f32 %v3303, 0.5
      %v3316 = vtanh.pop %v3314
      %v3317 = vtanh.pop %v3315
      %v3318 = vmul.f32 %v3316, 0.5
      %v3319 = vmul.f32 %v3317, 0.5
      %v3320 = vadd.f32 %v3318, 0.5
      %v3321 = vadd.f32 %v3319, 0.5
      %v3322 = vtanh.pop %v3300
      %v3323 = vtanh.pop %v3304
      %v3324 = vmul.f32 %v3301, 0.5
      %v3325 = vmul.f32 %v3305, 0.5
      %v3326 = vtanh.pop %v3324
      %v3327 = vtanh.pop %v3325
      %v3328 = vmul.f32 %v3326, 0.5
      %v3329 = vmul.f32 %v3327, 0.5
      %v3330 = vadd.f32 %v3328, 0.5
      %v3331 = vadd.f32 %v3329, 0.5
      %v3332 = vmul.f32 %v3320, %v2998
      %v3333 = vmul.f32 %v3321, %v2999
      %v3334 = vmul.f32 %v3312, %v3322
      %v3335 = vmul.f32 %v3313, %v3323
      %v3336 = vadd.f32 %v3332, %v3334
      %v3337 = vadd.f32 %v3333, %v3335
      %v3338 = vtanh.pop %v3336
      %v3339 = vtanh.pop %v3337
      %v3340 = vmul.f32 %v3330, %v3338
      %v3341 = vmul.f32 %v3331, %v3339
      // Predicated region
      $region136: #{_lambda_.1} parent=39 // pred_check
        %p3342 = pneg %p1655
      $region137: #{_lambda_.1} parent=39 // pred_check_branch
        %3344 = sbr.rel (%p3342) target = $region139
      $region138: #{_lambda_.1} parent=39 // pred_region
        %v3345 = vpack.c.bf16 %v3341, %v3340
        %s3346 = scalar_lea.vmem [#allocation4], 32
        %3347 = vst [vmem:[%s3346] sm:$0xff] %v3345
      $region139: #{_lambda_.1} parent=39 // pred_fallthru
        _
      %s3348 = scalar_lea.vmem [#allocation5], 320
      %v3349 = vld [vmem:[%s3348] sm:$0xff]
      %v3350 = vld [vmem:[%s3348 + $0x8] sm:$0xff]
      %v3351 = vld [vmem:[%s3348 + $0x10] sm:$0xff]
      %v3352 = vld [vmem:[%s3348 + $0x18] sm:$0xff]
      %v3353 = vld [vmem:[%s3348 + $0x20] sm:$0xff]
      %v3354 = vld [vmem:[%s3348 + $0x28] sm:$0xff]
      %v3355 = vld [vmem:[%s3348 + $0x30] sm:$0xff]
      %v3356 = vld [vmem:[%s3348 + $0x38] sm:$0xff]
      %v3357 = vpack.c.bf16 %v3341, %v3340
      %v3358 = vld [vmem:[%s385] sm:$0xff]
      %v3359 = vld [vmem:[%s385 + $0x8] sm:$0xff]
      %v3360 = vld [vmem:[%s385 + $0x10] sm:$0xff]
      %v3361 = vld [vmem:[%s385 + $0x18] sm:$0xff]
      %v3362 = vld [vmem:[%s385 + $0x20] sm:$0xff]
      %v3363 = vld [vmem:[%s385 + $0x28] sm:$0xff]
      %v3364 = vld [vmem:[%s385 + $0x30] sm:$0xff]
      %v3365 = vld [vmem:[%s385 + $0x38] sm:$0xff]
      %v3366 = vld [vmem:[%s385 + $0x40] sm:$0xff]
      %v3367 = vld [vmem:[%s385 + $0x48] sm:$0xff]
      %v3368 = vld [vmem:[%s385 + $0x50] sm:$0xff]
      %v3369 = vld [vmem:[%s385 + $0x58] sm:$0xff]
      %v3370 = vld [vmem:[%s385 + $0x60] sm:$0xff]
      %v3371 = vld [vmem:[%s385 + $0x68] sm:$0xff]
      %v3372 = vld [vmem:[%s385 + $0x70] sm:$0xff]
      %v3373 = vld [vmem:[%s385 + $0x78] sm:$0xff]
      %v3374 = vld [vmem:[%s385 + $0x80] sm:$0xff]
      %v3375 = vld [vmem:[%s385 + $0x88] sm:$0xff]
      %v3376 = vld [vmem:[%s385 + $0x90] sm:$0xff]
      %v3377 = vld [vmem:[%s385 + $0x98] sm:$0xff]
      %v3378 = vld [vmem:[%s385 + $0xa0] sm:$0xff]
      %v3379 = vld [vmem:[%s385 + $0xa8] sm:$0xff]
      %v3380 = vld [vmem:[%s385 + $0xb0] sm:$0xff]
      %v3381 = vld [vmem:[%s385 + $0xb8] sm:$0xff]
      %v3382 = vld [vmem:[%s385 + $0xc0] sm:$0xff]
      %v3383 = vld [vmem:[%s385 + $0xc8] sm:$0xff]
      %v3384 = vld [vmem:[%s385 + $0xd0] sm:$0xff]
      %v3385 = vld [vmem:[%s385 + $0xd8] sm:$0xff]
      %v3386 = vld [vmem:[%s385 + $0xe0] sm:$0xff]
      %v3387 = vld [vmem:[%s385 + $0xe8] sm:$0xff]
      %v3388 = vld [vmem:[%s385 + $0xf0] sm:$0xff]
      %v3389 = vld [vmem:[%s385 + $0xf8] sm:$0xff]
      %v3422 = vunpack.c.l.b16 %v3358
      %v3423 = vunpack.c.h.b16 %v3358
      %v3424 = vunpack.c.l.b16 %v3359
      %v3425 = vunpack.c.h.b16 %v3359
      %v3426 = vunpack.c.l.b16 %v3360
      %v3427 = vunpack.c.h.b16 %v3360
      %v3428 = vunpack.c.l.b16 %v3361
      %v3429 = vunpack.c.h.b16 %v3361
      %v3430 = vunpack.c.l.b16 %v3362
      %v3431 = vunpack.c.h.b16 %v3362
      %v3432 = vunpack.c.l.b16 %v3363
      %v3433 = vunpack.c.h.b16 %v3363
      %v3434 = vunpack.c.l.b16 %v3364
      %v3435 = vunpack.c.h.b16 %v3364
      %v3436 = vunpack.c.l.b16 %v3365
      %v3437 = vunpack.c.h.b16 %v3365
      %v3438 = vunpack.c.l.b16 %v3366
      %v3439 = vunpack.c.h.b16 %v3366
      %v3440 = vunpack.c.l.b16 %v3367
      %v3441 = vunpack.c.h.b16 %v3367
      %v3442 = vunpack.c.l.b16 %v3368
      %v3443 = vunpack.c.h.b16 %v3368
      %v3444 = vunpack.c.l.b16 %v3369
      %v3445 = vunpack.c.h.b16 %v3369
      %v3446 = vunpack.c.l.b16 %v3370
      %v3447 = vunpack.c.h.b16 %v3370
      %v3448 = vunpack.c.l.b16 %v3371
      %v3449 = vunpack.c.h.b16 %v3371
      %v3450 = vunpack.c.l.b16 %v3372
      %v3451 = vunpack.c.h.b16 %v3372
      %v3452 = vunpack.c.l.b16 %v3373
      %v3453 = vunpack.c.h.b16 %v3373
      %v3454 = vunpack.c.l.b16 %v3374
      %v3455 = vunpack.c.h.b16 %v3374
      %v3456 = vunpack.c.l.b16 %v3375
      %v3457 = vunpack.c.h.b16 %v3375
      %v3458 = vunpack.c.l.b16 %v3376
      %v3459 = vunpack.c.h.b16 %v3376
      %v3460 = vunpack.c.l.b16 %v3377
      %v3461 = vunpack.c.h.b16 %v3377
      %v3462 = vunpack.c.l.b16 %v3378
      %v3463 = vunpack.c.h.b16 %v3378
      %v3464 = vunpack.c.l.b16 %v3379
      %v3465 = vunpack.c.h.b16 %v3379
      %v3466 = vunpack.c.l.b16 %v3380
      %v3467 = vunpack.c.h.b16 %v3380
      %v3468 = vunpack.c.l.b16 %v3381
      %v3469 = vunpack.c.h.b16 %v3381
      %v3470 = vunpack.c.l.b16 %v3382
      %v3471 = vunpack.c.h.b16 %v3382
      %v3472 = vunpack.c.l.b16 %v3383
      %v3473 = vunpack.c.h.b16 %v3383
      %v3474 = vunpack.c.l.b16 %v3384
      %v3475 = vunpack.c.h.b16 %v3384
      %v3476 = vunpack.c.l.b16 %v3385
      %v3477 = vunpack.c.h.b16 %v3385
      %v3478 = vunpack.c.l.b16 %v3386
      %v3479 = vunpack.c.h.b16 %v3386
      %v3480 = vunpack.c.l.b16 %v3387
      %v3481 = vunpack.c.h.b16 %v3387
      %v3482 = vunpack.c.l.b16 %v3388
      %v3483 = vunpack.c.h.b16 %v3388
      %v3484 = vunpack.c.l.b16 %v3389
      %v3485 = vunpack.c.h.b16 %v3389
      %v3486 = vpack.c.b16 %v3426, %v3422
      %v3487 = vpack.c.b16 %v3427, %v3423
      %v3488 = vpack.c.b16 %v3428, %v3424
      %v3489 = vpack.c.b16 %v3429, %v3425
      %v3490 = vpack.c.b16 %v3434, %v3430
      %v3491 = vpack.c.b16 %v3435, %v3431
      %v3492 = vpack.c.b16 %v3436, %v3432
      %v3493 = vpack.c.b16 %v3437, %v3433
      %v3494 = vpack.c.b16 %v3442, %v3438
      %v3495 = vpack.c.b16 %v3443, %v3439
      %v3496 = vpack.c.b16 %v3444, %v3440
      %v3497 = vpack.c.b16 %v3445, %v3441
      %v3498 = vpack.c.b16 %v3450, %v3446
      %v3499 = vpack.c.b16 %v3451, %v3447
      %v3500 = vpack.c.b16 %v3452, %v3448
      %v3501 = vpack.c.b16 %v3453, %v3449
      %v3502 = vpack.c.b16 %v3458, %v3454
      %v3503 = vpack.c.b16 %v3459, %v3455
      %v3504 = vpack.c.b16 %v3460, %v3456
      %v3505 = vpack.c.b16 %v3461, %v3457
      %v3506 = vpack.c.b16 %v3466, %v3462
      %v3507 = vpack.c.b16 %v3467, %v3463
      %v3508 = vpack.c.b16 %v3468, %v3464
      %v3509 = vpack.c.b16 %v3469, %v3465
      %v3510 = vpack.c.b16 %v3474, %v3470
      %v3511 = vpack.c.b16 %v3475, %v3471
      %v3512 = vpack.c.b16 %v3476, %v3472
      %v3513 = vpack.c.b16 %v3477, %v3473
      %v3514 = vpack.c.b16 %v3482, %v3478
      %v3515 = vpack.c.b16 %v3483, %v3479
      %v3516 = vpack.c.b16 %v3484, %v3480
      %v3517 = vpack.c.b16 %v3485, %v3481
      %3550 = vmatprep.subr.bf16.mxu0 %v3487
      %3551 = vmatpush1.bf16.msra.mxu0 %v3486
      %3552 = vmatprep.subr.bf16.mxu0 %v3491
      %3553 = vmatpush1.bf16.msra.mxu0 %v3490
      %3554 = vmatprep.subr.bf16.mxu0 %v3495
      %3555 = vmatpush1.bf16.msra.mxu0 %v3494
      %3556 = vmatprep.subr.bf16.mxu0 %v3499
      %3557 = vmatpush1.bf16.msra.mxu0 %v3498
      %3558 = vmatprep.subr.bf16.mxu0 %v3503
      %3559 = vmatpush1.bf16.msra.mxu0 %v3502
      %3560 = vmatprep.subr.bf16.mxu0 %v3507
      %3561 = vmatpush1.bf16.msra.mxu0 %v3506
      %3562 = vmatprep.subr.bf16.mxu0 %v3511
      %3563 = vmatpush1.bf16.msra.mxu0 %v3510
      %3564 = vmatprep.subr.bf16.mxu0 %v3515
      %3565 = vmatpush1.bf16.msra.mxu0 %v3514
      %3566 = vmatprep.subr.bf16.mxu0 0
      %3567 = vmatpush1.bf16.msra.mxu0 0
      %3568 = vmatprep.subr.bf16.mxu0 0
      %3569 = vmatpush1.bf16.msra.mxu0 0
      %3570 = vmatprep.subr.bf16.mxu0 0
      %3571 = vmatpush1.bf16.msra.mxu0 0
      %3572 = vmatprep.subr.bf16.mxu0 0
      %3573 = vmatpush1.bf16.msra.mxu0 0
      %3574 = vmatprep.subr.bf16.mxu0 0
      %3575 = vmatpush1.bf16.msra.mxu0 0
      %3576 = vmatprep.subr.bf16.mxu0 0
      %3577 = vmatpush1.bf16.msra.mxu0 0
      %3578 = vmatprep.subr.bf16.mxu0 0
      %3579 = vmatpush1.bf16.msra.mxu0 0
      %3580 = vmatprep.subr.bf16.mxu0 0
      %3581 = vmatpush1.bf16.msra.mxu0 0
      %3582 = vmatprep.mubr.bf16.mxu0 0
      %3583 = vmatmul.mubr.bf16.gmra.mrb[0].mxu0 %v3357
      %v3584 = vpop.f32.mrb[0].mxu0
      %v3585 = vadd.f32 0.0, %v3584
      %v3586 = vpop.f32.mrb[0].mxu0
      %v3587 = vadd.f32 0.0, %v3586
      %v3588 = vpop.f32.mrb[0].mxu0
      %v3589 = vadd.f32 0.0, %v3588
      %v3590 = vpop.f32.mrb[0].mxu0
      %v3591 = vadd.f32 0.0, %v3590
      %3592 = vdwg.mxu0
      %3593 = vmatprep.subr.bf16.mxu0 %v3489
      %3594 = vmatpush1.bf16.msra.mxu0 %v3488
      %3595 = vmatprep.subr.bf16.mxu0 %v3493
      %3596 = vmatpush1.bf16.msra.mxu0 %v3492
      %3597 = vmatprep.subr.bf16.mxu0 %v3497
      %3598 = vmatpush1.bf16.msra.mxu0 %v3496
      %3599 = vmatprep.subr.bf16.mxu0 %v3501
      %3600 = vmatpush1.bf16.msra.mxu0 %v3500
      %3601 = vmatprep.subr.bf16.mxu0 %v3505
      %3602 = vmatpush1.bf16.msra.mxu0 %v3504
      %3603 = vmatprep.subr.bf16.mxu0 %v3509
      %3604 = vmatpush1.bf16.msra.mxu0 %v3508
      %3605 = vmatprep.subr.bf16.mxu0 %v3513
      %3606 = vmatpush1.bf16.msra.mxu0 %v3512
      %3607 = vmatprep.subr.bf16.mxu0 %v3517
      %3608 = vmatpush1.bf16.msra.mxu0 %v3516
      %3609 = vmatprep.subr.bf16.mxu0 0
      %3610 = vmatpush1.bf16.msra.mxu0 0
      %3611 = vmatprep.subr.bf16.mxu0 0
      %3612 = vmatpush1.bf16.msra.mxu0 0
      %3613 = vmatprep.subr.bf16.mxu0 0
      %3614 = vmatpush1.bf16.msra.mxu0 0
      %3615 = vmatprep.subr.bf16.mxu0 0
      %3616 = vmatpush1.bf16.msra.mxu0 0
      %3617 = vmatprep.subr.bf16.mxu0 0
      %3618 = vmatpush1.bf16.msra.mxu0 0
      %3619 = vmatprep.subr.bf16.mxu0 0
      %3620 = vmatpush1.bf16.msra.mxu0 0
      %3621 = vmatprep.subr.bf16.mxu0 0
      %3622 = vmatpush1.bf16.msra.mxu0 0
      %3623 = vmatprep.subr.bf16.mxu0 0
      %3624 = vmatpush1.bf16.msra.mxu0 0
      %3625 = vmatprep.mubr.bf16.mxu0 0
      %3626 = vmatmul.mubr.bf16.gmra.mrb[0].mxu0 %v3357
      %v3627 = vpop.f32.mrb[0].mxu0
      %v3628 = vadd.f32 0.0, %v3627
      %v3629 = vpop.f32.mrb[0].mxu0
      %v3630 = vadd.f32 0.0, %v3629
      %v3631 = vpop.f32.mrb[0].mxu0
      %v3632 = vadd.f32 0.0, %v3631
      %v3633 = vpop.f32.mrb[0].mxu0
      %v3634 = vadd.f32 0.0, %v3633
      %3635 = vdwg.mxu0
      %v3636 = vadd.f32 %v3349, %v3585
      %v3637 = vadd.f32 %v3350, %v3587
      %v3638 = vadd.f32 %v3351, %v3628
      %v3639 = vadd.f32 %v3352, %v3630
      %v3640 = vadd.f32 %v3353, %v3589
      %v3641 = vadd.f32 %v3354, %v3591
      %v3642 = vadd.f32 %v3355, %v3632
      %v3643 = vadd.f32 %v3356, %v3634
      %v3644 = vmul.f32 %v3636, 0.5
      %v3645 = vmul.f32 %v3640, 0.5
      %v3646 = vtanh.pop %v3644
      %v3647 = vtanh.pop %v3645
      %v3648 = vmul.f32 %v3646, 0.5
      %v3649 = vmul.f32 %v3647, 0.5
      %v3650 = vadd.f32 %v3648, 0.5
      %v3651 = vadd.f32 %v3649, 0.5
      %v3652 = vmul.f32 %v3637, 0.5
      %v3653 = vmul.f32 %v3641, 0.5
      %v3654 = vtanh.pop %v3652
      %v3655 = vtanh.pop %v3653
      %v3656 = vmul.f32 %v3654, 0.5
      %v3657 = vmul.f32 %v3655, 0.5
      %v3658 = vadd.f32 %v3656, 0.5
      %v3659 = vadd.f32 %v3657, 0.5
      %v3660 = vtanh.pop %v3638
      %v3661 = vtanh.pop %v3642
      %v3662 = vmul.f32 %v3639, 0.5
      %v3663 = vmul.f32 %v3643, 0.5
      %v3664 = vtanh.pop %v3662
      %v3665 = vtanh.pop %v3663
      %v3666 = vmul.f32 %v3664, 0.5
      %v3667 = vmul.f32 %v3665, 0.5
      %v3668 = vadd.f32 %v3666, 0.5
      %v3669 = vadd.f32 %v3667, 0.5
      %v3670 = vmul.f32 %v3658, %v3336
      %v3671 = vmul.f32 %v3659, %v3337
      %v3672 = vmul.f32 %v3650, %v3660
      %v3673 = vmul.f32 %v3651, %v3661
      %v3674 = vadd.f32 %v3670, %v3672
      %v3675 = vadd.f32 %v3671, %v3673
      %v3676 = vtanh.pop %v3674
      %v3677 = vtanh.pop %v3675
      %v3678 = vmul.f32 %v3668, %v3676
      %v3679 = vmul.f32 %v3669, %v3677
      // Predicated region
      $region140: #{_lambda_.1} parent=39 // pred_check
        %p3680 = pneg %p1655
      $region141: #{_lambda_.1} parent=39 // pred_check_branch
        %3682 = sbr.rel (%p3680) target = $region143
      $region142: #{_lambda_.1} parent=39 // pred_region
        %v3683 = vpack.c.bf16 %v3679, %v3678
        %s3684 = scalar_lea.vmem [#allocation4], 40
        %3685 = vst [vmem:[%s3684] sm:$0xff] %v3683
      $region143: #{_lambda_.1} parent=39 // pred_fallthru
        _
      %s3686 = scalar_lea.vmem [#allocation5], 384
      %v3687 = vld [vmem:[%s3686] sm:$0xff]
      %v3688 = vld [vmem:[%s3686 + $0x8] sm:$0xff]
      %v3689 = vld [vmem:[%s3686 + $0x10] sm:$0xff]
      %v3690 = vld [vmem:[%s3686 + $0x18] sm:$0xff]
      %v3691 = vld [vmem:[%s3686 + $0x20] sm:$0xff]
      %v3692 = vld [vmem:[%s3686 + $0x28] sm:$0xff]
      %v3693 = vld [vmem:[%s3686 + $0x30] sm:$0xff]
      %v3694 = vld [vmem:[%s3686 + $0x38] sm:$0xff]
      %v3695 = vpack.c.bf16 %v3679, %v3678
      %v3696 = vld [vmem:[%s385] sm:$0xff]
      %v3697 = vld [vmem:[%s385 + $0x8] sm:$0xff]
      %v3698 = vld [vmem:[%s385 + $0x10] sm:$0xff]
      %v3699 = vld [vmem:[%s385 + $0x18] sm:$0xff]
      %v3700 = vld [vmem:[%s385 + $0x20] sm:$0xff]
      %v3701 = vld [vmem:[%s385 + $0x28] sm:$0xff]
      %v3702 = vld [vmem:[%s385 + $0x30] sm:$0xff]
      %v3703 = vld [vmem:[%s385 + $0x38] sm:$0xff]
      %v3704 = vld [vmem:[%s385 + $0x40] sm:$0xff]
      %v3705 = vld [vmem:[%s385 + $0x48] sm:$0xff]
      %v3706 = vld [vmem:[%s385 + $0x50] sm:$0xff]
      %v3707 = vld [vmem:[%s385 + $0x58] sm:$0xff]
      %v3708 = vld [vmem:[%s385 + $0x60] sm:$0xff]
      %v3709 = vld [vmem:[%s385 + $0x68] sm:$0xff]
      %v3710 = vld [vmem:[%s385 + $0x70] sm:$0xff]
      %v3711 = vld [vmem:[%s385 + $0x78] sm:$0xff]
      %v3712 = vld [vmem:[%s385 + $0x80] sm:$0xff]
      %v3713 = vld [vmem:[%s385 + $0x88] sm:$0xff]
      %v3714 = vld [vmem:[%s385 + $0x90] sm:$0xff]
      %v3715 = vld [vmem:[%s385 + $0x98] sm:$0xff]
      %v3716 = vld [vmem:[%s385 + $0xa0] sm:$0xff]
      %v3717 = vld [vmem:[%s385 + $0xa8] sm:$0xff]
      %v3718 = vld [vmem:[%s385 + $0xb0] sm:$0xff]
      %v3719 = vld [vmem:[%s385 + $0xb8] sm:$0xff]
      %v3720 = vld [vmem:[%s385 + $0xc0] sm:$0xff]
      %v3721 = vld [vmem:[%s385 + $0xc8] sm:$0xff]
      %v3722 = vld [vmem:[%s385 + $0xd0] sm:$0xff]
      %v3723 = vld [vmem:[%s385 + $0xd8] sm:$0xff]
      %v3724 = vld [vmem:[%s385 + $0xe0] sm:$0xff]
      %v3725 = vld [vmem:[%s385 + $0xe8] sm:$0xff]
      %v3726 = vld [vmem:[%s385 + $0xf0] sm:$0xff]
      %v3727 = vld [vmem:[%s385 + $0xf8] sm:$0xff]
      %v3760 = vunpack.c.l.b16 %v3696
      %v3761 = vunpack.c.h.b16 %v3696
      %v3762 = vunpack.c.l.b16 %v3697
      %v3763 = vunpack.c.h.b16 %v3697
      %v3764 = vunpack.c.l.b16 %v3698
      %v3765 = vunpack.c.h.b16 %v3698
      %v3766 = vunpack.c.l.b16 %v3699
      %v3767 = vunpack.c.h.b16 %v3699
      %v3768 = vunpack.c.l.b16 %v3700
      %v3769 = vunpack.c.h.b16 %v3700
      %v3770 = vunpack.c.l.b16 %v3701
      %v3771 = vunpack.c.h.b16 %v3701
      %v3772 = vunpack.c.l.b16 %v3702
      %v3773 = vunpack.c.h.b16 %v3702
      %v3774 = vunpack.c.l.b16 %v3703
      %v3775 = vunpack.c.h.b16 %v3703
      %v3776 = vunpack.c.l.b16 %v3704
      %v3777 = vunpack.c.h.b16 %v3704
      %v3778 = vunpack.c.l.b16 %v3705
      %v3779 = vunpack.c.h.b16 %v3705
      %v3780 = vunpack.c.l.b16 %v3706
      %v3781 = vunpack.c.h.b16 %v3706
      %v3782 = vunpack.c.l.b16 %v3707
      %v3783 = vunpack.c.h.b16 %v3707
      %v3784 = vunpack.c.l.b16 %v3708
      %v3785 = vunpack.c.h.b16 %v3708
      %v3786 = vunpack.c.l.b16 %v3709
      %v3787 = vunpack.c.h.b16 %v3709
      %v3788 = vunpack.c.l.b16 %v3710
      %v3789 = vunpack.c.h.b16 %v3710
      %v3790 = vunpack.c.l.b16 %v3711
      %v3791 = vunpack.c.h.b16 %v3711
      %v3792 = vunpack.c.l.b16 %v3712
      %v3793 = vunpack.c.h.b16 %v3712
      %v3794 = vunpack.c.l.b16 %v3713
      %v3795 = vunpack.c.h.b16 %v3713
      %v3796 = vunpack.c.l.b16 %v3714
      %v3797 = vunpack.c.h.b16 %v3714
      %v3798 = vunpack.c.l.b16 %v3715
      %v3799 = vunpack.c.h.b16 %v3715
      %v3800 = vunpack.c.l.b16 %v3716
      %v3801 = vunpack.c.h.b16 %v3716
      %v3802 = vunpack.c.l.b16 %v3717
      %v3803 = vunpack.c.h.b16 %v3717
      %v3804 = vunpack.c.l.b16 %v3718
      %v3805 = vunpack.c.h.b16 %v3718
      %v3806 = vunpack.c.l.b16 %v3719
      %v3807 = vunpack.c.h.b16 %v3719
      %v3808 = vunpack.c.l.b16 %v3720
      %v3809 = vunpack.c.h.b16 %v3720
      %v3810 = vunpack.c.l.b16 %v3721
      %v3811 = vunpack.c.h.b16 %v3721
      %v3812 = vunpack.c.l.b16 %v3722
      %v3813 = vunpack.c.h.b16 %v3722
      %v3814 = vunpack.c.l.b16 %v3723
      %v3815 = vunpack.c.h.b16 %v3723
      %v3816 = vunpack.c.l.b16 %v3724
      %v3817 = vunpack.c.h.b16 %v3724
      %v3818 = vunpack.c.l.b16 %v3725
      %v3819 = vunpack.c.h.b16 %v3725
      %v3820 = vunpack.c.l.b16 %v3726
      %v3821 = vunpack.c.h.b16 %v3726
      %v3822 = vunpack.c.l.b16 %v3727
      %v3823 = vunpack.c.h.b16 %v3727
      %v3824 = vpack.c.b16 %v3764, %v3760
      %v3825 = vpack.c.b16 %v3765, %v3761
      %v3826 = vpack.c.b16 %v3766, %v3762
      %v3827 = vpack.c.b16 %v3767, %v3763
      %v3828 = vpack.c.b16 %v3772, %v3768
      %v3829 = vpack.c.b16 %v3773, %v3769
      %v3830 = vpack.c.b16 %v3774, %v3770
      %v3831 = vpack.c.b16 %v3775, %v3771
      %v3832 = vpack.c.b16 %v3780, %v3776
      %v3833 = vpack.c.b16 %v3781, %v3777
      %v3834 = vpack.c.b16 %v3782, %v3778
      %v3835 = vpack.c.b16 %v3783, %v3779
      %v3836 = vpack.c.b16 %v3788, %v3784
      %v3837 = vpack.c.b16 %v3789, %v3785
      %v3838 = vpack.c.b16 %v3790, %v3786
      %v3839 = vpack.c.b16 %v3791, %v3787
      %v3840 = vpack.c.b16 %v3796, %v3792
      %v3841 = vpack.c.b16 %v3797, %v3793
      %v3842 = vpack.c.b16 %v3798, %v3794
      %v3843 = vpack.c.b16 %v3799, %v3795
      %v3844 = vpack.c.b16 %v3804, %v3800
      %v3845 = vpack.c.b16 %v3805, %v3801
      %v3846 = vpack.c.b16 %v3806, %v3802
      %v3847 = vpack.c.b16 %v3807, %v3803
      %v3848 = vpack.c.b16 %v3812, %v3808
      %v3849 = vpack.c.b16 %v3813, %v3809
      %v3850 = vpack.c.b16 %v3814, %v3810
      %v3851 = vpack.c.b16 %v3815, %v3811
      %v3852 = vpack.c.b16 %v3820, %v3816
      %v3853 = vpack.c.b16 %v3821, %v3817
      %v3854 = vpack.c.b16 %v3822, %v3818
      %v3855 = vpack.c.b16 %v3823, %v3819
      %3888 = vmatprep.subr.bf16.mxu0 %v3825
      %3889 = vmatpush1.bf16.msra.mxu0 %v3824
      %3890 = vmatprep.subr.bf16.mxu0 %v3829
      %3891 = vmatpush1.bf16.msra.mxu0 %v3828
      %3892 = vmatprep.subr.bf16.mxu0 %v3833
      %3893 = vmatpush1.bf16.msra.mxu0 %v3832
      %3894 = vmatprep.subr.bf16.mxu0 %v3837
      %3895 = vmatpush1.bf16.msra.mxu0 %v3836
      %3896 = vmatprep.subr.bf16.mxu0 %v3841
      %3897 = vmatpush1.bf16.msra.mxu0 %v3840
      %3898 = vmatprep.subr.bf16.mxu0 %v3845
      %3899 = vmatpush1.bf16.msra.mxu0 %v3844
      %3900 = vmatprep.subr.bf16.mxu0 %v3849
      %3901 = vmatpush1.bf16.msra.mxu0 %v3848
      %3902 = vmatprep.subr.bf16.mxu0 %v3853
      %3903 = vmatpush1.bf16.msra.mxu0 %v3852
      %3904 = vmatprep.subr.bf16.mxu0 0
      %3905 = vmatpush1.bf16.msra.mxu0 0
      %3906 = vmatprep.subr.bf16.mxu0 0
      %3907 = vmatpush1.bf16.msra.mxu0 0
      %3908 = vmatprep.subr.bf16.mxu0 0
      %3909 = vmatpush1.bf16.msra.mxu0 0
      %3910 = vmatprep.subr.bf16.mxu0 0
      %3911 = vmatpush1.bf16.msra.mxu0 0
      %3912 = vmatprep.subr.bf16.mxu0 0
      %3913 = vmatpush1.bf16.msra.mxu0 0
      %3914 = vmatprep.subr.bf16.mxu0 0
      %3915 = vmatpush1.bf16.msra.mxu0 0
      %3916 = vmatprep.subr.bf16.mxu0 0
      %3917 = vmatpush1.bf16.msra.mxu0 0
      %3918 = vmatprep.subr.bf16.mxu0 0
      %3919 = vmatpush1.bf16.msra.mxu0 0
      %3920 = vmatprep.mubr.bf16.mxu0 0
      %3921 = vmatmul.mubr.bf16.gmra.mrb[0].mxu0 %v3695
      %v3922 = vpop.f32.mrb[0].mxu0
      %v3923 = vadd.f32 0.0, %v3922
      %v3924 = vpop.f32.mrb[0].mxu0
      %v3925 = vadd.f32 0.0, %v3924
      %v3926 = vpop.f32.mrb[0].mxu0
      %v3927 = vadd.f32 0.0, %v3926
      %v3928 = vpop.f32.mrb[0].mxu0
      %v3929 = vadd.f32 0.0, %v3928
      %3930 = vdwg.mxu0
      %3931 = vmatprep.subr.bf16.mxu0 %v3827
      %3932 = vmatpush1.bf16.msra.mxu0 %v3826
      %3933 = vmatprep.subr.bf16.mxu0 %v3831
      %3934 = vmatpush1.bf16.msra.mxu0 %v3830
      %3935 = vmatprep.subr.bf16.mxu0 %v3835
      %3936 = vmatpush1.bf16.msra.mxu0 %v3834
      %3937 = vmatprep.subr.bf16.mxu0 %v3839
      %3938 = vmatpush1.bf16.msra.mxu0 %v3838
      %3939 = vmatprep.subr.bf16.mxu0 %v3843
      %3940 = vmatpush1.bf16.msra.mxu0 %v3842
      %3941 = vmatprep.subr.bf16.mxu0 %v3847
      %3942 = vmatpush1.bf16.msra.mxu0 %v3846
      %3943 = vmatprep.subr.bf16.mxu0 %v3851
      %3944 = vmatpush1.bf16.msra.mxu0 %v3850
      %3945 = vmatprep.subr.bf16.mxu0 %v3855
      %3946 = vmatpush1.bf16.msra.mxu0 %v3854
      %3947 = vmatprep.subr.bf16.mxu0 0
      %3948 = vmatpush1.bf16.msra.mxu0 0
      %3949 = vmatprep.subr.bf16.mxu0 0
      %3950 = vmatpush1.bf16.msra.mxu0 0
      %3951 = vmatprep.subr.bf16.mxu0 0
      %3952 = vmatpush1.bf16.msra.mxu0 0
      %3953 = vmatprep.subr.bf16.mxu0 0
      %3954 = vmatpush1.bf16.msra.mxu0 0
      %3955 = vmatprep.subr.bf16.mxu0 0
      %3956 = vmatpush1.bf16.msra.mxu0 0
      %3957 = vmatprep.subr.bf16.mxu0 0
      %3958 = vmatpush1.bf16.msra.mxu0 0
      %3959 = vmatprep.subr.bf16.mxu0 0
      %3960 = vmatpush1.bf16.msra.mxu0 0
      %3961 = vmatprep.subr.bf16.mxu0 0
      %3962 = vmatpush1.bf16.msra.mxu0 0
      %3963 = vmatprep.mubr.bf16.mxu0 0
      %3964 = vmatmul.mubr.bf16.gmra.mrb[0].mxu0 %v3695
      %v3965 = vpop.f32.mrb[0].mxu0
      %v3966 = vadd.f32 0.0, %v3965
      %v3967 = vpop.f32.mrb[0].mxu0
      %v3968 = vadd.f32 0.0, %v3967
      %v3969 = vpop.f32.mrb[0].mxu0
      %v3970 = vadd.f32 0.0, %v3969
      %v3971 = vpop.f32.mrb[0].mxu0
      %v3972 = vadd.f32 0.0, %v3971
      %3973 = vdwg.mxu0
      %v3974 = vadd.f32 %v3687, %v3923
      %v3975 = vadd.f32 %v3688, %v3925
      %v3976 = vadd.f32 %v3689, %v3966
      %v3977 = vadd.f32 %v3690, %v3968
      %v3978 = vadd.f32 %v3691, %v3927
      %v3979 = vadd.f32 %v3692, %v3929
      %v3980 = vadd.f32 %v3693, %v3970
      %v3981 = vadd.f32 %v3694, %v3972
      %v3982 = vmul.f32 %v3974, 0.5
      %v3983 = vmul.f32 %v3978, 0.5
      %v3984 = vtanh.pop %v3982
      %v3985 = vtanh.pop %v3983
      %v3986 = vmul.f32 %v3984, 0.5
      %v3987 = vmul.f32 %v3985, 0.5
      %v3988 = vadd.f32 %v3986, 0.5
      %v3989 = vadd.f32 %v3987, 0.5
      %v3990 = vmul.f32 %v3975, 0.5
      %v3991 = vmul.f32 %v3979, 0.5
      %v3992 = vtanh.pop %v3990
      %v3993 = vtanh.pop %v3991
      %v3994 = vmul.f32 %v3992, 0.5
      %v3995 = vmul.f32 %v3993, 0.5
      %v3996 = vadd.f32 %v3994, 0.5
      %v3997 = vadd.f32 %v3995, 0.5
      %v3998 = vtanh.pop %v3976
      %v3999 = vtanh.pop %v3980
      %v4000 = vmul.f32 %v3977, 0.5
      %v4001 = vmul.f32 %v3981, 0.5
      %v4002 = vtanh.pop %v4000
      %v4003 = vtanh.pop %v4001
      %v4004 = vmul.f32 %v4002, 0.5
      %v4005 = vmul.f32 %v4003, 0.5
      %v4006 = vadd.f32 %v4004, 0.5
      %v4007 = vadd.f32 %v4005, 0.5
      %v4008 = vmul.f32 %v3996, %v3674
      %v4009 = vmul.f32 %v3997, %v3675
      %v4010 = vmul.f32 %v3988, %v3998
      %v4011 = vmul.f32 %v3989, %v3999
      %v4012 = vadd.f32 %v4008, %v4010
      %v4013 = vadd.f32 %v4009, %v4011
      %v4014 = vtanh.pop %v4012
      %v4015 = vtanh.pop %v4013
      %v4016 = vmul.f32 %v4006, %v4014
      %v4017 = vmul.f32 %v4007, %v4015
      // Predicated region
      $region144: #{_lambda_.1} parent=39 // pred_check
        %p4018 = pneg %p1655
      $region145: #{_lambda_.1} parent=39 // pred_check_branch
        %4020 = sbr.rel (%p4018) target = $region147
      $region146: #{_lambda_.1} parent=39 // pred_region
        %v4021 = vpack.c.bf16 %v4017, %v4016
        %s4022 = scalar_lea.vmem [#allocation4], 48
        %4023 = vst [vmem:[%s4022] sm:$0xff] %v4021
      $region147: #{_lambda_.1} parent=39 // pred_fallthru
        _
      %s4024 = scalar_lea.vmem [#allocation5], 448
      %v4025 = vld [vmem:[%s4024] sm:$0xff]
      %v4026 = vld [vmem:[%s4024 + $0x8] sm:$0xff]
      %v4027 = vld [vmem:[%s4024 + $0x10] sm:$0xff]
      %v4028 = vld [vmem:[%s4024 + $0x18] sm:$0xff]
      %v4029 = vld [vmem:[%s4024 + $0x20] sm:$0xff]
      %v4030 = vld [vmem:[%s4024 + $0x28] sm:$0xff]
      %v4031 = vld [vmem:[%s4024 + $0x30] sm:$0xff]
      %v4032 = vld [vmem:[%s4024 + $0x38] sm:$0xff]
      %v4033 = vpack.c.bf16 %v4017, %v4016
      %v4034 = vld [vmem:[%s385] sm:$0xff]
      %v4035 = vld [vmem:[%s385 + $0x8] sm:$0xff]
      %v4036 = vld [vmem:[%s385 + $0x10] sm:$0xff]
      %v4037 = vld [vmem:[%s385 + $0x18] sm:$0xff]
      %v4038 = vld [vmem:[%s385 + $0x20] sm:$0xff]
      %v4039 = vld [vmem:[%s385 + $0x28] sm:$0xff]
      %v4040 = vld [vmem:[%s385 + $0x30] sm:$0xff]
      %v4041 = vld [vmem:[%s385 + $0x38] sm:$0xff]
      %v4042 = vld [vmem:[%s385 + $0x40] sm:$0xff]
      %v4043 = vld [vmem:[%s385 + $0x48] sm:$0xff]
      %v4044 = vld [vmem:[%s385 + $0x50] sm:$0xff]
      %v4045 = vld [vmem:[%s385 + $0x58] sm:$0xff]
      %v4046 = vld [vmem:[%s385 + $0x60] sm:$0xff]
      %v4047 = vld [vmem:[%s385 + $0x68] sm:$0xff]
      %v4048 = vld [vmem:[%s385 + $0x70] sm:$0xff]
      %v4049 = vld [vmem:[%s385 + $0x78] sm:$0xff]
      %v4050 = vld [vmem:[%s385 + $0x80] sm:$0xff]
      %v4051 = vld [vmem:[%s385 + $0x88] sm:$0xff]
      %v4052 = vld [vmem:[%s385 + $0x90] sm:$0xff]
      %v4053 = vld [vmem:[%s385 + $0x98] sm:$0xff]
      %v4054 = vld [vmem:[%s385 + $0xa0] sm:$0xff]
      %v4055 = vld [vmem:[%s385 + $0xa8] sm:$0xff]
      %v4056 = vld [vmem:[%s385 + $0xb0] sm:$0xff]
      %v4057 = vld [vmem:[%s385 + $0xb8] sm:$0xff]
      %v4058 = vld [vmem:[%s385 + $0xc0] sm:$0xff]
      %v4059 = vld [vmem:[%s385 + $0xc8] sm:$0xff]
      %v4060 = vld [vmem:[%s385 + $0xd0] sm:$0xff]
      %v4061 = vld [vmem:[%s385 + $0xd8] sm:$0xff]
      %v4062 = vld [vmem:[%s385 + $0xe0] sm:$0xff]
      %v4063 = vld [vmem:[%s385 + $0xe8] sm:$0xff]
      %v4064 = vld [vmem:[%s385 + $0xf0] sm:$0xff]
      %v4065 = vld [vmem:[%s385 + $0xf8] sm:$0xff]
      %v4098 = vunpack.c.l.b16 %v4034
      %v4099 = vunpack.c.h.b16 %v4034
      %v4100 = vunpack.c.l.b16 %v4035
      %v4101 = vunpack.c.h.b16 %v4035
      %v4102 = vunpack.c.l.b16 %v4036
      %v4103 = vunpack.c.h.b16 %v4036
      %v4104 = vunpack.c.l.b16 %v4037
      %v4105 = vunpack.c.h.b16 %v4037
      %v4106 = vunpack.c.l.b16 %v4038
      %v4107 = vunpack.c.h.b16 %v4038
      %v4108 = vunpack.c.l.b16 %v4039
      %v4109 = vunpack.c.h.b16 %v4039
      %v4110 = vunpack.c.l.b16 %v4040
      %v4111 = vunpack.c.h.b16 %v4040
      %v4112 = vunpack.c.l.b16 %v4041
      %v4113 = vunpack.c.h.b16 %v4041
      %v4114 = vunpack.c.l.b16 %v4042
      %v4115 = vunpack.c.h.b16 %v4042
      %v4116 = vunpack.c.l.b16 %v4043
      %v4117 = vunpack.c.h.b16 %v4043
      %v4118 = vunpack.c.l.b16 %v4044
      %v4119 = vunpack.c.h.b16 %v4044
      %v4120 = vunpack.c.l.b16 %v4045
      %v4121 = vunpack.c.h.b16 %v4045
      %v4122 = vunpack.c.l.b16 %v4046
      %v4123 = vunpack.c.h.b16 %v4046
      %v4124 = vunpack.c.l.b16 %v4047
      %v4125 = vunpack.c.h.b16 %v4047
      %v4126 = vunpack.c.l.b16 %v4048
      %v4127 = vunpack.c.h.b16 %v4048
      %v4128 = vunpack.c.l.b16 %v4049
      %v4129 = vunpack.c.h.b16 %v4049
      %v4130 = vunpack.c.l.b16 %v4050
      %v4131 = vunpack.c.h.b16 %v4050
      %v4132 = vunpack.c.l.b16 %v4051
      %v4133 = vunpack.c.h.b16 %v4051
      %v4134 = vunpack.c.l.b16 %v4052
      %v4135 = vunpack.c.h.b16 %v4052
      %v4136 = vunpack.c.l.b16 %v4053
      %v4137 = vunpack.c.h.b16 %v4053
      %v4138 = vunpack.c.l.b16 %v4054
      %v4139 = vunpack.c.h.b16 %v4054
      %v4140 = vunpack.c.l.b16 %v4055
      %v4141 = vunpack.c.h.b16 %v4055
      %v4142 = vunpack.c.l.b16 %v4056
      %v4143 = vunpack.c.h.b16 %v4056
      %v4144 = vunpack.c.l.b16 %v4057
      %v4145 = vunpack.c.h.b16 %v4057
      %v4146 = vunpack.c.l.b16 %v4058
      %v4147 = vunpack.c.h.b16 %v4058
      %v4148 = vunpack.c.l.b16 %v4059
      %v4149 = vunpack.c.h.b16 %v4059
      %v4150 = vunpack.c.l.b16 %v4060
      %v4151 = vunpack.c.h.b16 %v4060
      %v4152 = vunpack.c.l.b16 %v4061
      %v4153 = vunpack.c.h.b16 %v4061
      %v4154 = vunpack.c.l.b16 %v4062
      %v4155 = vunpack.c.h.b16 %v4062
      %v4156 = vunpack.c.l.b16 %v4063
      %v4157 = vunpack.c.h.b16 %v4063
      %v4158 = vunpack.c.l.b16 %v4064
      %v4159 = vunpack.c.h.b16 %v4064
      %v4160 = vunpack.c.l.b16 %v4065
      %v4161 = vunpack.c.h.b16 %v4065
      %v4162 = vpack.c.b16 %v4102, %v4098
      %v4163 = vpack.c.b16 %v4103, %v4099
      %v4164 = vpack.c.b16 %v4104, %v4100
      %v4165 = vpack.c.b16 %v4105, %v4101
      %v4166 = vpack.c.b16 %v4110, %v4106
      %v4167 = vpack.c.b16 %v4111, %v4107
      %v4168 = vpack.c.b16 %v4112, %v4108
      %v4169 = vpack.c.b16 %v4113, %v4109
      %v4170 = vpack.c.b16 %v4118, %v4114
      %v4171 = vpack.c.b16 %v4119, %v4115
      %v4172 = vpack.c.b16 %v4120, %v4116
      %v4173 = vpack.c.b16 %v4121, %v4117
      %v4174 = vpack.c.b16 %v4126, %v4122
      %v4175 = vpack.c.b16 %v4127, %v4123
      %v4176 = vpack.c.b16 %v4128, %v4124
      %v4177 = vpack.c.b16 %v4129, %v4125
      %v4178 = vpack.c.b16 %v4134, %v4130
      %v4179 = vpack.c.b16 %v4135, %v4131
      %v4180 = vpack.c.b16 %v4136, %v4132
      %v4181 = vpack.c.b16 %v4137, %v4133
      %v4182 = vpack.c.b16 %v4142, %v4138
      %v4183 = vpack.c.b16 %v4143, %v4139
      %v4184 = vpack.c.b16 %v4144, %v4140
      %v4185 = vpack.c.b16 %v4145, %v4141
      %v4186 = vpack.c.b16 %v4150, %v4146
      %v4187 = vpack.c.b16 %v4151, %v4147
      %v4188 = vpack.c.b16 %v4152, %v4148
      %v4189 = vpack.c.b16 %v4153, %v4149
      %v4190 = vpack.c.b16 %v4158, %v4154
      %v4191 = vpack.c.b16 %v4159, %v4155
      %v4192 = vpack.c.b16 %v4160, %v4156
      %v4193 = vpack.c.b16 %v4161, %v4157
      %4226 = vmatprep.subr.bf16.mxu0 %v4163
      %4227 = vmatpush1.bf16.msra.mxu0 %v4162
      %4228 = vmatprep.subr.bf16.mxu0 %v4167
      %4229 = vmatpush1.bf16.msra.mxu0 %v4166
      %4230 = vmatprep.subr.bf16.mxu0 %v4171
      %4231 = vmatpush1.bf16.msra.mxu0 %v4170
      %4232 = vmatprep.subr.bf16.mxu0 %v4175
      %4233 = vmatpush1.bf16.msra.mxu0 %v4174
      %4234 = vmatprep.subr.bf16.mxu0 %v4179
      %4235 = vmatpush1.bf16.msra.mxu0 %v4178
      %4236 = vmatprep.subr.bf16.mxu0 %v4183
      %4237 = vmatpush1.bf16.msra.mxu0 %v4182
      %4238 = vmatprep.subr.bf16.mxu0 %v4187
      %4239 = vmatpush1.bf16.msra.mxu0 %v4186
      %4240 = vmatprep.subr.bf16.mxu0 %v4191
      %4241 = vmatpush1.bf16.msra.mxu0 %v4190
      %4242 = vmatprep.subr.bf16.mxu0 0
      %4243 = vmatpush1.bf16.msra.mxu0 0
      %4244 = vmatprep.subr.bf16.mxu0 0
      %4245 = vmatpush1.bf16.msra.mxu0 0
      %4246 = vmatprep.subr.bf16.mxu0 0
      %4247 = vmatpush1.bf16.msra.mxu0 0
      %4248 = vmatprep.subr.bf16.mxu0 0
      %4249 = vmatpush1.bf16.msra.mxu0 0
      %4250 = vmatprep.subr.bf16.mxu0 0
      %4251 = vmatpush1.bf16.msra.mxu0 0
      %4252 = vmatprep.subr.bf16.mxu0 0
      %4253 = vmatpush1.bf16.msra.mxu0 0
      %4254 = vmatprep.subr.bf16.mxu0 0
      %4255 = vmatpush1.bf16.msra.mxu0 0
      %4256 = vmatprep.subr.bf16.mxu0 0
      %4257 = vmatpush1.bf16.msra.mxu0 0
      %4258 = vmatprep.mubr.bf16.mxu0 0
      %4259 = vmatmul.mubr.bf16.gmra.mrb[0].mxu0 %v4033
      %v4260 = vpop.f32.mrb[0].mxu0
      %v4261 = vadd.f32 0.0, %v4260
      %v4262 = vpop.f32.mrb[0].mxu0
      %v4263 = vadd.f32 0.0, %v4262
      %v4264 = vpop.f32.mrb[0].mxu0
      %v4265 = vadd.f32 0.0, %v4264
      %v4266 = vpop.f32.mrb[0].mxu0
      %v4267 = vadd.f32 0.0, %v4266
      %4268 = vdwg.mxu0
      %4269 = vmatprep.subr.bf16.mxu0 %v4165
      %4270 = vmatpush1.bf16.msra.mxu0 %v4164
      %4271 = vmatprep.subr.bf16.mxu0 %v4169
      %4272 = vmatpush1.bf16.msra.mxu0 %v4168
      %4273 = vmatprep.subr.bf16.mxu0 %v4173
      %4274 = vmatpush1.bf16.msra.mxu0 %v4172
      %4275 = vmatprep.subr.bf16.mxu0 %v4177
      %4276 = vmatpush1.bf16.msra.mxu0 %v4176
      %4277 = vmatprep.subr.bf16.mxu0 %v4181
      %4278 = vmatpush1.bf16.msra.mxu0 %v4180
      %4279 = vmatprep.subr.bf16.mxu0 %v4185
      %4280 = vmatpush1.bf16.msra.mxu0 %v4184
      %4281 = vmatprep.subr.bf16.mxu0 %v4189
      %4282 = vmatpush1.bf16.msra.mxu0 %v4188
      %4283 = vmatprep.subr.bf16.mxu0 %v4193
      %4284 = vmatpush1.bf16.msra.mxu0 %v4192
      %4285 = vmatprep.subr.bf16.mxu0 0
      %4286 = vmatpush1.bf16.msra.mxu0 0
      %4287 = vmatprep.subr.bf16.mxu0 0
      %4288 = vmatpush1.bf16.msra.mxu0 0
      %4289 = vmatprep.subr.bf16.mxu0 0
      %4290 = vmatpush1.bf16.msra.mxu0 0
      %4291 = vmatprep.subr.bf16.mxu0 0
      %4292 = vmatpush1.bf16.msra.mxu0 0
      %4293 = vmatprep.subr.bf16.mxu0 0
      %4294 = vmatpush1.bf16.msra.mxu0 0
      %4295 = vmatprep.subr.bf16.mxu0 0
      %4296 = vmatpush1.bf16.msra.mxu0 0
      %4297 = vmatprep.subr.bf16.mxu0 0
      %4298 = vmatpush1.bf16.msra.mxu0 0
      %4299 = vmatprep.subr.bf16.mxu0 0
      %4300 = vmatpush1.bf16.msra.mxu0 0
      %4301 = vmatprep.mubr.bf16.mxu0 0
      %4302 = vmatmul.mubr.bf16.gmra.mrb[0].mxu0 %v4033
      %v4303 = vpop.f32.mrb[0].mxu0
      %v4304 = vadd.f32 0.0, %v4303
      %v4305 = vpop.f32.mrb[0].mxu0
      %v4306 = vadd.f32 0.0, %v4305
      %v4307 = vpop.f32.mrb[0].mxu0
      %v4308 = vadd.f32 0.0, %v4307
      %v4309 = vpop.f32.mrb[0].mxu0
      %v4310 = vadd.f32 0.0, %v4309
      %4311 = vdwg.mxu0
      %v4312 = vadd.f32 %v4025, %v4261
      %v4313 = vadd.f32 %v4026, %v4263
      %v4314 = vadd.f32 %v4027, %v4304
      %v4315 = vadd.f32 %v4028, %v4306
      %v4316 = vadd.f32 %v4029, %v4265
      %v4317 = vadd.f32 %v4030, %v4267
      %v4318 = vadd.f32 %v4031, %v4308
      %v4319 = vadd.f32 %v4032, %v4310
      %v4320 = vmul.f32 %v4312, 0.5
      %v4321 = vmul.f32 %v4316, 0.5
      %v4322 = vtanh.pop %v4320
      %v4323 = vtanh.pop %v4321
      %v4324 = vmul.f32 %v4322, 0.5
      %v4325 = vmul.f32 %v4323, 0.5
      %v4326 = vadd.f32 %v4324, 0.5
      %v4327 = vadd.f32 %v4325, 0.5
      %v4328 = vmul.f32 %v4313, 0.5
      %v4329 = vmul.f32 %v4317, 0.5
      %v4330 = vtanh.pop %v4328
      %v4331 = vtanh.pop %v4329
      %v4332 = vmul.f32 %v4330, 0.5
      %v4333 = vmul.f32 %v4331, 0.5
      %v4334 = vadd.f32 %v4332, 0.5
      %v4335 = vadd.f32 %v4333, 0.5
      %v4336 = vtanh.pop %v4314
      %v4337 = vtanh.pop %v4318
      %v4338 = vmul.f32 %v4315, 0.5
      %v4339 = vmul.f32 %v4319, 0.5
      %v4340 = vtanh.pop %v4338
      %v4341 = vtanh.pop %v4339
      %v4342 = vmul.f32 %v4340, 0.5
      %v4343 = vmul.f32 %v4341, 0.5
      %v4344 = vadd.f32 %v4342, 0.5
      %v4345 = vadd.f32 %v4343, 0.5
      %v4346 = vmul.f32 %v4334, %v4012
      %v4347 = vmul.f32 %v4335, %v4013
      %v4348 = vmul.f32 %v4326, %v4336
      %v4349 = vmul.f32 %v4327, %v4337
      %v4350 = vadd.f32 %v4346, %v4348
      %v4351 = vadd.f32 %v4347, %v4349
      %v4352 = vtanh.pop %v4350
      %v4353 = vtanh.pop %v4351
      %v4354 = vmul.f32 %v4344, %v4352
      %v4355 = vmul.f32 %v4345, %v4353
      // Predicated region
      $region148: #{_lambda_.1} parent=39 // pred_check
        %p4356 = pneg %p1655
      $region149: #{_lambda_.1} parent=39 // pred_check_branch
        %4358 = sbr.rel (%p4356) target = $region151
      $region150: #{_lambda_.1} parent=39 // pred_region
        %v4359 = vpack.c.bf16 %v4355, %v4354
        %s4360 = scalar_lea.vmem [#allocation4], 56
        %4361 = vst [vmem:[%s4360] sm:$0xff] %v4359
      $region151: #{_lambda_.1} parent=39 // pred_fallthru
        _
      %4362 = vst [vmem:[%s398] sm:$0xff] %v4354
      %4363 = vst [vmem:[%s398 + $0x8] sm:$0xff] %v4355
      %4364 = vst [vmem:[%s408] sm:$0xff] %v4350
      %4365 = vst [vmem:[%s408 + $0x8] sm:$0xff] %v4351
      %s4366 = smul.u32 2, %s24
      %p4367 = scmp.lt.s32.totalorder %s25, 1
      %s4368 = scalar_select %p4367, %s25, 1
      %p4369 = scmp.lt.s32.totalorder %s4366, 1
      %s4370 = scalar_select %p4369, %s4366, 1
      %s4371 = smul.addr %s4368, 2
      %s4372 = sadd.s32 %s4370, %s4371
      %s4373 = smul.addr %s4372, 8
      %s4374 = scalar_lea.vmem %s7, %s4373
      %s4375 = smul.u32 2, %s24
      %p4376 = scmp.lt.s32.totalorder %s25, 1
      %s4377 = scalar_select %p4376, %s25, 1
      %p4378 = scmp.lt.s32.totalorder %s4375, 1
      %s4379 = scalar_select %p4378, %s4375, 1
      %s4380 = smul.addr %s4377, 2
      %s4381 = sadd.s32 %s4379, %s4380
      %s4382 = smul.addr %s4381, 8
      %s4383 = scalar_lea.vmem %s8, %s4382
      // Predicated region
      $region152: #{_lambda_.1} parent=39 // pred_check
        %p4384 = pneg %p186
      $region153: #{_lambda_.1} parent=39 // pred_check_branch
        %4386 = sbr.rel (%p4384) target = $region155
      $region154: #{_lambda_.1} parent=39 // pred_region
        %s4387 = smul.u32 2, %s24
      $region155: #{_lambda_.1} parent=39 // pred_fallthru
        _
      // Predicated region
      $region156: #{_lambda_.1} parent=39 // pred_check
        %p4388 = pneg %p214
      $region157: #{_lambda_.1} parent=39 // pred_check_branch
        %4390 = sbr.rel (%p4388) target = $region159
      $region158: #{_lambda_.1} parent=39 // pred_region
        %s4391 = smul.u32 2, %s24
      $region159: #{_lambda_.1} parent=39 // pred_fallthru
        _
    $region40: #{_lambda_.1} parent=5 // pred_fallthru
      _
    %p4392 = scmp.le.s32.totalorder 2, %s15
    // Predicated region
    $region160: #{_lambda_.1} parent=5 // pred_check
      %p4393 = pneg %p4392
    $region161: #{_lambda_.1} parent=5 // pred_check_branch
      %4395 = sbr.rel (%p4393) target = $region163
    $region162: #{_lambda_.1} parent=5 // pred_region
      %s4396 = ssub.s32 %s15, 2
      // Predicated region
      $region164: #{_lambda_.1} parent=162 // pred_check
        %p4397 = pneg %p192
      $region165: #{_lambda_.1} parent=162 // pred_check_branch
        %4399 = sbr.rel (%p4397) target = $region167
      $region166: #{_lambda_.1} parent=162 // pred_region
        %s4400 = smul.u32 2, %s26
        %p4401 = scmp.lt.s32.totalorder %s27, 1
        %s4402 = scalar_select %p4401, %s27, 1
        %p4403 = scmp.lt.s32.totalorder %s4400, 1
        %s4404 = scalar_select %p4403, %s4400, 1
        %s4405 = smul.addr %s4402, 2
        %s4406 = sadd.s32 %s4404, %s4405
        %s4407 = smul.addr %s4406, 8
        %s4408 = scalar_lea.vmem %s7, %s4407
      $region167: #{_lambda_.1} parent=162 // pred_fallthru
        _
      // Predicated region
      $region168: #{_lambda_.1} parent=162 // pred_check
        %p4409 = pneg %p220
      $region169: #{_lambda_.1} parent=162 // pred_check_branch
        %4411 = sbr.rel (%p4409) target = $region171
      $region170: #{_lambda_.1} parent=162 // pred_region
        %s4412 = smul.u32 2, %s26
        %p4413 = scmp.lt.s32.totalorder %s27, 1
        %s4414 = scalar_select %p4413, %s27, 1
        %p4415 = scmp.lt.s32.totalorder %s4412, 1
        %s4416 = scalar_select %p4415, %s4412, 1
        %s4417 = smul.addr %s4414, 2
        %s4418 = sadd.s32 %s4416, %s4417
        %s4419 = smul.addr %s4418, 8
        %s4420 = scalar_lea.vmem %s8, %s4419
      $region171: #{_lambda_.1} parent=162 // pred_fallthru
        _
    $region163: #{_lambda_.1} parent=5 // pred_fallthru
      _
  $region6: #{_lambda_.1} parent=0 // loop_footer
    %s19 = sadd.s32 1, %s15
  $region7: #{_lambda_.1} parent=0 // loop_footer_branch
    %14 = sbr.rel target = $region3
  $region8: #{_lambda_.1} parent=0 // loop_exit
    _
  %4421 = vsyncmov [#allocation6]
  %s4422 = vpop.sfrf %4421
  %p4423 = scmp.eq.s32.totalorder %s4422, 0
  %p4424 = pneg %p4423
  %4426 = shalt.err (%p4424)
  %s4427 = scalar_lea.sflag [#allocation6], 1
  %4428 = vsyncmov %s4427
  %s4429 = vpop.sfrf %4428
  %p4430 = scmp.eq.s32.totalorder %s4429, 0
  %p4431 = pneg %p4430
  %4433 = shalt.err (%p4431)

</llo_original>
